<compile_context>
chip_gen: v7x
topology: tpu7x:2x2x1
jax: 0.10.0
libtpu: 0.0.40
codegen_flags: <defaults>
</compile_context>

<pallas_src>
import functools
import math

import jax
import jax.numpy as jnp
from jax.experimental import pallas as pl
from jax.experimental.pallas import tpu as pltpu


# ----------------------------------------------------------------------------
# Pallas kernel: the FULL GATv2 stack (all layers + activations), fused.
# ----------------------------------------------------------------------------
def _gnn_stack_kernel(*refs, activations):
    x_ref, adj_ref, ef_ref = refs[:3]
    out_ref = refs[-1]
    param_refs = refs[3:-1]
    n_layers = len(activations)

    adj = adj_ref[...]                              # (N_dst, N_src), float32 0/1
    n = adj.shape[0]
    # Additive softmax mask (computed once, shared by every layer / head).
    neg_bias = (adj - 1.0) * 1e30                   # 0 where edge, -1e30 where not

    ef = ef_ref[...]                                # (N*N, E), row = dst*N + src
    edge_dim = ef.shape[1]

    h = x_ref[...]                                  # (N, F_in) float32

    for li in range(n_layers):                      # compile-time layer unroll
        wl_r, bl_r, wr_r, br_r, we_r, att_r, bias_r = param_refs[7 * li:7 * li + 7]

        att = att_r[...]                            # (heads, C)
        heads, out_ch = att.shape
        hc = heads * out_ch

        # ---- lin_l / lin_r projections (bf16 MXU, f32 accumulate) ----------
        h_bf = h.astype(jnp.bfloat16)
        xl = jnp.dot(h_bf, wl_r[...].astype(jnp.bfloat16),
                     preferred_element_type=jnp.float32) + bl_r[...]   # (N, H*C)
        xr = jnp.dot(h_bf, wr_r[...].astype(jnp.bfloat16),
                     preferred_element_type=jnp.float32) + br_r[...]   # (N, H*C)

        # ---- lin_edge projection: tiny K -> VPU broadcast FMAs -------------
        we = we_r[...]                              # (E, H*C)
        eproj = ef[:, 0:1] * we[0:1, :]             # (N*N, H*C)
        for k in range(1, edge_dim):
            eproj = eproj + ef[:, k:k + 1] * we[k:k + 1, :]

        # ---- GATv2 pre-activation for ALL (dst, src) pairs at once ---------
        # s_all[d, s, :] = x_l[s] + x_r[d] + W_e e_{s->d}
        s_all = (eproj.reshape(n, n, hc)
                 + xl[None, :, :]
                 + xr[:, None, :])
        s_all = jnp.where(s_all >= 0.0, s_all, 0.2 * s_all)   # leaky_relu(0.2)

        head_outs = []
        for hh in range(heads):                     # heads is 1 or 2: tiny unroll
            cs = slice(hh * out_ch, (hh + 1) * out_ch)
            att_h = att[hh:hh + 1, :].reshape(1, 1, out_ch)

            # logits[d, s] = att_h . s_all[d, s, cs]    (N_dst, N_src)
            logits = jnp.sum(s_all[:, :, cs] * att_h, axis=-1)
            logits = logits + neg_bias              # additive mask, no selects

            # masked softmax over sources (lane axis)
            m = jnp.max(logits, axis=-1, keepdims=True)
            p = jnp.exp(logits - m) * adj
            denom = jnp.sum(p, axis=-1, keepdims=True)
            alpha = p * pl.reciprocal(denom, approx=True)     # EUP reciprocal

            # out[d] = sum_s alpha[d, s] * x_l[s]   -> single MXU matmul
            out_h = jnp.dot(alpha.astype(jnp.bfloat16),
                            xl[:, cs].astype(jnp.bfloat16),
                            preferred_element_type=jnp.float32)        # (N, C)
            head_outs.append(out_h)

        out = head_outs[0] if heads == 1 else jnp.concatenate(head_outs, axis=-1)
        out = out + bias_r[...]                     # final conv bias

        if activations[li] == "elu":
            # safe ELU: exp only on the non-positive branch
            out = jnp.where(out > 0.0, out, jnp.exp(jnp.minimum(out, 0.0)) - 1.0)
        else:  # "relu"
            out = jnp.maximum(out, 0.0)

        # TODO(synk): dropout == identity (eval semantics)
        h = out

    out_ref[...] = h


def gnn_stack(x, adj, e_flat, all_params, activations):
    n = x.shape[0]
    flat = []
    for p in all_params:
        flat += [p["wl"], p["bl"], p["wr"], p["br"], p["we"], p["att"], p["bias"]]
    heads_last, outch_last = all_params[-1]["att"].shape
    out_dim = heads_last * outch_last

    kernel = functools.partial(_gnn_stack_kernel, activations=tuple(activations))
    vmem = pl.BlockSpec(memory_space=pltpu.MemorySpace.VMEM)
    return pl.pallas_call(
        kernel,
        out_shape=jax.ShapeDtypeStruct((n, out_dim), jnp.float32),
        in_specs=[vmem] * (3 + len(flat)),
        out_specs=vmem,
        compiler_params=pltpu.CompilerParams(vmem_limit_bytes=32 * 1024 * 1024),
    )(x, adj, e_flat, *flat)


# ----------------------------------------------------------------------------
# Glue: dense graph construction (matches PyG remove_self_loops +
# add_self_loops(fill_value='mean'))
# ----------------------------------------------------------------------------
def build_dense_graph(edge_index, edge_feats, n_nodes):
    src, dst = edge_index[0], edge_index[1]
    edge_dim = edge_feats.shape[1]
    not_self = (src != dst).astype(jnp.float32)

    adj = jnp.zeros((n_nodes, n_nodes), jnp.float32)
    adj = adj.at[dst, src].max(not_self)                      # adj[dst, src]

    e_dense = jnp.zeros((n_nodes, n_nodes, edge_dim), jnp.float32)
    e_dense = e_dense.at[dst, src].set(edge_feats * not_self[:, None])

    # self-loop edge attr = mean of (non-self-loop) incoming edge attrs
    sums = jnp.zeros((n_nodes, edge_dim), jnp.float32).at[dst].add(
        edge_feats * not_self[:, None])
    cnts = jnp.zeros((n_nodes,), jnp.float32).at[dst].add(not_self)
    mean_attr = sums / jnp.maximum(cnts, 1.0)[:, None]

    diag = jnp.arange(n_nodes)
    adj = adj.at[diag, diag].set(1.0)
    e_dense = e_dense.at[diag, diag].set(mean_attr)

    e_flat = e_dense.reshape(n_nodes * n_nodes, edge_dim)     # row = dst*N + src
    return adj, e_flat


# ----------------------------------------------------------------------------
# Parameter init (deterministic, synthetic)
# ----------------------------------------------------------------------------
def init_gatv2_params(key, in_dim, out_ch, heads, edge_dim):
    k = jax.random.split(key, 7)
    hc = heads * out_ch
    s_in = 1.0 / math.sqrt(in_dim)
    s_e = 1.0 / math.sqrt(edge_dim)
    s_a = 1.0 / math.sqrt(out_ch)
    return {
        "wl":   jax.random.normal(k[0], (in_dim, hc), jnp.float32) * s_in,
        "bl":   jax.random.normal(k[1], (1, hc), jnp.float32) * 0.01,
        "wr":   jax.random.normal(k[2], (in_dim, hc), jnp.float32) * s_in,
        "br":   jax.random.normal(k[3], (1, hc), jnp.float32) * 0.01,
        "we":   jax.random.normal(k[4], (edge_dim, hc), jnp.float32) * s_e,
        "att":  jax.random.normal(k[5], (heads, out_ch), jnp.float32) * s_a,
        "bias": jax.random.normal(k[6], (1, hc), jnp.float32) * 0.01,
    }


# ----------------------------------------------------------------------------
# GNN forward (mirrors the torch module: gat1 + hidden GATv2 layers + gat2)
# ----------------------------------------------------------------------------
def gats_forward(inp, edge_index, edge_feats, all_params, activations):
    adj, e_flat = build_dense_graph(edge_index, edge_feats, inp.shape[0])
    return gnn_stack(inp, adj, e_flat, all_params, activations)


if __name__ == "__main__":
    # Model config (small, consistent with the torch module signature)
    INPUT_DIM = 4
    EMB_DIM = 8
    OUTPUT_DIM = 6
    EDGE_DIM = 4
    HEADS = 2
    N_NODES = 8

    key = jax.random.PRNGKey(0)
    k_inp, k_ef, k_p1, k_p2, k_p3 = jax.random.split(key, 5)

    # Inputs
    inp = jax.random.normal(k_inp, (N_NODES, INPUT_DIM), jnp.float32)
    src = jnp.array([0, 1, 2, 3, 4, 5, 6, 7, 1, 2, 3, 4, 5, 6, 7, 0], jnp.int32)
    dst = jnp.array([1, 2, 3, 4, 5, 6, 7, 0, 0, 1, 2, 3, 4, 5, 6, 7], jnp.int32)
    edge_index = jnp.stack([src, dst])                        # (2, 16)
    edge_feats = jax.random.normal(k_ef, (src.shape[0], EDGE_DIM), jnp.float32)

    # Parameters (deterministic): gat1, one hidden GATv2, gat2
    params = [
        init_gatv2_params(k_p1, INPUT_DIM, EMB_DIM, HEADS, EDGE_DIM),
        init_gatv2_params(k_p2, EMB_DIM * HEADS, EMB_DIM, HEADS, EDGE_DIM),
        init_gatv2_params(k_p3, EMB_DIM * HEADS, OUTPUT_DIM, 1, EDGE_DIM),
    ]
    activations = ("elu", "elu", "relu")

    out = gats_forward(inp, edge_index, edge_feats, params, activations)
    out = jax.block_until_ready(out)
    assert out.shape == (N_NODES, OUTPUT_DIM)
    assert bool(jnp.all(jnp.isfinite(out)))
    print("KERNEL_OK")
</pallas_src>

<mosaic_0001>
module attributes {stable_mosaic.version = 11 : i64} {
  func.func @_gnn_stack_kernel(%arg0: memref<8x4xf32, #tpu.memory_space<vmem>>, %arg1: memref<8x8xf32, #tpu.memory_space<vmem>>, %arg2: memref<64x4xf32, #tpu.memory_space<vmem>>, %arg3: memref<4x16xf32, #tpu.memory_space<vmem>>, %arg4: memref<1x16xf32, #tpu.memory_space<vmem>>, %arg5: memref<4x16xf32, #tpu.memory_space<vmem>>, %arg6: memref<1x16xf32, #tpu.memory_space<vmem>>, %arg7: memref<4x16xf32, #tpu.memory_space<vmem>>, %arg8: memref<2x8xf32, #tpu.memory_space<vmem>>, %arg9: memref<1x16xf32, #tpu.memory_space<vmem>>, %arg10: memref<16x16xf32, #tpu.memory_space<vmem>>, %arg11: memref<1x16xf32, #tpu.memory_space<vmem>>, %arg12: memref<16x16xf32, #tpu.memory_space<vmem>>, %arg13: memref<1x16xf32, #tpu.memory_space<vmem>>, %arg14: memref<4x16xf32, #tpu.memory_space<vmem>>, %arg15: memref<2x8xf32, #tpu.memory_space<vmem>>, %arg16: memref<1x16xf32, #tpu.memory_space<vmem>>, %arg17: memref<16x6xf32, #tpu.memory_space<vmem>>, %arg18: memref<1x6xf32, #tpu.memory_space<vmem>>, %arg19: memref<16x6xf32, #tpu.memory_space<vmem>>, %arg20: memref<1x6xf32, #tpu.memory_space<vmem>>, %arg21: memref<4x6xf32, #tpu.memory_space<vmem>>, %arg22: memref<1x6xf32, #tpu.memory_space<vmem>>, %arg23: memref<1x6xf32, #tpu.memory_space<vmem>>, %arg24: memref<8x6xf32, #tpu.memory_space<vmem>>) attributes {dimension_semantics = [], scalar_prefetch = 0 : i64, scratch_operands = 0 : i64, tpu.core_type = #tpu.core_type<tc>} {
    %c0 = arith.constant 0 : index
    %c0_0 = arith.constant 0 : index
    %0 = vector.load %arg1[%c0, %c0_0] : memref<8x8xf32, #tpu.memory_space<vmem>>, vector<8x8xf32>
    %cst = arith.constant 1.000000e+00 : f32
    %1 = vector.broadcast %cst : f32 to vector<8x8xf32>
    %2 = arith.subf %0, %1 : vector<8x8xf32>
    %cst_1 = arith.constant 1.000000e+30 : f32
    %3 = vector.broadcast %cst_1 : f32 to vector<8x8xf32>
    %4 = arith.mulf %2, %3 : vector<8x8xf32>
    %c0_2 = arith.constant 0 : index
    %c0_3 = arith.constant 0 : index
    %5 = vector.load %arg2[%c0_2, %c0_3] : memref<64x4xf32, #tpu.memory_space<vmem>>, vector<64x4xf32>
    %c0_4 = arith.constant 0 : index
    %c0_5 = arith.constant 0 : index
    %6 = vector.load %arg0[%c0_4, %c0_5] : memref<8x4xf32, #tpu.memory_space<vmem>>, vector<8x4xf32>
    %c0_6 = arith.constant 0 : index
    %c0_7 = arith.constant 0 : index
    %7 = vector.load %arg8[%c0_6, %c0_7] : memref<2x8xf32, #tpu.memory_space<vmem>>, vector<2x8xf32>
    %8 = arith.truncf %6 : vector<8x4xf32> to vector<8x4xbf16>
    %c0_8 = arith.constant 0 : index
    %c0_9 = arith.constant 0 : index
    %9 = vector.load %arg3[%c0_8, %c0_9] : memref<4x16xf32, #tpu.memory_space<vmem>>, vector<4x16xf32>
    %10 = arith.truncf %9 : vector<4x16xf32> to vector<4x16xbf16>
    %cst_10 = arith.constant dense<0.000000e+00> : vector<8x16xf32>
    %11 = tpu.matmul %8, %10, %cst_10 {dimension_numbers = #tpu.dot_dimension_numbers<[1], [0], [0], [1], [0, 0, 1, 1], [], []>} : vector<8x4xbf16>, vector<4x16xbf16>, vector<8x16xf32> -> vector<8x16xf32>
    %c0_11 = arith.constant 0 : index
    %c0_12 = arith.constant 0 : index
    %12 = vector.load %arg4[%c0_11, %c0_12] : memref<1x16xf32, #tpu.memory_space<vmem>>, vector<1x16xf32>
    %13 = vector.broadcast %12 : vector<1x16xf32> to vector<8x16xf32>
    %14 = arith.addf %11, %13 : vector<8x16xf32>
    %c0_13 = arith.constant 0 : index
    %c0_14 = arith.constant 0 : index
    %15 = vector.load %arg5[%c0_13, %c0_14] : memref<4x16xf32, #tpu.memory_space<vmem>>, vector<4x16xf32>
    %16 = arith.truncf %15 : vector<4x16xf32> to vector<4x16xbf16>
    %cst_15 = arith.constant dense<0.000000e+00> : vector<8x16xf32>
    %17 = tpu.matmul %8, %16, %cst_15 {dimension_numbers = #tpu.dot_dimension_numbers<[1], [0], [0], [1], [0, 0, 1, 1], [], []>} : vector<8x4xbf16>, vector<4x16xbf16>, vector<8x16xf32> -> vector<8x16xf32>
    %c0_16 = arith.constant 0 : index
    %c0_17 = arith.constant 0 : index
    %18 = vector.load %arg6[%c0_16, %c0_17] : memref<1x16xf32, #tpu.memory_space<vmem>>, vector<1x16xf32>
    %19 = vector.broadcast %18 : vector<1x16xf32> to vector<8x16xf32>
    %20 = arith.addf %17, %19 : vector<8x16xf32>
    %c0_18 = arith.constant 0 : index
    %c0_19 = arith.constant 0 : index
    %21 = vector.load %arg7[%c0_18, %c0_19] : memref<4x16xf32, #tpu.memory_space<vmem>>, vector<4x16xf32>
    %22 = vector.extract_strided_slice %5 {offsets = [0, 0], sizes = [64, 1], strides = [1, 1]} : vector<64x4xf32> to vector<64x1xf32>
    %23 = vector.extract_strided_slice %21 {offsets = [0, 0], sizes = [1, 16], strides = [1, 1]} : vector<4x16xf32> to vector<1x16xf32>
    %24 = vector.broadcast %22 : vector<64x1xf32> to vector<64x16xf32>
    %25 = vector.broadcast %23 : vector<1x16xf32> to vector<64x16xf32>
    %26 = arith.mulf %24, %25 : vector<64x16xf32>
    %27 = vector.extract_strided_slice %5 {offsets = [0, 1], sizes = [64, 1], strides = [1, 1]} : vector<64x4xf32> to vector<64x1xf32>
    %28 = vector.extract_strided_slice %21 {offsets = [1, 0], sizes = [1, 16], strides = [1, 1]} : vector<4x16xf32> to vector<1x16xf32>
    %29 = vector.broadcast %27 : vector<64x1xf32> to vector<64x16xf32>
    %30 = vector.broadcast %28 : vector<1x16xf32> to vector<64x16xf32>
    %31 = arith.mulf %29, %30 : vector<64x16xf32>
    %32 = arith.addf %26, %31 : vector<64x16xf32>
    %33 = vector.extract_strided_slice %5 {offsets = [0, 2], sizes = [64, 1], strides = [1, 1]} : vector<64x4xf32> to vector<64x1xf32>
    %34 = vector.extract_strided_slice %21 {offsets = [2, 0], sizes = [1, 16], strides = [1, 1]} : vector<4x16xf32> to vector<1x16xf32>
    %35 = vector.broadcast %33 : vector<64x1xf32> to vector<64x16xf32>
    %36 = vector.broadcast %34 : vector<1x16xf32> to vector<64x16xf32>
    %37 = arith.mulf %35, %36 : vector<64x16xf32>
    %38 = arith.addf %32, %37 : vector<64x16xf32>
    %39 = vector.extract_strided_slice %5 {offsets = [0, 3], sizes = [64, 1], strides = [1, 1]} : vector<64x4xf32> to vector<64x1xf32>
    %40 = vector.extract_strided_slice %21 {offsets = [3, 0], sizes = [1, 16], strides = [1, 1]} : vector<4x16xf32> to vector<1x16xf32>
    %41 = vector.broadcast %39 : vector<64x1xf32> to vector<64x16xf32>
    %42 = vector.broadcast %40 : vector<1x16xf32> to vector<64x16xf32>
    %43 = arith.mulf %41, %42 : vector<64x16xf32>
    %44 = arith.addf %38, %43 : vector<64x16xf32>
    %45 = vector.shape_cast %44 : vector<64x16xf32> to vector<8x8x16xf32>
    %46 = vector.shape_cast %14 : vector<8x16xf32> to vector<1x8x16xf32>
    %47 = vector.broadcast %46 : vector<1x8x16xf32> to vector<8x8x16xf32>
    %48 = arith.addf %45, %47 : vector<8x8x16xf32>
    %49 = vector.shape_cast %20 : vector<8x16xf32> to vector<8x1x16xf32>
    %50 = vector.broadcast %49 : vector<8x1x16xf32> to vector<8x8x16xf32>
    %51 = arith.addf %48, %50 : vector<8x8x16xf32>
    %cst_20 = arith.constant 0.000000e+00 : f32
    %52 = vector.broadcast %cst_20 : f32 to vector<8x8x16xf32>
    %53 = arith.cmpf oge, %51, %52 : vector<8x8x16xf32>
    %cst_21 = arith.constant 2.000000e-01 : f32
    %54 = vector.broadcast %cst_21 : f32 to vector<8x8x16xf32>
    %55 = arith.mulf %54, %51 : vector<8x8x16xf32>
    %56 = arith.select %53, %51, %55 : vector<8x8x16xi1>, vector<8x8x16xf32>
    %57 = vector.extract_strided_slice %7 {offsets = [0, 0], sizes = [1, 8], strides = [1, 1]} : vector<2x8xf32> to vector<1x8xf32>
    %58 = vector.shape_cast %57 : vector<1x8xf32> to vector<1x1x8xf32>
    %59 = vector.extract_strided_slice %56 {offsets = [0, 0, 0], sizes = [8, 8, 8], strides = [1, 1, 1]} : vector<8x8x16xf32> to vector<8x8x8xf32>
    %60 = vector.broadcast %58 : vector<1x1x8xf32> to vector<8x8x8xf32>
    %61 = arith.mulf %59, %60 : vector<8x8x8xf32>
    %cst_22 = arith.constant dense<0.000000e+00> : vector<8x8xf32>
    %62 = vector.multi_reduction <add>, %61, %cst_22 [2] : vector<8x8x8xf32> to vector<8x8xf32>
    %63 = arith.addf %62, %4 : vector<8x8xf32>
    %cst_23 = arith.constant dense<0xFF800000> : vector<8xf32>
    %64 = vector.multi_reduction <maximumf>, %63, %cst_23 [1] : vector<8x8xf32> to vector<8xf32>
    %65 = vector.shape_cast %64 : vector<8xf32> to vector<8x1xf32>
    %66 = vector.broadcast %65 : vector<8x1xf32> to vector<8x8xf32>
    %67 = arith.subf %63, %66 : vector<8x8xf32>
    %68 = math.exp %67 : vector<8x8xf32>
    %69 = arith.mulf %68, %0 : vector<8x8xf32>
    %cst_24 = arith.constant dense<0.000000e+00> : vector<8xf32>
    %70 = vector.multi_reduction <add>, %69, %cst_24 [1] : vector<8x8xf32> to vector<8xf32>
    %71 = vector.shape_cast %70 : vector<8xf32> to vector<8x1xf32>
    %72 = tpu.reciprocal %71 {approx = true} : vector<8x1xf32> -> vector<8x1xf32>
    %73 = vector.broadcast %72 : vector<8x1xf32> to vector<8x8xf32>
    %74 = arith.mulf %69, %73 : vector<8x8xf32>
    %75 = arith.truncf %74 : vector<8x8xf32> to vector<8x8xbf16>
    %76 = vector.extract_strided_slice %14 {offsets = [0, 0], sizes = [8, 8], strides = [1, 1]} : vector<8x16xf32> to vector<8x8xf32>
    %77 = arith.truncf %76 : vector<8x8xf32> to vector<8x8xbf16>
    %cst_25 = arith.constant dense<0.000000e+00> : vector<8x8xf32>
    %78 = tpu.matmul %75, %77, %cst_25 {dimension_numbers = #tpu.dot_dimension_numbers<[1], [0], [0], [1], [0, 0, 1, 1], [], []>} : vector<8x8xbf16>, vector<8x8xbf16>, vector<8x8xf32> -> vector<8x8xf32>
    %79 = vector.extract_strided_slice %7 {offsets = [1, 0], sizes = [1, 8], strides = [1, 1]} : vector<2x8xf32> to vector<1x8xf32>
    %80 = vector.shape_cast %79 : vector<1x8xf32> to vector<1x1x8xf32>
    %81 = vector.extract_strided_slice %56 {offsets = [0, 0, 8], sizes = [8, 8, 8], strides = [1, 1, 1]} : vector<8x8x16xf32> to vector<8x8x8xf32>
    %82 = vector.broadcast %80 : vector<1x1x8xf32> to vector<8x8x8xf32>
    %83 = arith.mulf %81, %82 : vector<8x8x8xf32>
    %cst_26 = arith.constant dense<0.000000e+00> : vector<8x8xf32>
    %84 = vector.multi_reduction <add>, %83, %cst_26 [2] : vector<8x8x8xf32> to vector<8x8xf32>
    %85 = arith.addf %84, %4 : vector<8x8xf32>
    %cst_27 = arith.constant dense<0xFF800000> : vector<8xf32>
    %86 = vector.multi_reduction <maximumf>, %85, %cst_27 [1] : vector<8x8xf32> to vector<8xf32>
    %87 = vector.shape_cast %86 : vector<8xf32> to vector<8x1xf32>
    %88 = vector.broadcast %87 : vector<8x1xf32> to vector<8x8xf32>
    %89 = arith.subf %85, %88 : vector<8x8xf32>
    %90 = math.exp %89 : vector<8x8xf32>
    %91 = arith.mulf %90, %0 : vector<8x8xf32>
    %cst_28 = arith.constant dense<0.000000e+00> : vector<8xf32>
    %92 = vector.multi_reduction <add>, %91, %cst_28 [1] : vector<8x8xf32> to vector<8xf32>
    %93 = vector.shape_cast %92 : vector<8xf32> to vector<8x1xf32>
    %94 = tpu.reciprocal %93 {approx = true} : vector<8x1xf32> -> vector<8x1xf32>
    %95 = vector.broadcast %94 : vector<8x1xf32> to vector<8x8xf32>
    %96 = arith.mulf %91, %95 : vector<8x8xf32>
    %97 = arith.truncf %96 : vector<8x8xf32> to vector<8x8xbf16>
    %98 = vector.extract_strided_slice %14 {offsets = [0, 8], sizes = [8, 8], strides = [1, 1]} : vector<8x16xf32> to vector<8x8xf32>
    %99 = arith.truncf %98 : vector<8x8xf32> to vector<8x8xbf16>
    %cst_29 = arith.constant dense<0.000000e+00> : vector<8x8xf32>
    %100 = tpu.matmul %97, %99, %cst_29 {dimension_numbers = #tpu.dot_dimension_numbers<[1], [0], [0], [1], [0, 0, 1, 1], [], []>} : vector<8x8xbf16>, vector<8x8xbf16>, vector<8x8xf32> -> vector<8x8xf32>
    %101 = tpu.concatenate %78, %100 in 1 : vector<8x8xf32>, vector<8x8xf32> -> vector<8x16xf32>
    %c0_30 = arith.constant 0 : index
    %c0_31 = arith.constant 0 : index
    %102 = vector.load %arg9[%c0_30, %c0_31] : memref<1x16xf32, #tpu.memory_space<vmem>>, vector<1x16xf32>
    %103 = vector.broadcast %102 : vector<1x16xf32> to vector<8x16xf32>
    %104 = arith.addf %101, %103 : vector<8x16xf32>
    %cst_32 = arith.constant 0.000000e+00 : f32
    %105 = vector.broadcast %cst_32 : f32 to vector<8x16xf32>
    %106 = arith.cmpf ogt, %104, %105 : vector<8x16xf32>
    %cst_33 = arith.constant 0.000000e+00 : f32
    %107 = vector.broadcast %cst_33 : f32 to vector<8x16xf32>
    %108 = arith.minimumf %104, %107 : vector<8x16xf32>
    %109 = math.exp %108 : vector<8x16xf32>
    %cst_34 = arith.constant 1.000000e+00 : f32
    %110 = vector.broadcast %cst_34 : f32 to vector<8x16xf32>
    %111 = arith.subf %109, %110 : vector<8x16xf32>
    %112 = arith.select %106, %104, %111 : vector<8x16xi1>, vector<8x16xf32>
    %c0_35 = arith.constant 0 : index
    %c0_36 = arith.constant 0 : index
    %113 = vector.load %arg15[%c0_35, %c0_36] : memref<2x8xf32, #tpu.memory_space<vmem>>, vector<2x8xf32>
    %114 = arith.truncf %112 : vector<8x16xf32> to vector<8x16xbf16>
    %c0_37 = arith.constant 0 : index
    %c0_38 = arith.constant 0 : index
    %115 = vector.load %arg10[%c0_37, %c0_38] : memref<16x16xf32, #tpu.memory_space<vmem>>, vector<16x16xf32>
    %116 = arith.truncf %115 : vector<16x16xf32> to vector<16x16xbf16>
    %cst_39 = arith.constant dense<0.000000e+00> : vector<8x16xf32>
    %117 = tpu.matmul %114, %116, %cst_39 {dimension_numbers = #tpu.dot_dimension_numbers<[1], [0], [0], [1], [0, 0, 1, 1], [], []>} : vector<8x16xbf16>, vector<16x16xbf16>, vector<8x16xf32> -> vector<8x16xf32>
    %c0_40 = arith.constant 0 : index
    %c0_41 = arith.constant 0 : index
    %118 = vector.load %arg11[%c0_40, %c0_41] : memref<1x16xf32, #tpu.memory_space<vmem>>, vector<1x16xf32>
    %119 = vector.broadcast %118 : vector<1x16xf32> to vector<8x16xf32>
    %120 = arith.addf %117, %119 : vector<8x16xf32>
    %c0_42 = arith.constant 0 : index
    %c0_43 = arith.constant 0 : index
    %121 = vector.load %arg12[%c0_42, %c0_43] : memref<16x16xf32, #tpu.memory_space<vmem>>, vector<16x16xf32>
    %122 = arith.truncf %121 : vector<16x16xf32> to vector<16x16xbf16>
    %cst_44 = arith.constant dense<0.000000e+00> : vector<8x16xf32>
    %123 = tpu.matmul %114, %122, %cst_44 {dimension_numbers = #tpu.dot_dimension_numbers<[1], [0], [0], [1], [0, 0, 1, 1], [], []>} : vector<8x16xbf16>, vector<16x16xbf16>, vector<8x16xf32> -> vector<8x16xf32>
    %c0_45 = arith.constant 0 : index
    %c0_46 = arith.constant 0 : index
    %124 = vector.load %arg13[%c0_45, %c0_46] : memref<1x16xf32, #tpu.memory_space<vmem>>, vector<1x16xf32>
    %125 = vector.broadcast %124 : vector<1x16xf32> to vector<8x16xf32>
    %126 = arith.addf %123, %125 : vector<8x16xf32>
    %c0_47 = arith.constant 0 : index
    %c0_48 = arith.constant 0 : index
    %127 = vector.load %arg14[%c0_47, %c0_48] : memref<4x16xf32, #tpu.memory_space<vmem>>, vector<4x16xf32>
    %128 = vector.extract_strided_slice %5 {offsets = [0, 0], sizes = [64, 1], strides = [1, 1]} : vector<64x4xf32> to vector<64x1xf32>
    %129 = vector.extract_strided_slice %127 {offsets = [0, 0], sizes = [1, 16], strides = [1, 1]} : vector<4x16xf32> to vector<1x16xf32>
    %130 = vector.broadcast %128 : vector<64x1xf32> to vector<64x16xf32>
    %131 = vector.broadcast %129 : vector<1x16xf32> to vector<64x16xf32>
    %132 = arith.mulf %130, %131 : vector<64x16xf32>
    %133 = vector.extract_strided_slice %5 {offsets = [0, 1], sizes = [64, 1], strides = [1, 1]} : vector<64x4xf32> to vector<64x1xf32>
    %134 = vector.extract_strided_slice %127 {offsets = [1, 0], sizes = [1, 16], strides = [1, 1]} : vector<4x16xf32> to vector<1x16xf32>
    %135 = vector.broadcast %133 : vector<64x1xf32> to vector<64x16xf32>
    %136 = vector.broadcast %134 : vector<1x16xf32> to vector<64x16xf32>
    %137 = arith.mulf %135, %136 : vector<64x16xf32>
    %138 = arith.addf %132, %137 : vector<64x16xf32>
    %139 = vector.extract_strided_slice %5 {offsets = [0, 2], sizes = [64, 1], strides = [1, 1]} : vector<64x4xf32> to vector<64x1xf32>
    %140 = vector.extract_strided_slice %127 {offsets = [2, 0], sizes = [1, 16], strides = [1, 1]} : vector<4x16xf32> to vector<1x16xf32>
    %141 = vector.broadcast %139 : vector<64x1xf32> to vector<64x16xf32>
    %142 = vector.broadcast %140 : vector<1x16xf32> to vector<64x16xf32>
    %143 = arith.mulf %141, %142 : vector<64x16xf32>
    %144 = arith.addf %138, %143 : vector<64x16xf32>
    %145 = vector.extract_strided_slice %5 {offsets = [0, 3], sizes = [64, 1], strides = [1, 1]} : vector<64x4xf32> to vector<64x1xf32>
    %146 = vector.extract_strided_slice %127 {offsets = [3, 0], sizes = [1, 16], strides = [1, 1]} : vector<4x16xf32> to vector<1x16xf32>
    %147 = vector.broadcast %145 : vector<64x1xf32> to vector<64x16xf32>
    %148 = vector.broadcast %146 : vector<1x16xf32> to vector<64x16xf32>
    %149 = arith.mulf %147, %148 : vector<64x16xf32>
    %150 = arith.addf %144, %149 : vector<64x16xf32>
    %151 = vector.shape_cast %150 : vector<64x16xf32> to vector<8x8x16xf32>
    %152 = vector.shape_cast %120 : vector<8x16xf32> to vector<1x8x16xf32>
    %153 = vector.broadcast %152 : vector<1x8x16xf32> to vector<8x8x16xf32>
    %154 = arith.addf %151, %153 : vector<8x8x16xf32>
    %155 = vector.shape_cast %126 : vector<8x16xf32> to vector<8x1x16xf32>
    %156 = vector.broadcast %155 : vector<8x1x16xf32> to vector<8x8x16xf32>
    %157 = arith.addf %154, %156 : vector<8x8x16xf32>
    %cst_49 = arith.constant 0.000000e+00 : f32
    %158 = vector.broadcast %cst_49 : f32 to vector<8x8x16xf32>
    %159 = arith.cmpf oge, %157, %158 : vector<8x8x16xf32>
    %cst_50 = arith.constant 2.000000e-01 : f32
    %160 = vector.broadcast %cst_50 : f32 to vector<8x8x16xf32>
    %161 = arith.mulf %160, %157 : vector<8x8x16xf32>
    %162 = arith.select %159, %157, %161 : vector<8x8x16xi1>, vector<8x8x16xf32>
    %163 = vector.extract_strided_slice %113 {offsets = [0, 0], sizes = [1, 8], strides = [1, 1]} : vector<2x8xf32> to vector<1x8xf32>
    %164 = vector.shape_cast %163 : vector<1x8xf32> to vector<1x1x8xf32>
    %165 = vector.extract_strided_slice %162 {offsets = [0, 0, 0], sizes = [8, 8, 8], strides = [1, 1, 1]} : vector<8x8x16xf32> to vector<8x8x8xf32>
    %166 = vector.broadcast %164 : vector<1x1x8xf32> to vector<8x8x8xf32>
    %167 = arith.mulf %165, %166 : vector<8x8x8xf32>
    %cst_51 = arith.constant dense<0.000000e+00> : vector<8x8xf32>
    %168 = vector.multi_reduction <add>, %167, %cst_51 [2] : vector<8x8x8xf32> to vector<8x8xf32>
    %169 = arith.addf %168, %4 : vector<8x8xf32>
    %cst_52 = arith.constant dense<0xFF800000> : vector<8xf32>
    %170 = vector.multi_reduction <maximumf>, %169, %cst_52 [1] : vector<8x8xf32> to vector<8xf32>
    %171 = vector.shape_cast %170 : vector<8xf32> to vector<8x1xf32>
    %172 = vector.broadcast %171 : vector<8x1xf32> to vector<8x8xf32>
    %173 = arith.subf %169, %172 : vector<8x8xf32>
    %174 = math.exp %173 : vector<8x8xf32>
    %175 = arith.mulf %174, %0 : vector<8x8xf32>
    %cst_53 = arith.constant dense<0.000000e+00> : vector<8xf32>
    %176 = vector.multi_reduction <add>, %175, %cst_53 [1] : vector<8x8xf32> to vector<8xf32>
    %177 = vector.shape_cast %176 : vector<8xf32> to vector<8x1xf32>
    %178 = tpu.reciprocal %177 {approx = true} : vector<8x1xf32> -> vector<8x1xf32>
    %179 = vector.broadcast %178 : vector<8x1xf32> to vector<8x8xf32>
    %180 = arith.mulf %175, %179 : vector<8x8xf32>
    %181 = arith.truncf %180 : vector<8x8xf32> to vector<8x8xbf16>
    %182 = vector.extract_strided_slice %120 {offsets = [0, 0], sizes = [8, 8], strides = [1, 1]} : vector<8x16xf32> to vector<8x8xf32>
    %183 = arith.truncf %182 : vector<8x8xf32> to vector<8x8xbf16>
    %cst_54 = arith.constant dense<0.000000e+00> : vector<8x8xf32>
    %184 = tpu.matmul %181, %183, %cst_54 {dimension_numbers = #tpu.dot_dimension_numbers<[1], [0], [0], [1], [0, 0, 1, 1], [], []>} : vector<8x8xbf16>, vector<8x8xbf16>, vector<8x8xf32> -> vector<8x8xf32>
    %185 = vector.extract_strided_slice %113 {offsets = [1, 0], sizes = [1, 8], strides = [1, 1]} : vector<2x8xf32> to vector<1x8xf32>
    %186 = vector.shape_cast %185 : vector<1x8xf32> to vector<1x1x8xf32>
    %187 = vector.extract_strided_slice %162 {offsets = [0, 0, 8], sizes = [8, 8, 8], strides = [1, 1, 1]} : vector<8x8x16xf32> to vector<8x8x8xf32>
    %188 = vector.broadcast %186 : vector<1x1x8xf32> to vector<8x8x8xf32>
    %189 = arith.mulf %187, %188 : vector<8x8x8xf32>
    %cst_55 = arith.constant dense<0.000000e+00> : vector<8x8xf32>
    %190 = vector.multi_reduction <add>, %189, %cst_55 [2] : vector<8x8x8xf32> to vector<8x8xf32>
    %191 = arith.addf %190, %4 : vector<8x8xf32>
    %cst_56 = arith.constant dense<0xFF800000> : vector<8xf32>
    %192 = vector.multi_reduction <maximumf>, %191, %cst_56 [1] : vector<8x8xf32> to vector<8xf32>
    %193 = vector.shape_cast %192 : vector<8xf32> to vector<8x1xf32>
    %194 = vector.broadcast %193 : vector<8x1xf32> to vector<8x8xf32>
    %195 = arith.subf %191, %194 : vector<8x8xf32>
    %196 = math.exp %195 : vector<8x8xf32>
    %197 = arith.mulf %196, %0 : vector<8x8xf32>
    %cst_57 = arith.constant dense<0.000000e+00> : vector<8xf32>
    %198 = vector.multi_reduction <add>, %197, %cst_57 [1] : vector<8x8xf32> to vector<8xf32>
    %199 = vector.shape_cast %198 : vector<8xf32> to vector<8x1xf32>
    %200 = tpu.reciprocal %199 {approx = true} : vector<8x1xf32> -> vector<8x1xf32>
    %201 = vector.broadcast %200 : vector<8x1xf32> to vector<8x8xf32>
    %202 = arith.mulf %197, %201 : vector<8x8xf32>
    %203 = arith.truncf %202 : vector<8x8xf32> to vector<8x8xbf16>
    %204 = vector.extract_strided_slice %120 {offsets = [0, 8], sizes = [8, 8], strides = [1, 1]} : vector<8x16xf32> to vector<8x8xf32>
    %205 = arith.truncf %204 : vector<8x8xf32> to vector<8x8xbf16>
    %cst_58 = arith.constant dense<0.000000e+00> : vector<8x8xf32>
    %206 = tpu.matmul %203, %205, %cst_58 {dimension_numbers = #tpu.dot_dimension_numbers<[1], [0], [0], [1], [0, 0, 1, 1], [], []>} : vector<8x8xbf16>, vector<8x8xbf16>, vector<8x8xf32> -> vector<8x8xf32>
    %207 = tpu.concatenate %184, %206 in 1 : vector<8x8xf32>, vector<8x8xf32> -> vector<8x16xf32>
    %c0_59 = arith.constant 0 : index
    %c0_60 = arith.constant 0 : index
    %208 = vector.load %arg16[%c0_59, %c0_60] : memref<1x16xf32, #tpu.memory_space<vmem>>, vector<1x16xf32>
    %209 = vector.broadcast %208 : vector<1x16xf32> to vector<8x16xf32>
    %210 = arith.addf %207, %209 : vector<8x16xf32>
    %cst_61 = arith.constant 0.000000e+00 : f32
    %211 = vector.broadcast %cst_61 : f32 to vector<8x16xf32>
    %212 = arith.cmpf ogt, %210, %211 : vector<8x16xf32>
    %cst_62 = arith.constant 0.000000e+00 : f32
    %213 = vector.broadcast %cst_62 : f32 to vector<8x16xf32>
    %214 = arith.minimumf %210, %213 : vector<8x16xf32>
    %215 = math.exp %214 : vector<8x16xf32>
    %cst_63 = arith.constant 1.000000e+00 : f32
    %216 = vector.broadcast %cst_63 : f32 to vector<8x16xf32>
    %217 = arith.subf %215, %216 : vector<8x16xf32>
    %218 = arith.select %212, %210, %217 : vector<8x16xi1>, vector<8x16xf32>
    %c0_64 = arith.constant 0 : index
    %c0_65 = arith.constant 0 : index
    %219 = vector.load %arg22[%c0_64, %c0_65] : memref<1x6xf32, #tpu.memory_space<vmem>>, vector<1x6xf32>
    %220 = arith.truncf %218 : vector<8x16xf32> to vector<8x16xbf16>
    %c0_66 = arith.constant 0 : index
    %c0_67 = arith.constant 0 : index
    %221 = vector.load %arg17[%c0_66, %c0_67] : memref<16x6xf32, #tpu.memory_space<vmem>>, vector<16x6xf32>
    %222 = arith.truncf %221 : vector<16x6xf32> to vector<16x6xbf16>
    %cst_68 = arith.constant dense<0.000000e+00> : vector<8x6xf32>
    %223 = tpu.matmul %220, %222, %cst_68 {dimension_numbers = #tpu.dot_dimension_numbers<[1], [0], [0], [1], [0, 0, 1, 1], [], []>} : vector<8x16xbf16>, vector<16x6xbf16>, vector<8x6xf32> -> vector<8x6xf32>
    %c0_69 = arith.constant 0 : index
    %c0_70 = arith.constant 0 : index
    %224 = vector.load %arg18[%c0_69, %c0_70] : memref<1x6xf32, #tpu.memory_space<vmem>>, vector<1x6xf32>
    %225 = vector.broadcast %224 : vector<1x6xf32> to vector<8x6xf32>
    %226 = arith.addf %223, %225 : vector<8x6xf32>
    %c0_71 = arith.constant 0 : index
    %c0_72 = arith.constant 0 : index
    %227 = vector.load %arg19[%c0_71, %c0_72] : memref<16x6xf32, #tpu.memory_space<vmem>>, vector<16x6xf32>
    %228 = arith.truncf %227 : vector<16x6xf32> to vector<16x6xbf16>
    %cst_73 = arith.constant dense<0.000000e+00> : vector<8x6xf32>
    %229 = tpu.matmul %220, %228, %cst_73 {dimension_numbers = #tpu.dot_dimension_numbers<[1], [0], [0], [1], [0, 0, 1, 1], [], []>} : vector<8x16xbf16>, vector<16x6xbf16>, vector<8x6xf32> -> vector<8x6xf32>
    %c0_74 = arith.constant 0 : index
    %c0_75 = arith.constant 0 : index
    %230 = vector.load %arg20[%c0_74, %c0_75] : memref<1x6xf32, #tpu.memory_space<vmem>>, vector<1x6xf32>
    %231 = vector.broadcast %230 : vector<1x6xf32> to vector<8x6xf32>
    %232 = arith.addf %229, %231 : vector<8x6xf32>
    %c0_76 = arith.constant 0 : index
    %c0_77 = arith.constant 0 : index
    %233 = vector.load %arg21[%c0_76, %c0_77] : memref<4x6xf32, #tpu.memory_space<vmem>>, vector<4x6xf32>
    %234 = vector.extract_strided_slice %5 {offsets = [0, 0], sizes = [64, 1], strides = [1, 1]} : vector<64x4xf32> to vector<64x1xf32>
    %235 = vector.extract_strided_slice %233 {offsets = [0, 0], sizes = [1, 6], strides = [1, 1]} : vector<4x6xf32> to vector<1x6xf32>
    %236 = vector.broadcast %234 : vector<64x1xf32> to vector<64x6xf32>
    %237 = vector.broadcast %235 : vector<1x6xf32> to vector<64x6xf32>
    %238 = arith.mulf %236, %237 : vector<64x6xf32>
    %239 = vector.extract_strided_slice %5 {offsets = [0, 1], sizes = [64, 1], strides = [1, 1]} : vector<64x4xf32> to vector<64x1xf32>
    %240 = vector.extract_strided_slice %233 {offsets = [1, 0], sizes = [1, 6], strides = [1, 1]} : vector<4x6xf32> to vector<1x6xf32>
    %241 = vector.broadcast %239 : vector<64x1xf32> to vector<64x6xf32>
    %242 = vector.broadcast %240 : vector<1x6xf32> to vector<64x6xf32>
    %243 = arith.mulf %241, %242 : vector<64x6xf32>
    %244 = arith.addf %238, %243 : vector<64x6xf32>
    %245 = vector.extract_strided_slice %5 {offsets = [0, 2], sizes = [64, 1], strides = [1, 1]} : vector<64x4xf32> to vector<64x1xf32>
    %246 = vector.extract_strided_slice %233 {offsets = [2, 0], sizes = [1, 6], strides = [1, 1]} : vector<4x6xf32> to vector<1x6xf32>
    %247 = vector.broadcast %245 : vector<64x1xf32> to vector<64x6xf32>
    %248 = vector.broadcast %246 : vector<1x6xf32> to vector<64x6xf32>
    %249 = arith.mulf %247, %248 : vector<64x6xf32>
    %250 = arith.addf %244, %249 : vector<64x6xf32>
    %251 = vector.extract_strided_slice %5 {offsets = [0, 3], sizes = [64, 1], strides = [1, 1]} : vector<64x4xf32> to vector<64x1xf32>
    %252 = vector.extract_strided_slice %233 {offsets = [3, 0], sizes = [1, 6], strides = [1, 1]} : vector<4x6xf32> to vector<1x6xf32>
    %253 = vector.broadcast %251 : vector<64x1xf32> to vector<64x6xf32>
    %254 = vector.broadcast %252 : vector<1x6xf32> to vector<64x6xf32>
    %255 = arith.mulf %253, %254 : vector<64x6xf32>
    %256 = arith.addf %250, %255 : vector<64x6xf32>
    %257 = vector.shape_cast %256 : vector<64x6xf32> to vector<8x8x6xf32>
    %258 = vector.shape_cast %226 : vector<8x6xf32> to vector<1x8x6xf32>
    %259 = vector.broadcast %258 : vector<1x8x6xf32> to vector<8x8x6xf32>
    %260 = arith.addf %257, %259 : vector<8x8x6xf32>
    %261 = vector.shape_cast %232 : vector<8x6xf32> to vector<8x1x6xf32>
    %262 = vector.broadcast %261 : vector<8x1x6xf32> to vector<8x8x6xf32>
    %263 = arith.addf %260, %262 : vector<8x8x6xf32>
    %cst_78 = arith.constant 0.000000e+00 : f32
    %264 = vector.broadcast %cst_78 : f32 to vector<8x8x6xf32>
    %265 = arith.cmpf oge, %263, %264 : vector<8x8x6xf32>
    %cst_79 = arith.constant 2.000000e-01 : f32
    %266 = vector.broadcast %cst_79 : f32 to vector<8x8x6xf32>
    %267 = arith.mulf %266, %263 : vector<8x8x6xf32>
    %268 = arith.select %265, %263, %267 : vector<8x8x6xi1>, vector<8x8x6xf32>
    %269 = vector.shape_cast %219 : vector<1x6xf32> to vector<1x1x6xf32>
    %270 = vector.broadcast %269 : vector<1x1x6xf32> to vector<8x8x6xf32>
    %271 = arith.mulf %268, %270 : vector<8x8x6xf32>
    %cst_80 = arith.constant dense<0.000000e+00> : vector<8x8xf32>
    %272 = vector.multi_reduction <add>, %271, %cst_80 [2] : vector<8x8x6xf32> to vector<8x8xf32>
    %273 = arith.addf %272, %4 : vector<8x8xf32>
    %cst_81 = arith.constant dense<0xFF800000> : vector<8xf32>
    %274 = vector.multi_reduction <maximumf>, %273, %cst_81 [1] : vector<8x8xf32> to vector<8xf32>
    %275 = vector.shape_cast %274 : vector<8xf32> to vector<8x1xf32>
    %276 = vector.broadcast %275 : vector<8x1xf32> to vector<8x8xf32>
    %277 = arith.subf %273, %276 : vector<8x8xf32>
    %278 = math.exp %277 : vector<8x8xf32>
    %279 = arith.mulf %278, %0 : vector<8x8xf32>
    %cst_82 = arith.constant dense<0.000000e+00> : vector<8xf32>
    %280 = vector.multi_reduction <add>, %279, %cst_82 [1] : vector<8x8xf32> to vector<8xf32>
    %281 = vector.shape_cast %280 : vector<8xf32> to vector<8x1xf32>
    %282 = tpu.reciprocal %281 {approx = true} : vector<8x1xf32> -> vector<8x1xf32>
    %283 = vector.broadcast %282 : vector<8x1xf32> to vector<8x8xf32>
    %284 = arith.mulf %279, %283 : vector<8x8xf32>
    %285 = arith.truncf %284 : vector<8x8xf32> to vector<8x8xbf16>
    %286 = arith.truncf %226 : vector<8x6xf32> to vector<8x6xbf16>
    %cst_83 = arith.constant dense<0.000000e+00> : vector<8x6xf32>
    %287 = tpu.matmul %285, %286, %cst_83 {dimension_numbers = #tpu.dot_dimension_numbers<[1], [0], [0], [1], [0, 0, 1, 1], [], []>} : vector<8x8xbf16>, vector<8x6xbf16>, vector<8x6xf32> -> vector<8x6xf32>
    %c0_84 = arith.constant 0 : index
    %c0_85 = arith.constant 0 : index
    %288 = vector.load %arg23[%c0_84, %c0_85] : memref<1x6xf32, #tpu.memory_space<vmem>>, vector<1x6xf32>
    %289 = vector.broadcast %288 : vector<1x6xf32> to vector<8x6xf32>
    %290 = arith.addf %287, %289 : vector<8x6xf32>
    %cst_86 = arith.constant 0.000000e+00 : f32
    %291 = vector.broadcast %cst_86 : f32 to vector<8x6xf32>
    %292 = arith.maximumf %290, %291 : vector<8x6xf32>
    %c0_87 = arith.constant 0 : index
    %c0_88 = arith.constant 0 : index
    %293 = vector.load %arg24[%c0_87, %c0_88] : memref<8x6xf32, #tpu.memory_space<vmem>>, vector<8x6xf32>
    tpu.vector_store %arg24[%c0_87, %c0_88], %292 {strides = array<i32>} : memref<8x6xf32, #tpu.memory_space<vmem>>, vector<8x6xf32>,
    return
  }
}

</mosaic_0001>

<llo_original>
// kernel: tpu_custom_call.1
$region0: #{tpu_custom_call.1}
  #allocation0 [shape = 'u32[]', space=smem, size = 0x4, offset = 0x4, fixed_abs, tag = 'smem constant byte address 0x4 - core index']
  #allocation1 [shape = 'u32[144,128]{1,0:T(1,128)}', space=vmem, size = 0x12000, scoped, tag = 'internal scratch']
  %s0 = inlined_call_operand.vmem [shape: f32[8,4], index: 0, kind: input, shape index: {}]
  %s1 = inlined_call_operand.vmem [shape: f32[8,8], index: 1, kind: input, shape index: {}]
  %s2 = inlined_call_operand.vmem [shape: f32[64,4], index: 2, kind: input, shape index: {}]
  %s3 = inlined_call_operand.vmem [shape: f32[4,16], index: 3, kind: input, shape index: {}]
  %s4 = inlined_call_operand.vmem [shape: f32[1,16], index: 4, kind: input, shape index: {}]
  %s5 = inlined_call_operand.vmem [shape: f32[4,16], index: 5, kind: input, shape index: {}]
  %s6 = inlined_call_operand.vmem [shape: f32[1,16], index: 6, kind: input, shape index: {}]
  %s7 = inlined_call_operand.vmem [shape: f32[4,16], index: 7, kind: input, shape index: {}]
  %s8 = inlined_call_operand.vmem [shape: f32[2,8], index: 8, kind: input, shape index: {}]
  %s9 = inlined_call_operand.vmem [shape: f32[1,16], index: 9, kind: input, shape index: {}]
  %s10 = inlined_call_operand.vmem [shape: f32[16,16], index: 10, kind: input, shape index: {}]
  %s11 = inlined_call_operand.vmem [shape: f32[1,16], index: 11, kind: input, shape index: {}]
  %s12 = inlined_call_operand.vmem [shape: f32[16,16], index: 12, kind: input, shape index: {}]
  %s13 = inlined_call_operand.vmem [shape: f32[1,16], index: 13, kind: input, shape index: {}]
  %s14 = inlined_call_operand.vmem [shape: f32[4,16], index: 14, kind: input, shape index: {}]
  %s15 = inlined_call_operand.vmem [shape: f32[2,8], index: 15, kind: input, shape index: {}]
  %s16 = inlined_call_operand.vmem [shape: f32[1,16], index: 16, kind: input, shape index: {}]
  %s17 = inlined_call_operand.vmem [shape: f32[16,6], index: 17, kind: input, shape index: {}]
  %s18 = inlined_call_operand.vmem [shape: f32[1,6], index: 18, kind: input, shape index: {}]
  %s19 = inlined_call_operand.vmem [shape: f32[16,6], index: 19, kind: input, shape index: {}]
  %s20 = inlined_call_operand.vmem [shape: f32[1,6], index: 20, kind: input, shape index: {}]
  %s21 = inlined_call_operand.vmem [shape: f32[4,6], index: 21, kind: input, shape index: {}]
  %s22 = inlined_call_operand.vmem [shape: f32[1,6], index: 22, kind: input, shape index: {}]
  %s23 = inlined_call_operand.vmem [shape: f32[1,6], index: 23, kind: input, shape index: {}]
  %s24 = inlined_call_operand.hbm [shape: f32[8,6], index: 24, kind: output, shape index: {}]
  %s25 = sld [smem:[#allocation0]]
  $region106: #{tpu_custom_call.1} parent=0
    _
  %s27 = ssub.s32 1, %s25
  %s28 = scalar_select 0, %s27, %s25
  $region1: #{tpu_custom_call.1} parent=0
    #allocation2 [shape = 'u8[4096]{0}', space=vmem, size = 0x1000, scoped, tag = 'output window, operand 0, single buffered']
    #allocation3 [shape = 's32[1]{0}', space=sflag, size = 0x4, scoped, tag = 'scoped memory for tpu_custom_call.1']
    %29 = vsyncpa [#allocation3], 0
    // Predicated region
    $region2: #{tpu_custom_call.1} parent=1 // pred_check
      _
    $region3: #{tpu_custom_call.1} parent=1 // pred_check_branch
      %31 = sbr.rel (0) target = $region5
    $region4: #{tpu_custom_call.1} parent=1 // pred_region
      _
    $region5: #{tpu_custom_call.1} parent=1 // pred_fallthru
      _
    // Predicated region
    $region6: #{tpu_custom_call.1} parent=1 // pred_check
      _
    $region7: #{tpu_custom_call.1} parent=1 // pred_check_branch
      %33 = sbr.rel (0) target = $region9
    $region8: #{tpu_custom_call.1} parent=1 // pred_region
      _
    $region9: #{tpu_custom_call.1} parent=1 // pred_fallthru
      _
    // Predicated region
    $region10: #{tpu_custom_call.1} parent=1 // pred_check
      _
    $region11: #{tpu_custom_call.1} parent=1 // pred_check_branch
      %35 = sbr.rel (0) target = $region13
    $region12: #{tpu_custom_call.1} parent=1 // pred_region
      _
    $region13: #{tpu_custom_call.1} parent=1 // pred_fallthru
      _
    // Predicated region
    $region14: #{tpu_custom_call.1} parent=1 // pred_check
      _
    $region15: #{tpu_custom_call.1} parent=1 // pred_check_branch
      %37 = sbr.rel (0) target = $region17
    $region16: #{tpu_custom_call.1} parent=1 // pred_region
      _
    $region17: #{tpu_custom_call.1} parent=1 // pred_fallthru
      _
    // Predicated region
    $region18: #{tpu_custom_call.1} parent=1 // pred_check
      _
    $region19: #{tpu_custom_call.1} parent=1 // pred_check_branch
      %39 = sbr.rel (0) target = $region21
    $region20: #{tpu_custom_call.1} parent=1 // pred_region
      _
    $region21: #{tpu_custom_call.1} parent=1 // pred_fallthru
      _
    // Predicated region
    $region22: #{tpu_custom_call.1} parent=1 // pred_check
      _
    $region23: #{tpu_custom_call.1} parent=1 // pred_check_branch
      %41 = sbr.rel (0) target = $region25
    $region24: #{tpu_custom_call.1} parent=1 // pred_region
      _
    $region25: #{tpu_custom_call.1} parent=1 // pred_fallthru
      _
    // Predicated region
    $region26: #{tpu_custom_call.1} parent=1 // pred_check
      _
    $region27: #{tpu_custom_call.1} parent=1 // pred_check_branch
      %43 = sbr.rel (0) target = $region29
    $region28: #{tpu_custom_call.1} parent=1 // pred_region
      _
    $region29: #{tpu_custom_call.1} parent=1 // pred_fallthru
      _
    // Predicated region
    $region30: #{tpu_custom_call.1} parent=1 // pred_check
      _
    $region31: #{tpu_custom_call.1} parent=1 // pred_check_branch
      %45 = sbr.rel (0) target = $region33
    $region32: #{tpu_custom_call.1} parent=1 // pred_region
      _
    $region33: #{tpu_custom_call.1} parent=1 // pred_fallthru
      _
    // Predicated region
    $region34: #{tpu_custom_call.1} parent=1 // pred_check
      _
    $region35: #{tpu_custom_call.1} parent=1 // pred_check_branch
      %47 = sbr.rel (0) target = $region37
    $region36: #{tpu_custom_call.1} parent=1 // pred_region
      _
    $region37: #{tpu_custom_call.1} parent=1 // pred_fallthru
      _
    // Predicated region
    $region38: #{tpu_custom_call.1} parent=1 // pred_check
      _
    $region39: #{tpu_custom_call.1} parent=1 // pred_check_branch
      %49 = sbr.rel (0) target = $region41
    $region40: #{tpu_custom_call.1} parent=1 // pred_region
      _
    $region41: #{tpu_custom_call.1} parent=1 // pred_fallthru
      _
    // Predicated region
    $region42: #{tpu_custom_call.1} parent=1 // pred_check
      _
    $region43: #{tpu_custom_call.1} parent=1 // pred_check_branch
      %51 = sbr.rel (0) target = $region45
    $region44: #{tpu_custom_call.1} parent=1 // pred_region
      _
    $region45: #{tpu_custom_call.1} parent=1 // pred_fallthru
      _
    // Predicated region
    $region46: #{tpu_custom_call.1} parent=1 // pred_check
      _
    $region47: #{tpu_custom_call.1} parent=1 // pred_check_branch
      %53 = sbr.rel (0) target = $region49
    $region48: #{tpu_custom_call.1} parent=1 // pred_region
      _
    $region49: #{tpu_custom_call.1} parent=1 // pred_fallthru
      _
    // Predicated region
    $region50: #{tpu_custom_call.1} parent=1 // pred_check
      _
    $region51: #{tpu_custom_call.1} parent=1 // pred_check_branch
      %55 = sbr.rel (0) target = $region53
    $region52: #{tpu_custom_call.1} parent=1 // pred_region
      _
    $region53: #{tpu_custom_call.1} parent=1 // pred_fallthru
      _
    // Predicated region
    $region54: #{tpu_custom_call.1} parent=1 // pred_check
      _
    $region55: #{tpu_custom_call.1} parent=1 // pred_check_branch
      %57 = sbr.rel (0) target = $region57
    $region56: #{tpu_custom_call.1} parent=1 // pred_region
      _
    $region57: #{tpu_custom_call.1} parent=1 // pred_fallthru
      _
    // Predicated region
    $region58: #{tpu_custom_call.1} parent=1 // pred_check
      _
    $region59: #{tpu_custom_call.1} parent=1 // pred_check_branch
      %59 = sbr.rel (0) target = $region61
    $region60: #{tpu_custom_call.1} parent=1 // pred_region
      _
    $region61: #{tpu_custom_call.1} parent=1 // pred_fallthru
      _
    // Predicated region
    $region62: #{tpu_custom_call.1} parent=1 // pred_check
      _
    $region63: #{tpu_custom_call.1} parent=1 // pred_check_branch
      %61 = sbr.rel (0) target = $region65
    $region64: #{tpu_custom_call.1} parent=1 // pred_region
      _
    $region65: #{tpu_custom_call.1} parent=1 // pred_fallthru
      _
    // Predicated region
    $region66: #{tpu_custom_call.1} parent=1 // pred_check
      _
    $region67: #{tpu_custom_call.1} parent=1 // pred_check_branch
      %63 = sbr.rel (0) target = $region69
    $region68: #{tpu_custom_call.1} parent=1 // pred_region
      _
    $region69: #{tpu_custom_call.1} parent=1 // pred_fallthru
      _
    // Predicated region
    $region70: #{tpu_custom_call.1} parent=1 // pred_check
      _
    $region71: #{tpu_custom_call.1} parent=1 // pred_check_branch
      %65 = sbr.rel (0) target = $region73
    $region72: #{tpu_custom_call.1} parent=1 // pred_region
      _
    $region73: #{tpu_custom_call.1} parent=1 // pred_fallthru
      _
    // Predicated region
    $region74: #{tpu_custom_call.1} parent=1 // pred_check
      _
    $region75: #{tpu_custom_call.1} parent=1 // pred_check_branch
      %67 = sbr.rel (0) target = $region77
    $region76: #{tpu_custom_call.1} parent=1 // pred_region
      _
    $region77: #{tpu_custom_call.1} parent=1 // pred_fallthru
      _
    // Predicated region
    $region78: #{tpu_custom_call.1} parent=1 // pred_check
      _
    $region79: #{tpu_custom_call.1} parent=1 // pred_check_branch
      %69 = sbr.rel (0) target = $region81
    $region80: #{tpu_custom_call.1} parent=1 // pred_region
      _
    $region81: #{tpu_custom_call.1} parent=1 // pred_fallthru
      _
    // Predicated region
    $region82: #{tpu_custom_call.1} parent=1 // pred_check
      _
    $region83: #{tpu_custom_call.1} parent=1 // pred_check_branch
      %71 = sbr.rel (0) target = $region85
    $region84: #{tpu_custom_call.1} parent=1 // pred_region
      _
    $region85: #{tpu_custom_call.1} parent=1 // pred_fallthru
      _
    // Predicated region
    $region86: #{tpu_custom_call.1} parent=1 // pred_check
      _
    $region87: #{tpu_custom_call.1} parent=1 // pred_check_branch
      %73 = sbr.rel (0) target = $region89
    $region88: #{tpu_custom_call.1} parent=1 // pred_region
      _
    $region89: #{tpu_custom_call.1} parent=1 // pred_fallthru
      _
    // Predicated region
    $region90: #{tpu_custom_call.1} parent=1 // pred_check
      _
    $region91: #{tpu_custom_call.1} parent=1 // pred_check_branch
      %75 = sbr.rel (0) target = $region93
    $region92: #{tpu_custom_call.1} parent=1 // pred_region
      _
    $region93: #{tpu_custom_call.1} parent=1 // pred_fallthru
      _
    // Predicated region
    $region94: #{tpu_custom_call.1} parent=1 // pred_check
      _
    $region95: #{tpu_custom_call.1} parent=1 // pred_check_branch
      %77 = sbr.rel (0) target = $region97
    $region96: #{tpu_custom_call.1} parent=1 // pred_region
      _
    $region97: #{tpu_custom_call.1} parent=1 // pred_fallthru
      _
    %v79 = vld [vmem:[%s1] sm:$0xff]
    %v80 = vsub.f32 %v79, 1.0
    %v81 = vmul.f32 %v80, 1e+30
    %v82 = vld [vmem:[%s2] sm:$0xff]
    %v83 = vld [vmem:[%s2 + $0x8] sm:$0xff]
    %v84 = vld [vmem:[%s2 + $0x10] sm:$0xff]
    %v85 = vld [vmem:[%s2 + $0x18] sm:$0xff]
    %v86 = vld [vmem:[%s2 + $0x20] sm:$0xff]
    %v87 = vld [vmem:[%s2 + $0x28] sm:$0xff]
    %v88 = vld [vmem:[%s2 + $0x30] sm:$0xff]
    %v89 = vld [vmem:[%s2 + $0x38] sm:$0xff]
    %v90 = vld [vmem:[%s0] sm:$0xff]
    %v91 = vld [vmem:[%s8] sm:$0x3]
    %v92 = vpack.c.bf16 %v90, %v90
    %v93 = vld [vmem:[%s3] sm:$0xf]
    %v94 = vpack.c.bf16 %v93, %v93
    %v95 = vld [vmem:[%s4] sm:$0x1]
    %v97 = vlaneseq
    %v98 = vshrl.u32 %v97, 7
    %v99 = vsub.s32 0, %v98
    %v100 = vrot.slane %v95, %v99
    %vm102 = vcmask 31744
    %v104 = vsel %vm102, %v92, 0
    %vm106 = vcmask 1041408
    %v108 = vsel %vm106, %v94, 0
    %110 = vmatprep.subr.bf16.mxu0 0
    %111 = vmatpush1.bf16.msra.mxu0 %v108
    %112 = vmatprep.subr.bf16.mxu0 0
    %113 = vmatpush1.bf16.msra.mxu0 0
    %114 = vmatprep.subr.bf16.mxu0 0
    %115 = vmatpush1.bf16.msra.mxu0 0
    %116 = vmatprep.subr.bf16.mxu0 0
    %117 = vmatpush1.bf16.msra.mxu0 0
    %118 = vmatprep.subr.bf16.mxu0 0
    %119 = vmatpush1.bf16.msra.mxu0 0
    %120 = vmatprep.subr.bf16.mxu0 0
    %121 = vmatpush1.bf16.msra.mxu0 0
    %122 = vmatprep.subr.bf16.mxu0 0
    %123 = vmatpush1.bf16.msra.mxu0 0
    %124 = vmatprep.subr.bf16.mxu0 0
    %125 = vmatpush1.bf16.msra.mxu0 0
    %126 = vmatprep.subr.bf16.mxu0 0
    %127 = vmatpush1.bf16.msra.mxu0 0
    %128 = vmatprep.subr.bf16.mxu0 0
    %129 = vmatpush1.bf16.msra.mxu0 0
    %130 = vmatprep.subr.bf16.mxu0 0
    %131 = vmatpush1.bf16.msra.mxu0 0
    %132 = vmatprep.subr.bf16.mxu0 0
    %133 = vmatpush1.bf16.msra.mxu0 0
    %134 = vmatprep.subr.bf16.mxu0 0
    %135 = vmatpush1.bf16.msra.mxu0 0
    %136 = vmatprep.subr.bf16.mxu0 0
    %137 = vmatpush1.bf16.msra.mxu0 0
    %138 = vmatprep.subr.bf16.mxu0 0
    %139 = vmatpush1.bf16.msra.mxu0 0
    %140 = vmatprep.subr.bf16.mxu0 0
    %141 = vmatpush1.bf16.msra.mxu0 0
    %142 = vmatprep.mubr.bf16.mxu0 0
    %143 = vmatmul.mubr.bf16.gmra.mrb[0].mxu0 %v104
    %v144 = vpop.f32.mrb[0].mxu0
    %v145 = vadd.f32 %v100, %v144
    %v146 = vpop.f32.mrb[0].mxu0
    %v147 = vpop.f32.mrb[0].mxu0
    %v148 = vpop.f32.mrb[0].mxu0
    %149 = vdwg.mxu0
    %v150 = vld [vmem:[%s5] sm:$0xf]
    %v151 = vpack.c.bf16 %v150, %v150
    %v152 = vld [vmem:[%s6] sm:$0x1]
    %v154 = vlaneseq
    %v155 = vshrl.u32 %v154, 7
    %v156 = vsub.s32 0, %v155
    %v157 = vrot.slane %v152, %v156
    %v160 = vsel %vm106, %v151, 0
    %162 = vmatprep.subr.bf16.mxu0 0
    %163 = vmatpush1.bf16.msra.mxu0 %v160
    %164 = vmatprep.subr.bf16.mxu0 0
    %165 = vmatpush1.bf16.msra.mxu0 0
    %166 = vmatprep.subr.bf16.mxu0 0
    %167 = vmatpush1.bf16.msra.mxu0 0
    %168 = vmatprep.subr.bf16.mxu0 0
    %169 = vmatpush1.bf16.msra.mxu0 0
    %170 = vmatprep.subr.bf16.mxu0 0
    %171 = vmatpush1.bf16.msra.mxu0 0
    %172 = vmatprep.subr.bf16.mxu0 0
    %173 = vmatpush1.bf16.msra.mxu0 0
    %174 = vmatprep.subr.bf16.mxu0 0
    %175 = vmatpush1.bf16.msra.mxu0 0
    %176 = vmatprep.subr.bf16.mxu0 0
    %177 = vmatpush1.bf16.msra.mxu0 0
    %178 = vmatprep.subr.bf16.mxu0 0
    %179 = vmatpush1.bf16.msra.mxu0 0
    %180 = vmatprep.subr.bf16.mxu0 0
    %181 = vmatpush1.bf16.msra.mxu0 0
    %182 = vmatprep.subr.bf16.mxu0 0
    %183 = vmatpush1.bf16.msra.mxu0 0
    %184 = vmatprep.subr.bf16.mxu0 0
    %185 = vmatpush1.bf16.msra.mxu0 0
    %186 = vmatprep.subr.bf16.mxu0 0
    %187 = vmatpush1.bf16.msra.mxu0 0
    %188 = vmatprep.subr.bf16.mxu0 0
    %189 = vmatpush1.bf16.msra.mxu0 0
    %190 = vmatprep.subr.bf16.mxu0 0
    %191 = vmatpush1.bf16.msra.mxu0 0
    %192 = vmatprep.subr.bf16.mxu0 0
    %193 = vmatpush1.bf16.msra.mxu0 0
    %194 = vmatprep.mubr.bf16.mxu0 0
    %195 = vmatmul.mubr.bf16.gmra.mrb[0].mxu0 %v104
    %v196 = vpop.f32.mrb[0].mxu0
    %v197 = vadd.f32 %v157, %v196
    %v198 = vpop.f32.mrb[0].mxu0
    %v199 = vpop.f32.mrb[0].mxu0
    %v200 = vpop.f32.mrb[0].mxu0
    %201 = vdwg.mxu0
    %v202 = vld [vmem:[%s7] sm:$0xf]
    %204 = vset.pattern.permute.xlu0 0
    %205 = vperm.xlu0 %204, %v82
    %v206 = vpop.permute.xlu0 %205
    %209 = vset.pattern.permute.xlu0 0
    %210 = vperm.xlu0 %209, %v83
    %v211 = vpop.permute.xlu0 %210
    %214 = vset.pattern.permute.xlu0 0
    %215 = vperm.xlu0 %214, %v84
    %v216 = vpop.permute.xlu0 %215
    %219 = vset.pattern.permute.xlu0 0
    %220 = vperm.xlu0 %219, %v85
    %v221 = vpop.permute.xlu0 %220
    %224 = vset.pattern.permute.xlu0 0
    %225 = vperm.xlu0 %224, %v86
    %v226 = vpop.permute.xlu0 %225
    %229 = vset.pattern.permute.xlu0 0
    %230 = vperm.xlu0 %229, %v87
    %v231 = vpop.permute.xlu0 %230
    %234 = vset.pattern.permute.xlu0 0
    %235 = vperm.xlu0 %234, %v88
    %v236 = vpop.permute.xlu0 %235
    %239 = vset.pattern.permute.xlu0 0
    %240 = vperm.xlu0 %239, %v89
    %v241 = vpop.permute.xlu0 %240
    %v243 = vlaneseq
    %v244 = vshrl.u32 %v243, 7
    %v245 = vsub.s32 0, %v244
    %v246 = vrot.slane %v202, %v245
    %v247 = vmul.f32 %v206, %v246
    %v248 = vmul.f32 %v211, %v246
    %v249 = vmul.f32 %v216, %v246
    %v250 = vmul.f32 %v221, %v246
    %v251 = vmul.f32 %v226, %v246
    %v252 = vmul.f32 %v231, %v246
    %v253 = vmul.f32 %v236, %v246
    %v254 = vmul.f32 %v241, %v246
    %255 = vset.pattern.permute.xlu0 1
    %256 = vperm.xlu0 %255, %v82
    %v257 = vpop.permute.xlu0 %256
    %259 = vset.pattern.permute.xlu0 1
    %260 = vperm.xlu0 %259, %v83
    %v261 = vpop.permute.xlu0 %260
    %263 = vset.pattern.permute.xlu0 1
    %264 = vperm.xlu0 %263, %v84
    %v265 = vpop.permute.xlu0 %264
    %267 = vset.pattern.permute.xlu0 1
    %268 = vperm.xlu0 %267, %v85
    %v269 = vpop.permute.xlu0 %268
    %271 = vset.pattern.permute.xlu0 1
    %272 = vperm.xlu0 %271, %v86
    %v273 = vpop.permute.xlu0 %272
    %275 = vset.pattern.permute.xlu0 1
    %276 = vperm.xlu0 %275, %v87
    %v277 = vpop.permute.xlu0 %276
    %279 = vset.pattern.permute.xlu0 1
    %280 = vperm.xlu0 %279, %v88
    %v281 = vpop.permute.xlu0 %280
    %283 = vset.pattern.permute.xlu0 1
    %284 = vperm.xlu0 %283, %v89
    %v285 = vpop.permute.xlu0 %284
    %v287 = vlaneseq
    %v288 = vshrl.u32 %v287, 7
    %v289 = vsub.s32 1, %v288
    %v290 = vrot.slane %v202, %v289
    %v291 = vmul.f32 %v257, %v290
    %v292 = vmul.f32 %v261, %v290
    %v293 = vmul.f32 %v265, %v290
    %v294 = vmul.f32 %v269, %v290
    %v295 = vmul.f32 %v273, %v290
    %v296 = vmul.f32 %v277, %v290
    %v297 = vmul.f32 %v281, %v290
    %v298 = vmul.f32 %v285, %v290
    %v299 = vadd.f32 %v247, %v291
    %v300 = vadd.f32 %v248, %v292
    %v301 = vadd.f32 %v249, %v293
    %v302 = vadd.f32 %v250, %v294
    %v303 = vadd.f32 %v251, %v295
    %v304 = vadd.f32 %v252, %v296
    %v305 = vadd.f32 %v253, %v297
    %v306 = vadd.f32 %v254, %v298
    %307 = vset.pattern.permute.xlu0 2
    %308 = vperm.xlu0 %307, %v82
    %v309 = vpop.permute.xlu0 %308
    %311 = vset.pattern.permute.xlu0 2
    %312 = vperm.xlu0 %311, %v83
    %v313 = vpop.permute.xlu0 %312
    %315 = vset.pattern.permute.xlu0 2
    %316 = vperm.xlu0 %315, %v84
    %v317 = vpop.permute.xlu0 %316
    %319 = vset.pattern.permute.xlu0 2
    %320 = vperm.xlu0 %319, %v85
    %v321 = vpop.permute.xlu0 %320
    %323 = vset.pattern.permute.xlu0 2
    %324 = vperm.xlu0 %323, %v86
    %v325 = vpop.permute.xlu0 %324
    %327 = vset.pattern.permute.xlu0 2
    %328 = vperm.xlu0 %327, %v87
    %v329 = vpop.permute.xlu0 %328
    %331 = vset.pattern.permute.xlu0 2
    %332 = vperm.xlu0 %331, %v88
    %v333 = vpop.permute.xlu0 %332
    %335 = vset.pattern.permute.xlu0 2
    %336 = vperm.xlu0 %335, %v89
    %v337 = vpop.permute.xlu0 %336
    %v339 = vlaneseq
    %v340 = vshrl.u32 %v339, 7
    %v341 = vsub.s32 2, %v340
    %v342 = vrot.slane %v202, %v341
    %v343 = vmul.f32 %v309, %v342
    %v344 = vmul.f32 %v313, %v342
    %v345 = vmul.f32 %v317, %v342
    %v346 = vmul.f32 %v321, %v342
    %v347 = vmul.f32 %v325, %v342
    %v348 = vmul.f32 %v329, %v342
    %v349 = vmul.f32 %v333, %v342
    %v350 = vmul.f32 %v337, %v342
    %v351 = vadd.f32 %v299, %v343
    %v352 = vadd.f32 %v300, %v344
    %v353 = vadd.f32 %v301, %v345
    %v354 = vadd.f32 %v302, %v346
    %v355 = vadd.f32 %v303, %v347
    %v356 = vadd.f32 %v304, %v348
    %v357 = vadd.f32 %v305, %v349
    %v358 = vadd.f32 %v306, %v350
    %359 = vset.pattern.permute.xlu0 3
    %360 = vperm.xlu0 %359, %v82
    %v361 = vpop.permute.xlu0 %360
    %363 = vset.pattern.permute.xlu0 3
    %364 = vperm.xlu0 %363, %v83
    %v365 = vpop.permute.xlu0 %364
    %367 = vset.pattern.permute.xlu0 3
    %368 = vperm.xlu0 %367, %v84
    %v369 = vpop.permute.xlu0 %368
    %371 = vset.pattern.permute.xlu0 3
    %372 = vperm.xlu0 %371, %v85
    %v373 = vpop.permute.xlu0 %372
    %375 = vset.pattern.permute.xlu0 3
    %376 = vperm.xlu0 %375, %v86
    %v377 = vpop.permute.xlu0 %376
    %379 = vset.pattern.permute.xlu0 3
    %380 = vperm.xlu0 %379, %v87
    %v381 = vpop.permute.xlu0 %380
    %383 = vset.pattern.permute.xlu0 3
    %384 = vperm.xlu0 %383, %v88
    %v385 = vpop.permute.xlu0 %384
    %387 = vset.pattern.permute.xlu0 3
    %388 = vperm.xlu0 %387, %v89
    %v389 = vpop.permute.xlu0 %388
    %v391 = vlaneseq
    %v392 = vshrl.u32 %v391, 7
    %v393 = vsub.s32 3, %v392
    %v394 = vrot.slane %v202, %v393
    %v395 = vmul.f32 %v361, %v394
    %v396 = vmul.f32 %v365, %v394
    %v397 = vmul.f32 %v369, %v394
    %v398 = vmul.f32 %v373, %v394
    %v399 = vmul.f32 %v377, %v394
    %v400 = vmul.f32 %v381, %v394
    %v401 = vmul.f32 %v385, %v394
    %v402 = vmul.f32 %v389, %v394
    %v403 = vadd.f32 %v351, %v395
    %v404 = vadd.f32 %v352, %v396
    %v405 = vadd.f32 %v353, %v397
    %v406 = vadd.f32 %v354, %v398
    %v407 = vadd.f32 %v355, %v399
    %v408 = vadd.f32 %v356, %v400
    %v409 = vadd.f32 %v357, %v401
    %v410 = vadd.f32 %v358, %v402
    %v411 = vadd.f32 %v403, %v145
    %v412 = vadd.f32 %v404, %v145
    %v413 = vadd.f32 %v405, %v145
    %v414 = vadd.f32 %v406, %v145
    %v415 = vadd.f32 %v407, %v145
    %v416 = vadd.f32 %v408, %v145
    %v417 = vadd.f32 %v409, %v145
    %v418 = vadd.f32 %v410, %v145
    %v420 = vcombine.high %v197, %v197
    %v422 = vunpack.c.l.s4 1966171168
    %v423 = vunpack.c.0.s8 %v422
    %v424 = vlaneseq
    %v425 = vshrl.u32 %v424, 7
    %v426 = vsub.s32 %v423, %v425
    %v427 = vrot.slane %v197, %v426
    %v429 = vunpack.c.l.s4 1966171168
    %v430 = vunpack.c.0.s8 %v429
    %v431 = vlaneseq
    %v432 = vshrl.u32 %v431, 7
    %v433 = vsub.s32 %v430, %v432
    %v434 = vrot.slane %v420, %v433
    %v435 = vcombine.high %v427, %v427
    %v436 = vcombine.high %v434, %v434
    %v438 = vunpack.c.l.s4 1966171168
    %v439 = vunpack.c.0.s8 %v438
    %v440 = vlaneseq
    %v441 = vshrl.u32 %v440, 7
    %v442 = vsub.s32 %v439, %v441
    %v443 = vrot.slane %v427, %v442
    %v445 = vunpack.c.l.s4 1966171168
    %v446 = vunpack.c.0.s8 %v445
    %v447 = vlaneseq
    %v448 = vshrl.u32 %v447, 7
    %v449 = vsub.s32 %v446, %v448
    %v450 = vrot.slane %v434, %v449
    %v452 = vunpack.c.l.s4 1966171168
    %v453 = vunpack.c.0.s8 %v452
    %v454 = vlaneseq
    %v455 = vshrl.u32 %v454, 7
    %v456 = vsub.s32 %v453, %v455
    %v457 = vrot.slane %v435, %v456
    %v459 = vunpack.c.l.s4 1966171168
    %v460 = vunpack.c.0.s8 %v459
    %v461 = vlaneseq
    %v462 = vshrl.u32 %v461, 7
    %v463 = vsub.s32 %v460, %v462
    %v464 = vrot.slane %v436, %v463
    %v465 = vcombine.high %v443, %v443
    %v466 = vcombine.high %v450, %v450
    %v467 = vcombine.high %v457, %v457
    %v468 = vcombine.high %v464, %v464
    %v469 = vlaneseq
    %v470 = vshrl.u32 %v469, 7
    %v471 = vsub.s32 0, %v470
    %v472 = vrot.slane %v443, %v471
    %v473 = vlaneseq
    %v474 = vshrl.u32 %v473, 7
    %v475 = vsub.s32 0, %v474
    %v476 = vrot.slane %v457, %v475
    %v477 = vlaneseq
    %v478 = vshrl.u32 %v477, 7
    %v479 = vsub.s32 0, %v478
    %v480 = vrot.slane %v465, %v479
    %v481 = vlaneseq
    %v482 = vshrl.u32 %v481, 7
    %v483 = vsub.s32 0, %v482
    %v484 = vrot.slane %v467, %v483
    %v485 = vlaneseq
    %v486 = vshrl.u32 %v485, 7
    %v487 = vsub.s32 0, %v486
    %v488 = vrot.slane %v450, %v487
    %v489 = vlaneseq
    %v490 = vshrl.u32 %v489, 7
    %v491 = vsub.s32 0, %v490
    %v492 = vrot.slane %v464, %v491
    %v493 = vlaneseq
    %v494 = vshrl.u32 %v493, 7
    %v495 = vsub.s32 0, %v494
    %v496 = vrot.slane %v466, %v495
    %v497 = vlaneseq
    %v498 = vshrl.u32 %v497, 7
    %v499 = vsub.s32 0, %v498
    %v500 = vrot.slane %v468, %v499
    %v509 = vadd.f32 %v411, %v472
    %v510 = vadd.f32 %v412, %v476
    %v511 = vadd.f32 %v413, %v480
    %v512 = vadd.f32 %v414, %v484
    %v513 = vadd.f32 %v415, %v488
    %v514 = vadd.f32 %v416, %v492
    %v515 = vadd.f32 %v417, %v496
    %v516 = vadd.f32 %v418, %v500
    %vm517 = vcmp.ge.f32.partialorder %v509, 0.0
    %vm518 = vcmp.ge.f32.partialorder %v510, 0.0
    %vm519 = vcmp.ge.f32.partialorder %v511, 0.0
    %vm520 = vcmp.ge.f32.partialorder %v512, 0.0
    %vm521 = vcmp.ge.f32.partialorder %v513, 0.0
    %vm522 = vcmp.ge.f32.partialorder %v514, 0.0
    %vm523 = vcmp.ge.f32.partialorder %v515, 0.0
    %vm524 = vcmp.ge.f32.partialorder %v516, 0.0
    %v525 = vmul.f32 %v509, 0.2
    %v526 = vmul.f32 %v510, 0.2
    %v527 = vmul.f32 %v511, 0.2
    %v528 = vmul.f32 %v512, 0.2
    %v529 = vmul.f32 %v513, 0.2
    %v530 = vmul.f32 %v514, 0.2
    %v531 = vmul.f32 %v515, 0.2
    %v532 = vmul.f32 %v516, 0.2
    %v533 = vsel %vm517, %v509, %v525
    %v534 = vsel %vm518, %v510, %v526
    %v535 = vsel %vm519, %v511, %v527
    %v536 = vsel %vm520, %v512, %v528
    %v537 = vsel %vm521, %v513, %v529
    %v538 = vsel %vm522, %v514, %v530
    %v539 = vsel %vm523, %v515, %v531
    %v540 = vsel %vm524, %v516, %v532
    %v541 = vlaneseq
    %v542 = vshrl.u32 %v541, 7
    %v543 = vsub.s32 0, %v542
    %v544 = vrot.slane %v91, %v543
    %v545 = vmul.f32 %v533, %v544
    %v546 = vmul.f32 %v534, %v544
    %v547 = vmul.f32 %v535, %v544
    %v548 = vmul.f32 %v536, %v544
    %v549 = vmul.f32 %v537, %v544
    %v550 = vmul.f32 %v538, %v544
    %v551 = vmul.f32 %v539, %v544
    %v552 = vmul.f32 %v540, %v544
    %vm553 = vcmask 64512
    %v554 = vsel %vm553, %v545, 0.0
    %555 = vadd.xlane.f32.xlu0 %v554
    %v556 = vpop.xlane.xlu0 %555
    %v557 = vsel %vm553, %v546, 0.0
    %558 = vadd.xlane.f32.xlu0 %v557
    %v559 = vpop.xlane.xlu0 %558
    %v560 = vsel %vm553, %v547, 0.0
    %561 = vadd.xlane.f32.xlu0 %v560
    %v562 = vpop.xlane.xlu0 %561
    %v563 = vsel %vm553, %v548, 0.0
    %564 = vadd.xlane.f32.xlu0 %v563
    %v565 = vpop.xlane.xlu0 %564
    %v566 = vsel %vm553, %v549, 0.0
    %567 = vadd.xlane.f32.xlu0 %v566
    %v568 = vpop.xlane.xlu0 %567
    %v569 = vsel %vm553, %v550, 0.0
    %570 = vadd.xlane.f32.xlu0 %v569
    %v571 = vpop.xlane.xlu0 %570
    %v572 = vsel %vm553, %v551, 0.0
    %573 = vadd.xlane.f32.xlu0 %v572
    %v574 = vpop.xlane.xlu0 %573
    %v575 = vsel %vm553, %v552, 0.0
    %576 = vadd.xlane.f32.xlu0 %v575
    %v577 = vpop.xlane.xlu0 %576
    %v579 = vlaneseq
    %v580 = vshrl.u32 %v579, 7
    %v581 = vsub.s32 0, %v580
    %v582 = vrot.slane %v81, %v581
    %584 = vbcast.lane.b32.xlu0 %v582, 256
    %v585 = vpop.permute.xlu0 %584
    %v586 = vlaneseq
    %v587 = vshrl.u32 %v586, 7
    %v588 = vsub.s32 1, %v587
    %v589 = vrot.slane %v81, %v588
    %591 = vbcast.lane.b32.xlu0 %v589, 256
    %v592 = vpop.permute.xlu0 %591
    %v593 = vlaneseq
    %v594 = vshrl.u32 %v593, 7
    %v595 = vsub.s32 2, %v594
    %v596 = vrot.slane %v81, %v595
    %598 = vbcast.lane.b32.xlu0 %v596, 256
    %v599 = vpop.permute.xlu0 %598
    %v600 = vlaneseq
    %v601 = vshrl.u32 %v600, 7
    %v602 = vsub.s32 3, %v601
    %v603 = vrot.slane %v81, %v602
    %605 = vbcast.lane.b32.xlu0 %v603, 256
    %v606 = vpop.permute.xlu0 %605
    %v607 = vlaneseq
    %v608 = vshrl.u32 %v607, 7
    %v609 = vsub.s32 4, %v608
    %v610 = vrot.slane %v81, %v609
    %612 = vbcast.lane.b32.xlu0 %v610, 256
    %v613 = vpop.permute.xlu0 %612
    %v614 = vlaneseq
    %v615 = vshrl.u32 %v614, 7
    %v616 = vsub.s32 5, %v615
    %v617 = vrot.slane %v81, %v616
    %619 = vbcast.lane.b32.xlu0 %v617, 256
    %v620 = vpop.permute.xlu0 %619
    %v621 = vlaneseq
    %v622 = vshrl.u32 %v621, 7
    %v623 = vsub.s32 6, %v622
    %v624 = vrot.slane %v81, %v623
    %626 = vbcast.lane.b32.xlu0 %v624, 256
    %v627 = vpop.permute.xlu0 %626
    %v628 = vlaneseq
    %v629 = vshrl.u32 %v628, 7
    %v630 = vsub.s32 7, %v629
    %v631 = vrot.slane %v81, %v630
    %633 = vbcast.lane.b32.xlu0 %v631, 256
    %v634 = vpop.permute.xlu0 %633
    %v643 = vadd.f32 %v556, %v585
    %v644 = vadd.f32 %v559, %v592
    %v645 = vadd.f32 %v562, %v599
    %v646 = vadd.f32 %v565, %v606
    %v647 = vadd.f32 %v568, %v613
    %v648 = vadd.f32 %v571, %v620
    %v649 = vadd.f32 %v574, %v627
    %v650 = vadd.f32 %v577, %v634
    %659 = vset.pattern.permute.xlu0 0
    %660 = vperm.xlu0 %659, %v643
    %v661 = vpop.permute.xlu0 %660
    %662 = vset.pattern.permute.xlu0 0
    %663 = vperm.xlu0 %662, %v644
    %v664 = vpop.permute.xlu0 %663
    %665 = vset.pattern.permute.xlu0 0
    %666 = vperm.xlu0 %665, %v645
    %v667 = vpop.permute.xlu0 %666
    %668 = vset.pattern.permute.xlu0 0
    %669 = vperm.xlu0 %668, %v646
    %v670 = vpop.permute.xlu0 %669
    %671 = vset.pattern.permute.xlu0 0
    %672 = vperm.xlu0 %671, %v647
    %v673 = vpop.permute.xlu0 %672
    %674 = vset.pattern.permute.xlu0 0
    %675 = vperm.xlu0 %674, %v648
    %v676 = vpop.permute.xlu0 %675
    %677 = vset.pattern.permute.xlu0 0
    %678 = vperm.xlu0 %677, %v649
    %v679 = vpop.permute.xlu0 %678
    %680 = vset.pattern.permute.xlu0 0
    %681 = vperm.xlu0 %680, %v650
    %v682 = vpop.permute.xlu0 %681
    %v683 = vlaneseq
    %v684 = vand.u32 %v683, 127
    %v685 = vlaneseq
    %v686 = vshrl.u32 %v685, 7
    %v687 = vsub.s32 %v684, %v686
    %v688 = vrot.slane %v661, %v687
    %v689 = vlaneseq
    %v690 = vshrl.u32 %v689, 7
    %v691 = vsub.s32 %v684, %v690
    %v692 = vrot.slane %v664, %v691
    %v693 = vlaneseq
    %v694 = vshrl.u32 %v693, 7
    %v695 = vsub.s32 %v684, %v694
    %v696 = vrot.slane %v667, %v695
    %v697 = vlaneseq
    %v698 = vshrl.u32 %v697, 7
    %v699 = vsub.s32 %v684, %v698
    %v700 = vrot.slane %v670, %v699
    %v701 = vlaneseq
    %v702 = vshrl.u32 %v701, 7
    %v703 = vsub.s32 %v684, %v702
    %v704 = vrot.slane %v673, %v703
    %v705 = vlaneseq
    %v706 = vshrl.u32 %v705, 7
    %v707 = vsub.s32 %v684, %v706
    %v708 = vrot.slane %v676, %v707
    %v709 = vlaneseq
    %v710 = vshrl.u32 %v709, 7
    %v711 = vsub.s32 %v684, %v710
    %v712 = vrot.slane %v679, %v711
    %v713 = vlaneseq
    %v714 = vshrl.u32 %v713, 7
    %v715 = vsub.s32 %v684, %v714
    %v716 = vrot.slane %v682, %v715
    %vm717 = vcmask 1041409
    %v718 = vsel %vm717, %v692, %v688
    %vm719 = vcmask 1042434
    %v720 = vsel %vm719, %v696, %v718
    %vm721 = vcmask 1043459
    %v722 = vsel %vm721, %v700, %v720
    %vm723 = vcmask 1044484
    %v724 = vsel %vm723, %v704, %v722
    %vm725 = vcmask 1045509
    %v726 = vsel %vm725, %v708, %v724
    %vm727 = vcmask 1046534
    %v728 = vsel %vm727, %v712, %v726
    %vm729 = vcmask 1047559
    %v730 = vsel %vm729, %v716, %v728
    %v732 = vsel %vm553, %v730, -inf
    %733 = vmax.xlane.f32.xlu0 %v732
    %v734 = vpop.xlane.xlu0 %733
    %v736 = vlaneseq
    %v737 = vshrl.u32 %v736, 7
    %v738 = vsub.s32 0, %v737
    %v739 = vrot.slane %v734, %v738
    %v740 = vlaneseq
    %v741 = vshrl.u32 %v740, 7
    %v742 = vsub.s32 1, %v741
    %v743 = vrot.slane %v734, %v742
    %v744 = vlaneseq
    %v745 = vshrl.u32 %v744, 7
    %v746 = vsub.s32 2, %v745
    %v747 = vrot.slane %v734, %v746
    %v748 = vlaneseq
    %v749 = vshrl.u32 %v748, 7
    %v750 = vsub.s32 3, %v749
    %v751 = vrot.slane %v734, %v750
    %v752 = vlaneseq
    %v753 = vshrl.u32 %v752, 7
    %v754 = vsub.s32 4, %v753
    %v755 = vrot.slane %v734, %v754
    %v756 = vlaneseq
    %v757 = vshrl.u32 %v756, 7
    %v758 = vsub.s32 5, %v757
    %v759 = vrot.slane %v734, %v758
    %v760 = vlaneseq
    %v761 = vshrl.u32 %v760, 7
    %v762 = vsub.s32 6, %v761
    %v763 = vrot.slane %v734, %v762
    %v764 = vlaneseq
    %v765 = vshrl.u32 %v764, 7
    %v766 = vsub.s32 7, %v765
    %v767 = vrot.slane %v734, %v766
    %v776 = vsub.f32 %v643, %v739
    %v777 = vsub.f32 %v644, %v743
    %v778 = vsub.f32 %v645, %v747
    %v779 = vsub.f32 %v646, %v751
    %v780 = vsub.f32 %v647, %v755
    %v781 = vsub.f32 %v648, %v759
    %v782 = vsub.f32 %v649, %v763
    %v783 = vsub.f32 %v650, %v767
    %v784 = vmul.f32 %v776, 1.442695
    %v785 = vpow.pop %v784
    %v786 = vmul.f32 %v777, 1.442695
    %v787 = vpow.pop %v786
    %v788 = vmul.f32 %v778, 1.442695
    %v789 = vpow.pop %v788
    %v790 = vmul.f32 %v779, 1.442695
    %v791 = vpow.pop %v790
    %v792 = vmul.f32 %v780, 1.442695
    %v793 = vpow.pop %v792
    %v794 = vmul.f32 %v781, 1.442695
    %v795 = vpow.pop %v794
    %v796 = vmul.f32 %v782, 1.442695
    %v797 = vpow.pop %v796
    %v798 = vmul.f32 %v783, 1.442695
    %v799 = vpow.pop %v798
    %v801 = vlaneseq
    %v802 = vshrl.u32 %v801, 7
    %v803 = vsub.s32 0, %v802
    %v804 = vrot.slane %v79, %v803
    %806 = vbcast.lane.b32.xlu0 %v804, 256
    %v807 = vpop.permute.xlu0 %806
    %v808 = vlaneseq
    %v809 = vshrl.u32 %v808, 7
    %v810 = vsub.s32 1, %v809
    %v811 = vrot.slane %v79, %v810
    %813 = vbcast.lane.b32.xlu0 %v811, 256
    %v814 = vpop.permute.xlu0 %813
    %v815 = vlaneseq
    %v816 = vshrl.u32 %v815, 7
    %v817 = vsub.s32 2, %v816
    %v818 = vrot.slane %v79, %v817
    %820 = vbcast.lane.b32.xlu0 %v818, 256
    %v821 = vpop.permute.xlu0 %820
    %v822 = vlaneseq
    %v823 = vshrl.u32 %v822, 7
    %v824 = vsub.s32 3, %v823
    %v825 = vrot.slane %v79, %v824
    %827 = vbcast.lane.b32.xlu0 %v825, 256
    %v828 = vpop.permute.xlu0 %827
    %v829 = vlaneseq
    %v830 = vshrl.u32 %v829, 7
    %v831 = vsub.s32 4, %v830
    %v832 = vrot.slane %v79, %v831
    %834 = vbcast.lane.b32.xlu0 %v832, 256
    %v835 = vpop.permute.xlu0 %834
    %v836 = vlaneseq
    %v837 = vshrl.u32 %v836, 7
    %v838 = vsub.s32 5, %v837
    %v839 = vrot.slane %v79, %v838
    %841 = vbcast.lane.b32.xlu0 %v839, 256
    %v842 = vpop.permute.xlu0 %841
    %v843 = vlaneseq
    %v844 = vshrl.u32 %v843, 7
    %v845 = vsub.s32 6, %v844
    %v846 = vrot.slane %v79, %v845
    %848 = vbcast.lane.b32.xlu0 %v846, 256
    %v849 = vpop.permute.xlu0 %848
    %v850 = vlaneseq
    %v851 = vshrl.u32 %v850, 7
    %v852 = vsub.s32 7, %v851
    %v853 = vrot.slane %v79, %v852
    %855 = vbcast.lane.b32.xlu0 %v853, 256
    %v856 = vpop.permute.xlu0 %855
    %v865 = vmul.f32 %v785, %v807
    %v866 = vmul.f32 %v787, %v814
    %v867 = vmul.f32 %v789, %v821
    %v868 = vmul.f32 %v791, %v828
    %v869 = vmul.f32 %v793, %v835
    %v870 = vmul.f32 %v795, %v842
    %v871 = vmul.f32 %v797, %v849
    %v872 = vmul.f32 %v799, %v856
    %881 = vset.pattern.permute.xlu0 0
    %882 = vperm.xlu0 %881, %v865
    %v883 = vpop.permute.xlu0 %882
    %884 = vset.pattern.permute.xlu0 0
    %885 = vperm.xlu0 %884, %v866
    %v886 = vpop.permute.xlu0 %885
    %887 = vset.pattern.permute.xlu0 0
    %888 = vperm.xlu0 %887, %v867
    %v889 = vpop.permute.xlu0 %888
    %890 = vset.pattern.permute.xlu0 0
    %891 = vperm.xlu0 %890, %v868
    %v892 = vpop.permute.xlu0 %891
    %893 = vset.pattern.permute.xlu0 0
    %894 = vperm.xlu0 %893, %v869
    %v895 = vpop.permute.xlu0 %894
    %896 = vset.pattern.permute.xlu0 0
    %897 = vperm.xlu0 %896, %v870
    %v898 = vpop.permute.xlu0 %897
    %899 = vset.pattern.permute.xlu0 0
    %900 = vperm.xlu0 %899, %v871
    %v901 = vpop.permute.xlu0 %900
    %902 = vset.pattern.permute.xlu0 0
    %903 = vperm.xlu0 %902, %v872
    %v904 = vpop.permute.xlu0 %903
    %v905 = vlaneseq
    %v906 = vshrl.u32 %v905, 7
    %v907 = vsub.s32 %v684, %v906
    %v908 = vrot.slane %v883, %v907
    %v909 = vlaneseq
    %v910 = vshrl.u32 %v909, 7
    %v911 = vsub.s32 %v684, %v910
    %v912 = vrot.slane %v886, %v911
    %v913 = vlaneseq
    %v914 = vshrl.u32 %v913, 7
    %v915 = vsub.s32 %v684, %v914
    %v916 = vrot.slane %v889, %v915
    %v917 = vlaneseq
    %v918 = vshrl.u32 %v917, 7
    %v919 = vsub.s32 %v684, %v918
    %v920 = vrot.slane %v892, %v919
    %v921 = vlaneseq
    %v922 = vshrl.u32 %v921, 7
    %v923 = vsub.s32 %v684, %v922
    %v924 = vrot.slane %v895, %v923
    %v925 = vlaneseq
    %v926 = vshrl.u32 %v925, 7
    %v927 = vsub.s32 %v684, %v926
    %v928 = vrot.slane %v898, %v927
    %v929 = vlaneseq
    %v930 = vshrl.u32 %v929, 7
    %v931 = vsub.s32 %v684, %v930
    %v932 = vrot.slane %v901, %v931
    %v933 = vlaneseq
    %v934 = vshrl.u32 %v933, 7
    %v935 = vsub.s32 %v684, %v934
    %v936 = vrot.slane %v904, %v935
    %v937 = vsel %vm717, %v912, %v908
    %v938 = vsel %vm719, %v916, %v937
    %v939 = vsel %vm721, %v920, %v938
    %v940 = vsel %vm723, %v924, %v939
    %v941 = vsel %vm725, %v928, %v940
    %v942 = vsel %vm727, %v932, %v941
    %v943 = vsel %vm729, %v936, %v942
    %v945 = vsel %vm553, %v943, 0.0
    %946 = vadd.xlane.f32.xlu0 %v945
    %v947 = vpop.xlane.xlu0 %946
    %v948 = vrcp.pop %v947
    %v950 = vlaneseq
    %v951 = vshrl.u32 %v950, 7
    %v952 = vsub.s32 0, %v951
    %v953 = vrot.slane %v948, %v952
    %v954 = vlaneseq
    %v955 = vshrl.u32 %v954, 7
    %v956 = vsub.s32 1, %v955
    %v957 = vrot.slane %v948, %v956
    %v958 = vlaneseq
    %v959 = vshrl.u32 %v958, 7
    %v960 = vsub.s32 2, %v959
    %v961 = vrot.slane %v948, %v960
    %v962 = vlaneseq
    %v963 = vshrl.u32 %v962, 7
    %v964 = vsub.s32 3, %v963
    %v965 = vrot.slane %v948, %v964
    %v966 = vlaneseq
    %v967 = vshrl.u32 %v966, 7
    %v968 = vsub.s32 4, %v967
    %v969 = vrot.slane %v948, %v968
    %v970 = vlaneseq
    %v971 = vshrl.u32 %v970, 7
    %v972 = vsub.s32 5, %v971
    %v973 = vrot.slane %v948, %v972
    %v974 = vlaneseq
    %v975 = vshrl.u32 %v974, 7
    %v976 = vsub.s32 6, %v975
    %v977 = vrot.slane %v948, %v976
    %v978 = vlaneseq
    %v979 = vshrl.u32 %v978, 7
    %v980 = vsub.s32 7, %v979
    %v981 = vrot.slane %v948, %v980
    %v990 = vmul.f32 %v865, %v953
    %v991 = vmul.f32 %v866, %v957
    %v992 = vmul.f32 %v867, %v961
    %v993 = vmul.f32 %v868, %v965
    %v994 = vmul.f32 %v869, %v969
    %v995 = vmul.f32 %v870, %v973
    %v996 = vmul.f32 %v871, %v977
    %v997 = vmul.f32 %v872, %v981
    %v998 = vpack.c.bf16 %v990, %v990
    %v999 = vpack.c.bf16 %v991, %v991
    %v1000 = vpack.c.bf16 %v992, %v992
    %v1001 = vpack.c.bf16 %v993, %v993
    %v1002 = vpack.c.bf16 %v994, %v994
    %v1003 = vpack.c.bf16 %v995, %v995
    %v1004 = vpack.c.bf16 %v996, %v996
    %v1005 = vpack.c.bf16 %v997, %v997
    %v1006 = vpack.c.bf16 %v145, %v145
    %v1015 = vunpack.c.l.b16 %v998
    %v1016 = vunpack.c.l.b16 %v999
    %v1017 = vunpack.c.l.b16 %v1000
    %v1018 = vunpack.c.l.b16 %v1001
    %v1019 = vunpack.c.l.b16 %v1002
    %v1020 = vunpack.c.l.b16 %v1003
    %v1021 = vunpack.c.l.b16 %v1004
    %v1022 = vunpack.c.l.b16 %v1005
    %1023 = vset.pattern.permute.xlu0 0
    %1024 = vperm.xlu0 %1023, %v1015
    %v1025 = vpop.permute.xlu0 %1024
    %1026 = vset.pattern.permute.xlu0 0
    %1027 = vperm.xlu0 %1026, %v1016
    %v1028 = vpop.permute.xlu0 %1027
    %1029 = vset.pattern.permute.xlu0 0
    %1030 = vperm.xlu0 %1029, %v1017
    %v1031 = vpop.permute.xlu0 %1030
    %1032 = vset.pattern.permute.xlu0 0
    %1033 = vperm.xlu0 %1032, %v1018
    %v1034 = vpop.permute.xlu0 %1033
    %1035 = vset.pattern.permute.xlu0 0
    %1036 = vperm.xlu0 %1035, %v1019
    %v1037 = vpop.permute.xlu0 %1036
    %1038 = vset.pattern.permute.xlu0 0
    %1039 = vperm.xlu0 %1038, %v1020
    %v1040 = vpop.permute.xlu0 %1039
    %1041 = vset.pattern.permute.xlu0 0
    %1042 = vperm.xlu0 %1041, %v1021
    %v1043 = vpop.permute.xlu0 %1042
    %1044 = vset.pattern.permute.xlu0 0
    %1045 = vperm.xlu0 %1044, %v1022
    %v1046 = vpop.permute.xlu0 %1045
    %v1047 = vlaneseq
    %v1048 = vshrl.u32 %v1047, 7
    %v1049 = vsub.s32 %v684, %v1048
    %v1050 = vrot.slane %v1025, %v1049
    %v1051 = vlaneseq
    %v1052 = vshrl.u32 %v1051, 7
    %v1053 = vsub.s32 %v684, %v1052
    %v1054 = vrot.slane %v1028, %v1053
    %v1055 = vlaneseq
    %v1056 = vshrl.u32 %v1055, 7
    %v1057 = vsub.s32 %v684, %v1056
    %v1058 = vrot.slane %v1031, %v1057
    %v1059 = vlaneseq
    %v1060 = vshrl.u32 %v1059, 7
    %v1061 = vsub.s32 %v684, %v1060
    %v1062 = vrot.slane %v1034, %v1061
    %v1063 = vlaneseq
    %v1064 = vshrl.u32 %v1063, 7
    %v1065 = vsub.s32 %v684, %v1064
    %v1066 = vrot.slane %v1037, %v1065
    %v1067 = vlaneseq
    %v1068 = vshrl.u32 %v1067, 7
    %v1069 = vsub.s32 %v684, %v1068
    %v1070 = vrot.slane %v1040, %v1069
    %v1071 = vlaneseq
    %v1072 = vshrl.u32 %v1071, 7
    %v1073 = vsub.s32 %v684, %v1072
    %v1074 = vrot.slane %v1043, %v1073
    %v1075 = vlaneseq
    %v1076 = vshrl.u32 %v1075, 7
    %v1077 = vsub.s32 %v684, %v1076
    %v1078 = vrot.slane %v1046, %v1077
    %v1079 = vsel %vm717, %v1054, %v1050
    %v1080 = vsel %vm719, %v1058, %v1079
    %v1081 = vsel %vm721, %v1062, %v1080
    %v1082 = vsel %vm723, %v1066, %v1081
    %v1083 = vsel %vm725, %v1070, %v1082
    %v1084 = vsel %vm727, %v1074, %v1083
    %v1085 = vsel %vm729, %v1078, %v1084
    %v1086 = vpack.c.b16 %v1085, %v1085
    %v1088 = vsel %vm553, %v1086, 0
    %vm1090 = vcmask 1043456
    %v1092 = vsel %vm1090, %v1006, 0
    %1094 = vmatprep.subr.bf16.mxu0 0
    %1095 = vmatpush1.bf16.msra.mxu0 %v1092
    %1096 = vmatprep.subr.bf16.mxu0 0
    %1097 = vmatpush1.bf16.msra.mxu0 0
    %1098 = vmatprep.subr.bf16.mxu0 0
    %1099 = vmatpush1.bf16.msra.mxu0 0
    %1100 = vmatprep.subr.bf16.mxu0 0
    %1101 = vmatpush1.bf16.msra.mxu0 0
    %1102 = vmatprep.subr.bf16.mxu0 0
    %1103 = vmatpush1.bf16.msra.mxu0 0
    %1104 = vmatprep.subr.bf16.mxu0 0
    %1105 = vmatpush1.bf16.msra.mxu0 0
    %1106 = vmatprep.subr.bf16.mxu0 0
    %1107 = vmatpush1.bf16.msra.mxu0 0
    %1108 = vmatprep.subr.bf16.mxu0 0
    %1109 = vmatpush1.bf16.msra.mxu0 0
    %1110 = vmatprep.subr.bf16.mxu0 0
    %1111 = vmatpush1.bf16.msra.mxu0 0
    %1112 = vmatprep.subr.bf16.mxu0 0
    %1113 = vmatpush1.bf16.msra.mxu0 0
    %1114 = vmatprep.subr.bf16.mxu0 0
    %1115 = vmatpush1.bf16.msra.mxu0 0
    %1116 = vmatprep.subr.bf16.mxu0 0
    %1117 = vmatpush1.bf16.msra.mxu0 0
    %1118 = vmatprep.subr.bf16.mxu0 0
    %1119 = vmatpush1.bf16.msra.mxu0 0
    %1120 = vmatprep.subr.bf16.mxu0 0
    %1121 = vmatpush1.bf16.msra.mxu0 0
    %1122 = vmatprep.subr.bf16.mxu0 0
    %1123 = vmatpush1.bf16.msra.mxu0 0
    %1124 = vmatprep.subr.bf16.mxu0 0
    %1125 = vmatpush1.bf16.msra.mxu0 0
    %1126 = vmatprep.mubr.bf16.mxu0 0
    %1127 = vmatmul.mubr.bf16.gmra.mrb[0].mxu0 %v1088
    %v1128 = vpop.f32.mrb[0].mxu0
    %v1129 = vadd.f32 0.0, %v1128
    %v1130 = vpop.f32.mrb[0].mxu0
    %v1131 = vpop.f32.mrb[0].mxu0
    %v1132 = vpop.f32.mrb[0].mxu0
    %1133 = vdwg.mxu0
    %v1134 = vlaneseq
    %v1135 = vshrl.u32 %v1134, 7
    %v1136 = vsub.s32 1, %v1135
    %v1137 = vrot.slane %v91, %v1136
    %1139 = vrot.lane.b32.xlu0 %v1137, 8
    %v1140 = vpop.permute.xlu0 %1139
    %v1142 = vmul.f32 %v533, %v1140
    %v1143 = vmul.f32 %v534, %v1140
    %v1144 = vmul.f32 %v535, %v1140
    %v1145 = vmul.f32 %v536, %v1140
    %v1146 = vmul.f32 %v537, %v1140
    %v1147 = vmul.f32 %v538, %v1140
    %v1148 = vmul.f32 %v539, %v1140
    %v1149 = vmul.f32 %v540, %v1140
    %1158 = vrot.lane.b32.xlu0 %v1142, 120
    %v1159 = vpop.permute.xlu0 %1158
    %1160 = vrot.lane.b32.xlu0 %v1143, 120
    %v1161 = vpop.permute.xlu0 %1160
    %1162 = vrot.lane.b32.xlu0 %v1144, 120
    %v1163 = vpop.permute.xlu0 %1162
    %1164 = vrot.lane.b32.xlu0 %v1145, 120
    %v1165 = vpop.permute.xlu0 %1164
    %1166 = vrot.lane.b32.xlu0 %v1146, 120
    %v1167 = vpop.permute.xlu0 %1166
    %1168 = vrot.lane.b32.xlu0 %v1147, 120
    %v1169 = vpop.permute.xlu0 %1168
    %1170 = vrot.lane.b32.xlu0 %v1148, 120
    %v1171 = vpop.permute.xlu0 %1170
    %1172 = vrot.lane.b32.xlu0 %v1149, 120
    %v1173 = vpop.permute.xlu0 %1172
    %v1182 = vsel %vm553, %v1159, 0.0
    %1183 = vadd.xlane.f32.xlu0 %v1182
    %v1184 = vpop.xlane.xlu0 %1183
    %v1185 = vsel %vm553, %v1161, 0.0
    %1186 = vadd.xlane.f32.xlu0 %v1185
    %v1187 = vpop.xlane.xlu0 %1186
    %v1188 = vsel %vm553, %v1163, 0.0
    %1189 = vadd.xlane.f32.xlu0 %v1188
    %v1190 = vpop.xlane.xlu0 %1189
    %v1191 = vsel %vm553, %v1165, 0.0
    %1192 = vadd.xlane.f32.xlu0 %v1191
    %v1193 = vpop.xlane.xlu0 %1192
    %v1194 = vsel %vm553, %v1167, 0.0
    %1195 = vadd.xlane.f32.xlu0 %v1194
    %v1196 = vpop.xlane.xlu0 %1195
    %v1197 = vsel %vm553, %v1169, 0.0
    %1198 = vadd.xlane.f32.xlu0 %v1197
    %v1199 = vpop.xlane.xlu0 %1198
    %v1200 = vsel %vm553, %v1171, 0.0
    %1201 = vadd.xlane.f32.xlu0 %v1200
    %v1202 = vpop.xlane.xlu0 %1201
    %v1203 = vsel %vm553, %v1173, 0.0
    %1204 = vadd.xlane.f32.xlu0 %v1203
    %v1205 = vpop.xlane.xlu0 %1204
    %v1206 = vadd.f32 %v1184, %v585
    %v1207 = vadd.f32 %v1187, %v592
    %v1208 = vadd.f32 %v1190, %v599
    %v1209 = vadd.f32 %v1193, %v606
    %v1210 = vadd.f32 %v1196, %v613
    %v1211 = vadd.f32 %v1199, %v620
    %v1212 = vadd.f32 %v1202, %v627
    %v1213 = vadd.f32 %v1205, %v634
    %1222 = vset.pattern.permute.xlu0 0
    %1223 = vperm.xlu0 %1222, %v1206
    %v1224 = vpop.permute.xlu0 %1223
    %1225 = vset.pattern.permute.xlu0 0
    %1226 = vperm.xlu0 %1225, %v1207
    %v1227 = vpop.permute.xlu0 %1226
    %1228 = vset.pattern.permute.xlu0 0
    %1229 = vperm.xlu0 %1228, %v1208
    %v1230 = vpop.permute.xlu0 %1229
    %1231 = vset.pattern.permute.xlu0 0
    %1232 = vperm.xlu0 %1231, %v1209
    %v1233 = vpop.permute.xlu0 %1232
    %1234 = vset.pattern.permute.xlu0 0
    %1235 = vperm.xlu0 %1234, %v1210
    %v1236 = vpop.permute.xlu0 %1235
    %1237 = vset.pattern.permute.xlu0 0
    %1238 = vperm.xlu0 %1237, %v1211
    %v1239 = vpop.permute.xlu0 %1238
    %1240 = vset.pattern.permute.xlu0 0
    %1241 = vperm.xlu0 %1240, %v1212
    %v1242 = vpop.permute.xlu0 %1241
    %1243 = vset.pattern.permute.xlu0 0
    %1244 = vperm.xlu0 %1243, %v1213
    %v1245 = vpop.permute.xlu0 %1244
    %v1246 = vlaneseq
    %v1247 = vshrl.u32 %v1246, 7
    %v1248 = vsub.s32 %v684, %v1247
    %v1249 = vrot.slane %v1224, %v1248
    %v1250 = vlaneseq
    %v1251 = vshrl.u32 %v1250, 7
    %v1252 = vsub.s32 %v684, %v1251
    %v1253 = vrot.slane %v1227, %v1252
    %v1254 = vlaneseq
    %v1255 = vshrl.u32 %v1254, 7
    %v1256 = vsub.s32 %v684, %v1255
    %v1257 = vrot.slane %v1230, %v1256
    %v1258 = vlaneseq
    %v1259 = vshrl.u32 %v1258, 7
    %v1260 = vsub.s32 %v684, %v1259
    %v1261 = vrot.slane %v1233, %v1260
    %v1262 = vlaneseq
    %v1263 = vshrl.u32 %v1262, 7
    %v1264 = vsub.s32 %v684, %v1263
    %v1265 = vrot.slane %v1236, %v1264
    %v1266 = vlaneseq
    %v1267 = vshrl.u32 %v1266, 7
    %v1268 = vsub.s32 %v684, %v1267
    %v1269 = vrot.slane %v1239, %v1268
    %v1270 = vlaneseq
    %v1271 = vshrl.u32 %v1270, 7
    %v1272 = vsub.s32 %v684, %v1271
    %v1273 = vrot.slane %v1242, %v1272
    %v1274 = vlaneseq
    %v1275 = vshrl.u32 %v1274, 7
    %v1276 = vsub.s32 %v684, %v1275
    %v1277 = vrot.slane %v1245, %v1276
    %v1278 = vsel %vm717, %v1253, %v1249
    %v1279 = vsel %vm719, %v1257, %v1278
    %v1280 = vsel %vm721, %v1261, %v1279
    %v1281 = vsel %vm723, %v1265, %v1280
    %v1282 = vsel %vm725, %v1269, %v1281
    %v1283 = vsel %vm727, %v1273, %v1282
    %v1284 = vsel %vm729, %v1277, %v1283
    %v1286 = vsel %vm553, %v1284, -inf
    %1287 = vmax.xlane.f32.xlu0 %v1286
    %v1288 = vpop.xlane.xlu0 %1287
    %v1290 = vlaneseq
    %v1291 = vshrl.u32 %v1290, 7
    %v1292 = vsub.s32 0, %v1291
    %v1293 = vrot.slane %v1288, %v1292
    %v1294 = vlaneseq
    %v1295 = vshrl.u32 %v1294, 7
    %v1296 = vsub.s32 1, %v1295
    %v1297 = vrot.slane %v1288, %v1296
    %v1298 = vlaneseq
    %v1299 = vshrl.u32 %v1298, 7
    %v1300 = vsub.s32 2, %v1299
    %v1301 = vrot.slane %v1288, %v1300
    %v1302 = vlaneseq
    %v1303 = vshrl.u32 %v1302, 7
    %v1304 = vsub.s32 3, %v1303
    %v1305 = vrot.slane %v1288, %v1304
    %v1306 = vlaneseq
    %v1307 = vshrl.u32 %v1306, 7
    %v1308 = vsub.s32 4, %v1307
    %v1309 = vrot.slane %v1288, %v1308
    %v1310 = vlaneseq
    %v1311 = vshrl.u32 %v1310, 7
    %v1312 = vsub.s32 5, %v1311
    %v1313 = vrot.slane %v1288, %v1312
    %v1314 = vlaneseq
    %v1315 = vshrl.u32 %v1314, 7
    %v1316 = vsub.s32 6, %v1315
    %v1317 = vrot.slane %v1288, %v1316
    %v1318 = vlaneseq
    %v1319 = vshrl.u32 %v1318, 7
    %v1320 = vsub.s32 7, %v1319
    %v1321 = vrot.slane %v1288, %v1320
    %v1330 = vsub.f32 %v1206, %v1293
    %v1331 = vsub.f32 %v1207, %v1297
    %v1332 = vsub.f32 %v1208, %v1301
    %v1333 = vsub.f32 %v1209, %v1305
    %v1334 = vsub.f32 %v1210, %v1309
    %v1335 = vsub.f32 %v1211, %v1313
    %v1336 = vsub.f32 %v1212, %v1317
    %v1337 = vsub.f32 %v1213, %v1321
    %v1338 = vmul.f32 %v1330, 1.442695
    %v1339 = vpow.pop %v1338
    %v1340 = vmul.f32 %v1331, 1.442695
    %v1341 = vpow.pop %v1340
    %v1342 = vmul.f32 %v1332, 1.442695
    %v1343 = vpow.pop %v1342
    %v1344 = vmul.f32 %v1333, 1.442695
    %v1345 = vpow.pop %v1344
    %v1346 = vmul.f32 %v1334, 1.442695
    %v1347 = vpow.pop %v1346
    %v1348 = vmul.f32 %v1335, 1.442695
    %v1349 = vpow.pop %v1348
    %v1350 = vmul.f32 %v1336, 1.442695
    %v1351 = vpow.pop %v1350
    %v1352 = vmul.f32 %v1337, 1.442695
    %v1353 = vpow.pop %v1352
    %v1354 = vmul.f32 %v1339, %v807
    %v1355 = vmul.f32 %v1341, %v814
    %v1356 = vmul.f32 %v1343, %v821
    %v1357 = vmul.f32 %v1345, %v828
    %v1358 = vmul.f32 %v1347, %v835
    %v1359 = vmul.f32 %v1349, %v842
    %v1360 = vmul.f32 %v1351, %v849
    %v1361 = vmul.f32 %v1353, %v856
    %1370 = vset.pattern.permute.xlu0 0
    %1371 = vperm.xlu0 %1370, %v1354
    %v1372 = vpop.permute.xlu0 %1371
    %1373 = vset.pattern.permute.xlu0 0
    %1374 = vperm.xlu0 %1373, %v1355
    %v1375 = vpop.permute.xlu0 %1374
    %1376 = vset.pattern.permute.xlu0 0
    %1377 = vperm.xlu0 %1376, %v1356
    %v1378 = vpop.permute.xlu0 %1377
    %1379 = vset.pattern.permute.xlu0 0
    %1380 = vperm.xlu0 %1379, %v1357
    %v1381 = vpop.permute.xlu0 %1380
    %1382 = vset.pattern.permute.xlu0 0
    %1383 = vperm.xlu0 %1382, %v1358
    %v1384 = vpop.permute.xlu0 %1383
    %1385 = vset.pattern.permute.xlu0 0
    %1386 = vperm.xlu0 %1385, %v1359
    %v1387 = vpop.permute.xlu0 %1386
    %1388 = vset.pattern.permute.xlu0 0
    %1389 = vperm.xlu0 %1388, %v1360
    %v1390 = vpop.permute.xlu0 %1389
    %1391 = vset.pattern.permute.xlu0 0
    %1392 = vperm.xlu0 %1391, %v1361
    %v1393 = vpop.permute.xlu0 %1392
    %v1394 = vlaneseq
    %v1395 = vshrl.u32 %v1394, 7
    %v1396 = vsub.s32 %v684, %v1395
    %v1397 = vrot.slane %v1372, %v1396
    %v1398 = vlaneseq
    %v1399 = vshrl.u32 %v1398, 7
    %v1400 = vsub.s32 %v684, %v1399
    %v1401 = vrot.slane %v1375, %v1400
    %v1402 = vlaneseq
    %v1403 = vshrl.u32 %v1402, 7
    %v1404 = vsub.s32 %v684, %v1403
    %v1405 = vrot.slane %v1378, %v1404
    %v1406 = vlaneseq
    %v1407 = vshrl.u32 %v1406, 7
    %v1408 = vsub.s32 %v684, %v1407
    %v1409 = vrot.slane %v1381, %v1408
    %v1410 = vlaneseq
    %v1411 = vshrl.u32 %v1410, 7
    %v1412 = vsub.s32 %v684, %v1411
    %v1413 = vrot.slane %v1384, %v1412
    %v1414 = vlaneseq
    %v1415 = vshrl.u32 %v1414, 7
    %v1416 = vsub.s32 %v684, %v1415
    %v1417 = vrot.slane %v1387, %v1416
    %v1418 = vlaneseq
    %v1419 = vshrl.u32 %v1418, 7
    %v1420 = vsub.s32 %v684, %v1419
    %v1421 = vrot.slane %v1390, %v1420
    %v1422 = vlaneseq
    %v1423 = vshrl.u32 %v1422, 7
    %v1424 = vsub.s32 %v684, %v1423
    %v1425 = vrot.slane %v1393, %v1424
    %v1426 = vsel %vm717, %v1401, %v1397
    %v1427 = vsel %vm719, %v1405, %v1426
    %v1428 = vsel %vm721, %v1409, %v1427
    %v1429 = vsel %vm723, %v1413, %v1428
    %v1430 = vsel %vm725, %v1417, %v1429
    %v1431 = vsel %vm727, %v1421, %v1430
    %v1432 = vsel %vm729, %v1425, %v1431
    %v1434 = vsel %vm553, %v1432, 0.0
    %1435 = vadd.xlane.f32.xlu0 %v1434
    %v1436 = vpop.xlane.xlu0 %1435
    %v1437 = vrcp.pop %v1436
    %v1439 = vlaneseq
    %v1440 = vshrl.u32 %v1439, 7
    %v1441 = vsub.s32 0, %v1440
    %v1442 = vrot.slane %v1437, %v1441
    %v1443 = vlaneseq
    %v1444 = vshrl.u32 %v1443, 7
    %v1445 = vsub.s32 1, %v1444
    %v1446 = vrot.slane %v1437, %v1445
    %v1447 = vlaneseq
    %v1448 = vshrl.u32 %v1447, 7
    %v1449 = vsub.s32 2, %v1448
    %v1450 = vrot.slane %v1437, %v1449
    %v1451 = vlaneseq
    %v1452 = vshrl.u32 %v1451, 7
    %v1453 = vsub.s32 3, %v1452
    %v1454 = vrot.slane %v1437, %v1453
    %v1455 = vlaneseq
    %v1456 = vshrl.u32 %v1455, 7
    %v1457 = vsub.s32 4, %v1456
    %v1458 = vrot.slane %v1437, %v1457
    %v1459 = vlaneseq
    %v1460 = vshrl.u32 %v1459, 7
    %v1461 = vsub.s32 5, %v1460
    %v1462 = vrot.slane %v1437, %v1461
    %v1463 = vlaneseq
    %v1464 = vshrl.u32 %v1463, 7
    %v1465 = vsub.s32 6, %v1464
    %v1466 = vrot.slane %v1437, %v1465
    %v1467 = vlaneseq
    %v1468 = vshrl.u32 %v1467, 7
    %v1469 = vsub.s32 7, %v1468
    %v1470 = vrot.slane %v1437, %v1469
    %v1479 = vmul.f32 %v1354, %v1442
    %v1480 = vmul.f32 %v1355, %v1446
    %v1481 = vmul.f32 %v1356, %v1450
    %v1482 = vmul.f32 %v1357, %v1454
    %v1483 = vmul.f32 %v1358, %v1458
    %v1484 = vmul.f32 %v1359, %v1462
    %v1485 = vmul.f32 %v1360, %v1466
    %v1486 = vmul.f32 %v1361, %v1470
    %v1487 = vpack.c.bf16 %v1479, %v1479
    %v1488 = vpack.c.bf16 %v1480, %v1480
    %v1489 = vpack.c.bf16 %v1481, %v1481
    %v1490 = vpack.c.bf16 %v1482, %v1482
    %v1491 = vpack.c.bf16 %v1483, %v1483
    %v1492 = vpack.c.bf16 %v1484, %v1484
    %v1493 = vpack.c.bf16 %v1485, %v1485
    %v1494 = vpack.c.bf16 %v1486, %v1486
    %v1503 = vunpack.c.l.b16 %v1487
    %v1504 = vunpack.c.l.b16 %v1488
    %v1505 = vunpack.c.l.b16 %v1489
    %v1506 = vunpack.c.l.b16 %v1490
    %v1507 = vunpack.c.l.b16 %v1491
    %v1508 = vunpack.c.l.b16 %v1492
    %v1509 = vunpack.c.l.b16 %v1493
    %v1510 = vunpack.c.l.b16 %v1494
    %1511 = vset.pattern.permute.xlu0 0
    %1512 = vperm.xlu0 %1511, %v1503
    %v1513 = vpop.permute.xlu0 %1512
    %1514 = vset.pattern.permute.xlu0 0
    %1515 = vperm.xlu0 %1514, %v1504
    %v1516 = vpop.permute.xlu0 %1515
    %1517 = vset.pattern.permute.xlu0 0
    %1518 = vperm.xlu0 %1517, %v1505
    %v1519 = vpop.permute.xlu0 %1518
    %1520 = vset.pattern.permute.xlu0 0
    %1521 = vperm.xlu0 %1520, %v1506
    %v1522 = vpop.permute.xlu0 %1521
    %1523 = vset.pattern.permute.xlu0 0
    %1524 = vperm.xlu0 %1523, %v1507
    %v1525 = vpop.permute.xlu0 %1524
    %1526 = vset.pattern.permute.xlu0 0
    %1527 = vperm.xlu0 %1526, %v1508
    %v1528 = vpop.permute.xlu0 %1527
    %1529 = vset.pattern.permute.xlu0 0
    %1530 = vperm.xlu0 %1529, %v1509
    %v1531 = vpop.permute.xlu0 %1530
    %1532 = vset.pattern.permute.xlu0 0
    %1533 = vperm.xlu0 %1532, %v1510
    %v1534 = vpop.permute.xlu0 %1533
    %v1535 = vlaneseq
    %v1536 = vshrl.u32 %v1535, 7
    %v1537 = vsub.s32 %v684, %v1536
    %v1538 = vrot.slane %v1513, %v1537
    %v1539 = vlaneseq
    %v1540 = vshrl.u32 %v1539, 7
    %v1541 = vsub.s32 %v684, %v1540
    %v1542 = vrot.slane %v1516, %v1541
    %v1543 = vlaneseq
    %v1544 = vshrl.u32 %v1543, 7
    %v1545 = vsub.s32 %v684, %v1544
    %v1546 = vrot.slane %v1519, %v1545
    %v1547 = vlaneseq
    %v1548 = vshrl.u32 %v1547, 7
    %v1549 = vsub.s32 %v684, %v1548
    %v1550 = vrot.slane %v1522, %v1549
    %v1551 = vlaneseq
    %v1552 = vshrl.u32 %v1551, 7
    %v1553 = vsub.s32 %v684, %v1552
    %v1554 = vrot.slane %v1525, %v1553
    %v1555 = vlaneseq
    %v1556 = vshrl.u32 %v1555, 7
    %v1557 = vsub.s32 %v684, %v1556
    %v1558 = vrot.slane %v1528, %v1557
    %v1559 = vlaneseq
    %v1560 = vshrl.u32 %v1559, 7
    %v1561 = vsub.s32 %v684, %v1560
    %v1562 = vrot.slane %v1531, %v1561
    %v1563 = vlaneseq
    %v1564 = vshrl.u32 %v1563, 7
    %v1565 = vsub.s32 %v684, %v1564
    %v1566 = vrot.slane %v1534, %v1565
    %v1567 = vsel %vm717, %v1542, %v1538
    %v1568 = vsel %vm719, %v1546, %v1567
    %v1569 = vsel %vm721, %v1550, %v1568
    %v1570 = vsel %vm723, %v1554, %v1569
    %v1571 = vsel %vm725, %v1558, %v1570
    %v1572 = vsel %vm727, %v1562, %v1571
    %v1573 = vsel %vm729, %v1566, %v1572
    %v1574 = vpack.c.b16 %v1573, %v1573
    %1576 = vrot.lane.b32.xlu0 %v1006, 120
    %v1577 = vpop.permute.xlu0 %1576
    %v1579 = vsel %vm553, %v1574, 0
    %v1582 = vsel %vm1090, %v1577, 0
    %1584 = vmatprep.subr.bf16.mxu0 0
    %1585 = vmatpush1.bf16.msra.mxu0 %v1582
    %1586 = vmatprep.subr.bf16.mxu0 0
    %1587 = vmatpush1.bf16.msra.mxu0 0
    %1588 = vmatprep.subr.bf16.mxu0 0
    %1589 = vmatpush1.bf16.msra.mxu0 0
    %1590 = vmatprep.subr.bf16.mxu0 0
    %1591 = vmatpush1.bf16.msra.mxu0 0
    %1592 = vmatprep.subr.bf16.mxu0 0
    %1593 = vmatpush1.bf16.msra.mxu0 0
    %1594 = vmatprep.subr.bf16.mxu0 0
    %1595 = vmatpush1.bf16.msra.mxu0 0
    %1596 = vmatprep.subr.bf16.mxu0 0
    %1597 = vmatpush1.bf16.msra.mxu0 0
    %1598 = vmatprep.subr.bf16.mxu0 0
    %1599 = vmatpush1.bf16.msra.mxu0 0
    %1600 = vmatprep.subr.bf16.mxu0 0
    %1601 = vmatpush1.bf16.msra.mxu0 0
    %1602 = vmatprep.subr.bf16.mxu0 0
    %1603 = vmatpush1.bf16.msra.mxu0 0
    %1604 = vmatprep.subr.bf16.mxu0 0
    %1605 = vmatpush1.bf16.msra.mxu0 0
    %1606 = vmatprep.subr.bf16.mxu0 0
    %1607 = vmatpush1.bf16.msra.mxu0 0
    %1608 = vmatprep.subr.bf16.mxu0 0
    %1609 = vmatpush1.bf16.msra.mxu0 0
    %1610 = vmatprep.subr.bf16.mxu0 0
    %1611 = vmatpush1.bf16.msra.mxu0 0
    %1612 = vmatprep.subr.bf16.mxu0 0
    %1613 = vmatpush1.bf16.msra.mxu0 0
    %1614 = vmatprep.subr.bf16.mxu0 0
    %1615 = vmatpush1.bf16.msra.mxu0 0
    %1616 = vmatprep.mubr.bf16.mxu0 0
    %1617 = vmatmul.mubr.bf16.gmra.mrb[0].mxu0 %v1579
    %v1618 = vpop.f32.mrb[0].mxu0
    %v1619 = vadd.f32 0.0, %v1618
    %v1620 = vpop.f32.mrb[0].mxu0
    %v1621 = vpop.f32.mrb[0].mxu0
    %v1622 = vpop.f32.mrb[0].mxu0
    %1623 = vdwg.mxu0
    %1625 = vrot.lane.b32.xlu0 %v1619, 8
    %v1626 = vpop.permute.xlu0 %1625
    %v1628 = vsel %vm553, %v1129, %v1626
    %v1629 = vld [vmem:[%s9] sm:$0x1]
    %v1631 = vlaneseq
    %v1632 = vshrl.u32 %v1631, 7
    %v1633 = vsub.s32 0, %v1632
    %v1634 = vrot.slane %v1629, %v1633
    %v1636 = vadd.f32 %v1628, %v1634
    %vm1637 = vcmp.gt.f32.partialorder %v1636, 0.0
    %v1638 = vmin.f32 %v1636, 0.0
    %v1639 = vmul.f32 %v1638, 1.442695
    %v1640 = vpow.pop %v1639
    %v1641 = vsub.f32 %v1640, 1.0
    %v1642 = vsel %vm1637, %v1636, %v1641
    %v1643 = vld [vmem:[%s15] sm:$0x3]
    %v1644 = vpack.c.bf16 %v1642, %v1642
    %v1645 = vld [vmem:[%s10] sm:$0xff]
    %v1646 = vld [vmem:[%s10 + $0x8] sm:$0xff]
    %v1647 = vpack.c.bf16 %v1646, %v1645
    %v1648 = vld [vmem:[%s11] sm:$0x1]
    %v1650 = vlaneseq
    %v1651 = vshrl.u32 %v1650, 7
    %v1652 = vsub.s32 0, %v1651
    %v1653 = vrot.slane %v1648, %v1652
    %vm1655 = vcmask 130048
    %v1657 = vsel %vm1655, %v1644, 0
    %1659 = vmatprep.subr.bf16.mxu0 0
    %1660 = vmatpush1.bf16.msra.mxu0 %v1647
    %1661 = vmatprep.subr.bf16.mxu0 0
    %1662 = vmatpush1.bf16.msra.mxu0 0
    %1663 = vmatprep.subr.bf16.mxu0 0
    %1664 = vmatpush1.bf16.msra.mxu0 0
    %1665 = vmatprep.subr.bf16.mxu0 0
    %1666 = vmatpush1.bf16.msra.mxu0 0
    %1667 = vmatprep.subr.bf16.mxu0 0
    %1668 = vmatpush1.bf16.msra.mxu0 0
    %1669 = vmatprep.subr.bf16.mxu0 0
    %1670 = vmatpush1.bf16.msra.mxu0 0
    %1671 = vmatprep.subr.bf16.mxu0 0
    %1672 = vmatpush1.bf16.msra.mxu0 0
    %1673 = vmatprep.subr.bf16.mxu0 0
    %1674 = vmatpush1.bf16.msra.mxu0 0
    %1675 = vmatprep.subr.bf16.mxu0 0
    %1676 = vmatpush1.bf16.msra.mxu0 0
    %1677 = vmatprep.subr.bf16.mxu0 0
    %1678 = vmatpush1.bf16.msra.mxu0 0
    %1679 = vmatprep.subr.bf16.mxu0 0
    %1680 = vmatpush1.bf16.msra.mxu0 0
    %1681 = vmatprep.subr.bf16.mxu0 0
    %1682 = vmatpush1.bf16.msra.mxu0 0
    %1683 = vmatprep.subr.bf16.mxu0 0
    %1684 = vmatpush1.bf16.msra.mxu0 0
    %1685 = vmatprep.subr.bf16.mxu0 0
    %1686 = vmatpush1.bf16.msra.mxu0 0
    %1687 = vmatprep.subr.bf16.mxu0 0
    %1688 = vmatpush1.bf16.msra.mxu0 0
    %1689 = vmatprep.subr.bf16.mxu0 0
    %1690 = vmatpush1.bf16.msra.mxu0 0
    %1691 = vmatprep.mubr.bf16.mxu0 0
    %1692 = vmatmul.mubr.bf16.gmra.mrb[0].mxu0 %v1657
    %v1693 = vpop.f32.mrb[0].mxu0
    %v1694 = vadd.f32 %v1653, %v1693
    %v1695 = vpop.f32.mrb[0].mxu0
    %v1696 = vpop.f32.mrb[0].mxu0
    %v1697 = vpop.f32.mrb[0].mxu0
    %1698 = vdwg.mxu0
    %v1699 = vld [vmem:[%s12] sm:$0xff]
    %v1700 = vld [vmem:[%s12 + $0x8] sm:$0xff]
    %v1701 = vpack.c.bf16 %v1700, %v1699
    %v1702 = vld [vmem:[%s13] sm:$0x1]
    %v1704 = vlaneseq
    %v1705 = vshrl.u32 %v1704, 7
    %v1706 = vsub.s32 0, %v1705
    %v1707 = vrot.slane %v1702, %v1706
    %1709 = vmatprep.subr.bf16.mxu0 0
    %1710 = vmatpush1.bf16.msra.mxu0 %v1701
    %1711 = vmatprep.subr.bf16.mxu0 0
    %1712 = vmatpush1.bf16.msra.mxu0 0
    %1713 = vmatprep.subr.bf16.mxu0 0
    %1714 = vmatpush1.bf16.msra.mxu0 0
    %1715 = vmatprep.subr.bf16.mxu0 0
    %1716 = vmatpush1.bf16.msra.mxu0 0
    %1717 = vmatprep.subr.bf16.mxu0 0
    %1718 = vmatpush1.bf16.msra.mxu0 0
    %1719 = vmatprep.subr.bf16.mxu0 0
    %1720 = vmatpush1.bf16.msra.mxu0 0
    %1721 = vmatprep.subr.bf16.mxu0 0
    %1722 = vmatpush1.bf16.msra.mxu0 0
    %1723 = vmatprep.subr.bf16.mxu0 0
    %1724 = vmatpush1.bf16.msra.mxu0 0
    %1725 = vmatprep.subr.bf16.mxu0 0
    %1726 = vmatpush1.bf16.msra.mxu0 0
    %1727 = vmatprep.subr.bf16.mxu0 0
    %1728 = vmatpush1.bf16.msra.mxu0 0
    %1729 = vmatprep.subr.bf16.mxu0 0
    %1730 = vmatpush1.bf16.msra.mxu0 0
    %1731 = vmatprep.subr.bf16.mxu0 0
    %1732 = vmatpush1.bf16.msra.mxu0 0
    %1733 = vmatprep.subr.bf16.mxu0 0
    %1734 = vmatpush1.bf16.msra.mxu0 0
    %1735 = vmatprep.subr.bf16.mxu0 0
    %1736 = vmatpush1.bf16.msra.mxu0 0
    %1737 = vmatprep.subr.bf16.mxu0 0
    %1738 = vmatpush1.bf16.msra.mxu0 0
    %1739 = vmatprep.subr.bf16.mxu0 0
    %1740 = vmatpush1.bf16.msra.mxu0 0
    %1741 = vmatprep.mubr.bf16.mxu0 0
    %1742 = vmatmul.mubr.bf16.gmra.mrb[0].mxu0 %v1657
    %v1743 = vpop.f32.mrb[0].mxu0
    %v1744 = vadd.f32 %v1707, %v1743
    %v1745 = vpop.f32.mrb[0].mxu0
    %v1746 = vpop.f32.mrb[0].mxu0
    %v1747 = vpop.f32.mrb[0].mxu0
    %1748 = vdwg.mxu0
    %v1749 = vld [vmem:[%s14] sm:$0xf]
    %v1750 = vlaneseq
    %v1751 = vshrl.u32 %v1750, 7
    %v1752 = vsub.s32 0, %v1751
    %v1753 = vrot.slane %v1749, %v1752
    %v1754 = vmul.f32 %v206, %v1753
    %v1755 = vmul.f32 %v211, %v1753
    %v1756 = vmul.f32 %v216, %v1753
    %v1757 = vmul.f32 %v221, %v1753
    %v1758 = vmul.f32 %v226, %v1753
    %v1759 = vmul.f32 %v231, %v1753
    %v1760 = vmul.f32 %v236, %v1753
    %v1761 = vmul.f32 %v241, %v1753
    %v1762 = vlaneseq
    %v1763 = vshrl.u32 %v1762, 7
    %v1764 = vsub.s32 1, %v1763
    %v1765 = vrot.slane %v1749, %v1764
    %v1766 = vmul.f32 %v257, %v1765
    %v1767 = vmul.f32 %v261, %v1765
    %v1768 = vmul.f32 %v265, %v1765
    %v1769 = vmul.f32 %v269, %v1765
    %v1770 = vmul.f32 %v273, %v1765
    %v1771 = vmul.f32 %v277, %v1765
    %v1772 = vmul.f32 %v281, %v1765
    %v1773 = vmul.f32 %v285, %v1765
    %v1774 = vadd.f32 %v1754, %v1766
    %v1775 = vadd.f32 %v1755, %v1767
    %v1776 = vadd.f32 %v1756, %v1768
    %v1777 = vadd.f32 %v1757, %v1769
    %v1778 = vadd.f32 %v1758, %v1770
    %v1779 = vadd.f32 %v1759, %v1771
    %v1780 = vadd.f32 %v1760, %v1772
    %v1781 = vadd.f32 %v1761, %v1773
    %v1782 = vlaneseq
    %v1783 = vshrl.u32 %v1782, 7
    %v1784 = vsub.s32 2, %v1783
    %v1785 = vrot.slane %v1749, %v1784
    %v1786 = vmul.f32 %v309, %v1785
    %v1787 = vmul.f32 %v313, %v1785
    %v1788 = vmul.f32 %v317, %v1785
    %v1789 = vmul.f32 %v321, %v1785
    %v1790 = vmul.f32 %v325, %v1785
    %v1791 = vmul.f32 %v329, %v1785
    %v1792 = vmul.f32 %v333, %v1785
    %v1793 = vmul.f32 %v337, %v1785
    %v1794 = vadd.f32 %v1774, %v1786
    %v1795 = vadd.f32 %v1775, %v1787
    %v1796 = vadd.f32 %v1776, %v1788
    %v1797 = vadd.f32 %v1777, %v1789
    %v1798 = vadd.f32 %v1778, %v1790
    %v1799 = vadd.f32 %v1779, %v1791
    %v1800 = vadd.f32 %v1780, %v1792
    %v1801 = vadd.f32 %v1781, %v1793
    %v1802 = vlaneseq
    %v1803 = vshrl.u32 %v1802, 7
    %v1804 = vsub.s32 3, %v1803
    %v1805 = vrot.slane %v1749, %v1804
    %v1806 = vmul.f32 %v361, %v1805
    %v1807 = vmul.f32 %v365, %v1805
    %v1808 = vmul.f32 %v369, %v1805
    %v1809 = vmul.f32 %v373, %v1805
    %v1810 = vmul.f32 %v377, %v1805
    %v1811 = vmul.f32 %v381, %v1805
    %v1812 = vmul.f32 %v385, %v1805
    %v1813 = vmul.f32 %v389, %v1805
    %v1814 = vadd.f32 %v1794, %v1806
    %v1815 = vadd.f32 %v1795, %v1807
    %v1816 = vadd.f32 %v1796, %v1808
    %v1817 = vadd.f32 %v1797, %v1809
    %v1818 = vadd.f32 %v1798, %v1810
    %v1819 = vadd.f32 %v1799, %v1811
    %v1820 = vadd.f32 %v1800, %v1812
    %v1821 = vadd.f32 %v1801, %v1813
    %v1822 = vadd.f32 %v1814, %v1694
    %v1823 = vadd.f32 %v1815, %v1694
    %v1824 = vadd.f32 %v1816, %v1694
    %v1825 = vadd.f32 %v1817, %v1694
    %v1826 = vadd.f32 %v1818, %v1694
    %v1827 = vadd.f32 %v1819, %v1694
    %v1828 = vadd.f32 %v1820, %v1694
    %v1829 = vadd.f32 %v1821, %v1694
    %v1831 = vcombine.high %v1744, %v1744
    %v1833 = vunpack.c.l.s4 1966171168
    %v1834 = vunpack.c.0.s8 %v1833
    %v1835 = vlaneseq
    %v1836 = vshrl.u32 %v1835, 7
    %v1837 = vsub.s32 %v1834, %v1836
    %v1838 = vrot.slane %v1744, %v1837
    %v1840 = vunpack.c.l.s4 1966171168
    %v1841 = vunpack.c.0.s8 %v1840
    %v1842 = vlaneseq
    %v1843 = vshrl.u32 %v1842, 7
    %v1844 = vsub.s32 %v1841, %v1843
    %v1845 = vrot.slane %v1831, %v1844
    %v1846 = vcombine.high %v1838, %v1838
    %v1847 = vcombine.high %v1845, %v1845
    %v1849 = vunpack.c.l.s4 1966171168
    %v1850 = vunpack.c.0.s8 %v1849
    %v1851 = vlaneseq
    %v1852 = vshrl.u32 %v1851, 7
    %v1853 = vsub.s32 %v1850, %v1852
    %v1854 = vrot.slane %v1838, %v1853
    %v1856 = vunpack.c.l.s4 1966171168
    %v1857 = vunpack.c.0.s8 %v1856
    %v1858 = vlaneseq
    %v1859 = vshrl.u32 %v1858, 7
    %v1860 = vsub.s32 %v1857, %v1859
    %v1861 = vrot.slane %v1845, %v1860
    %v1863 = vunpack.c.l.s4 1966171168
    %v1864 = vunpack.c.0.s8 %v1863
    %v1865 = vlaneseq
    %v1866 = vshrl.u32 %v1865, 7
    %v1867 = vsub.s32 %v1864, %v1866
    %v1868 = vrot.slane %v1846, %v1867
    %v1870 = vunpack.c.l.s4 1966171168
    %v1871 = vunpack.c.0.s8 %v1870
    %v1872 = vlaneseq
    %v1873 = vshrl.u32 %v1872, 7
    %v1874 = vsub.s32 %v1871, %v1873
    %v1875 = vrot.slane %v1847, %v1874
    %v1876 = vcombine.high %v1854, %v1854
    %v1877 = vcombine.high %v1861, %v1861
    %v1878 = vcombine.high %v1868, %v1868
    %v1879 = vcombine.high %v1875, %v1875
    %v1880 = vlaneseq
    %v1881 = vshrl.u32 %v1880, 7
    %v1882 = vsub.s32 0, %v1881
    %v1883 = vrot.slane %v1854, %v1882
    %v1884 = vlaneseq
    %v1885 = vshrl.u32 %v1884, 7
    %v1886 = vsub.s32 0, %v1885
    %v1887 = vrot.slane %v1868, %v1886
    %v1888 = vlaneseq
    %v1889 = vshrl.u32 %v1888, 7
    %v1890 = vsub.s32 0, %v1889
    %v1891 = vrot.slane %v1876, %v1890
    %v1892 = vlaneseq
    %v1893 = vshrl.u32 %v1892, 7
    %v1894 = vsub.s32 0, %v1893
    %v1895 = vrot.slane %v1878, %v1894
    %v1896 = vlaneseq
    %v1897 = vshrl.u32 %v1896, 7
    %v1898 = vsub.s32 0, %v1897
    %v1899 = vrot.slane %v1861, %v1898
    %v1900 = vlaneseq
    %v1901 = vshrl.u32 %v1900, 7
    %v1902 = vsub.s32 0, %v1901
    %v1903 = vrot.slane %v1875, %v1902
    %v1904 = vlaneseq
    %v1905 = vshrl.u32 %v1904, 7
    %v1906 = vsub.s32 0, %v1905
    %v1907 = vrot.slane %v1877, %v1906
    %v1908 = vlaneseq
    %v1909 = vshrl.u32 %v1908, 7
    %v1910 = vsub.s32 0, %v1909
    %v1911 = vrot.slane %v1879, %v1910
    %v1920 = vadd.f32 %v1822, %v1883
    %v1921 = vadd.f32 %v1823, %v1887
    %v1922 = vadd.f32 %v1824, %v1891
    %v1923 = vadd.f32 %v1825, %v1895
    %v1924 = vadd.f32 %v1826, %v1899
    %v1925 = vadd.f32 %v1827, %v1903
    %v1926 = vadd.f32 %v1828, %v1907
    %v1927 = vadd.f32 %v1829, %v1911
    %vm1928 = vcmp.ge.f32.partialorder %v1920, 0.0
    %vm1929 = vcmp.ge.f32.partialorder %v1921, 0.0
    %vm1930 = vcmp.ge.f32.partialorder %v1922, 0.0
    %vm1931 = vcmp.ge.f32.partialorder %v1923, 0.0
    %vm1932 = vcmp.ge.f32.partialorder %v1924, 0.0
    %vm1933 = vcmp.ge.f32.partialorder %v1925, 0.0
    %vm1934 = vcmp.ge.f32.partialorder %v1926, 0.0
    %vm1935 = vcmp.ge.f32.partialorder %v1927, 0.0
    %v1936 = vmul.f32 %v1920, 0.2
    %v1937 = vmul.f32 %v1921, 0.2
    %v1938 = vmul.f32 %v1922, 0.2
    %v1939 = vmul.f32 %v1923, 0.2
    %v1940 = vmul.f32 %v1924, 0.2
    %v1941 = vmul.f32 %v1925, 0.2
    %v1942 = vmul.f32 %v1926, 0.2
    %v1943 = vmul.f32 %v1927, 0.2
    %v1944 = vsel %vm1928, %v1920, %v1936
    %v1945 = vsel %vm1929, %v1921, %v1937
    %v1946 = vsel %vm1930, %v1922, %v1938
    %v1947 = vsel %vm1931, %v1923, %v1939
    %v1948 = vsel %vm1932, %v1924, %v1940
    %v1949 = vsel %vm1933, %v1925, %v1941
    %v1950 = vsel %vm1934, %v1926, %v1942
    %v1951 = vsel %vm1935, %v1927, %v1943
    %v1952 = vlaneseq
    %v1953 = vshrl.u32 %v1952, 7
    %v1954 = vsub.s32 0, %v1953
    %v1955 = vrot.slane %v1643, %v1954
    %v1956 = vmul.f32 %v1944, %v1955
    %v1957 = vmul.f32 %v1945, %v1955
    %v1958 = vmul.f32 %v1946, %v1955
    %v1959 = vmul.f32 %v1947, %v1955
    %v1960 = vmul.f32 %v1948, %v1955
    %v1961 = vmul.f32 %v1949, %v1955
    %v1962 = vmul.f32 %v1950, %v1955
    %v1963 = vmul.f32 %v1951, %v1955
    %v1964 = vsel %vm553, %v1956, 0.0
    %1965 = vadd.xlane.f32.xlu0 %v1964
    %v1966 = vpop.xlane.xlu0 %1965
    %v1967 = vsel %vm553, %v1957, 0.0
    %1968 = vadd.xlane.f32.xlu0 %v1967
    %v1969 = vpop.xlane.xlu0 %1968
    %v1970 = vsel %vm553, %v1958, 0.0
    %1971 = vadd.xlane.f32.xlu0 %v1970
    %v1972 = vpop.xlane.xlu0 %1971
    %v1973 = vsel %vm553, %v1959, 0.0
    %1974 = vadd.xlane.f32.xlu0 %v1973
    %v1975 = vpop.xlane.xlu0 %1974
    %v1976 = vsel %vm553, %v1960, 0.0
    %1977 = vadd.xlane.f32.xlu0 %v1976
    %v1978 = vpop.xlane.xlu0 %1977
    %v1979 = vsel %vm553, %v1961, 0.0
    %1980 = vadd.xlane.f32.xlu0 %v1979
    %v1981 = vpop.xlane.xlu0 %1980
    %v1982 = vsel %vm553, %v1962, 0.0
    %1983 = vadd.xlane.f32.xlu0 %v1982
    %v1984 = vpop.xlane.xlu0 %1983
    %v1985 = vsel %vm553, %v1963, 0.0
    %1986 = vadd.xlane.f32.xlu0 %v1985
    %v1987 = vpop.xlane.xlu0 %1986
    %v1988 = vadd.f32 %v1966, %v585
    %v1989 = vadd.f32 %v1969, %v592
    %v1990 = vadd.f32 %v1972, %v599
    %v1991 = vadd.f32 %v1975, %v606
    %v1992 = vadd.f32 %v1978, %v613
    %v1993 = vadd.f32 %v1981, %v620
    %v1994 = vadd.f32 %v1984, %v627
    %v1995 = vadd.f32 %v1987, %v634
    %2004 = vset.pattern.permute.xlu0 0
    %2005 = vperm.xlu0 %2004, %v1988
    %v2006 = vpop.permute.xlu0 %2005
    %2007 = vset.pattern.permute.xlu0 0
    %2008 = vperm.xlu0 %2007, %v1989
    %v2009 = vpop.permute.xlu0 %2008
    %2010 = vset.pattern.permute.xlu0 0
    %2011 = vperm.xlu0 %2010, %v1990
    %v2012 = vpop.permute.xlu0 %2011
    %2013 = vset.pattern.permute.xlu0 0
    %2014 = vperm.xlu0 %2013, %v1991
    %v2015 = vpop.permute.xlu0 %2014
    %2016 = vset.pattern.permute.xlu0 0
    %2017 = vperm.xlu0 %2016, %v1992
    %v2018 = vpop.permute.xlu0 %2017
    %2019 = vset.pattern.permute.xlu0 0
    %2020 = vperm.xlu0 %2019, %v1993
    %v2021 = vpop.permute.xlu0 %2020
    %2022 = vset.pattern.permute.xlu0 0
    %2023 = vperm.xlu0 %2022, %v1994
    %v2024 = vpop.permute.xlu0 %2023
    %2025 = vset.pattern.permute.xlu0 0
    %2026 = vperm.xlu0 %2025, %v1995
    %v2027 = vpop.permute.xlu0 %2026
    %v2028 = vlaneseq
    %v2029 = vshrl.u32 %v2028, 7
    %v2030 = vsub.s32 %v684, %v2029
    %v2031 = vrot.slane %v2006, %v2030
    %v2032 = vlaneseq
    %v2033 = vshrl.u32 %v2032, 7
    %v2034 = vsub.s32 %v684, %v2033
    %v2035 = vrot.slane %v2009, %v2034
    %v2036 = vlaneseq
    %v2037 = vshrl.u32 %v2036, 7
    %v2038 = vsub.s32 %v684, %v2037
    %v2039 = vrot.slane %v2012, %v2038
    %v2040 = vlaneseq
    %v2041 = vshrl.u32 %v2040, 7
    %v2042 = vsub.s32 %v684, %v2041
    %v2043 = vrot.slane %v2015, %v2042
    %v2044 = vlaneseq
    %v2045 = vshrl.u32 %v2044, 7
    %v2046 = vsub.s32 %v684, %v2045
    %v2047 = vrot.slane %v2018, %v2046
    %v2048 = vlaneseq
    %v2049 = vshrl.u32 %v2048, 7
    %v2050 = vsub.s32 %v684, %v2049
    %v2051 = vrot.slane %v2021, %v2050
    %v2052 = vlaneseq
    %v2053 = vshrl.u32 %v2052, 7
    %v2054 = vsub.s32 %v684, %v2053
    %v2055 = vrot.slane %v2024, %v2054
    %v2056 = vlaneseq
    %v2057 = vshrl.u32 %v2056, 7
    %v2058 = vsub.s32 %v684, %v2057
    %v2059 = vrot.slane %v2027, %v2058
    %v2060 = vsel %vm717, %v2035, %v2031
    %v2061 = vsel %vm719, %v2039, %v2060
    %v2062 = vsel %vm721, %v2043, %v2061
    %v2063 = vsel %vm723, %v2047, %v2062
    %v2064 = vsel %vm725, %v2051, %v2063
    %v2065 = vsel %vm727, %v2055, %v2064
    %v2066 = vsel %vm729, %v2059, %v2065
    %v2068 = vsel %vm553, %v2066, -inf
    %2069 = vmax.xlane.f32.xlu0 %v2068
    %v2070 = vpop.xlane.xlu0 %2069
    %v2072 = vlaneseq
    %v2073 = vshrl.u32 %v2072, 7
    %v2074 = vsub.s32 0, %v2073
    %v2075 = vrot.slane %v2070, %v2074
    %v2076 = vlaneseq
    %v2077 = vshrl.u32 %v2076, 7
    %v2078 = vsub.s32 1, %v2077
    %v2079 = vrot.slane %v2070, %v2078
    %v2080 = vlaneseq
    %v2081 = vshrl.u32 %v2080, 7
    %v2082 = vsub.s32 2, %v2081
    %v2083 = vrot.slane %v2070, %v2082
    %v2084 = vlaneseq
    %v2085 = vshrl.u32 %v2084, 7
    %v2086 = vsub.s32 3, %v2085
    %v2087 = vrot.slane %v2070, %v2086
    %v2088 = vlaneseq
    %v2089 = vshrl.u32 %v2088, 7
    %v2090 = vsub.s32 4, %v2089
    %v2091 = vrot.slane %v2070, %v2090
    %v2092 = vlaneseq
    %v2093 = vshrl.u32 %v2092, 7
    %v2094 = vsub.s32 5, %v2093
    %v2095 = vrot.slane %v2070, %v2094
    %v2096 = vlaneseq
    %v2097 = vshrl.u32 %v2096, 7
    %v2098 = vsub.s32 6, %v2097
    %v2099 = vrot.slane %v2070, %v2098
    %v2100 = vlaneseq
    %v2101 = vshrl.u32 %v2100, 7
    %v2102 = vsub.s32 7, %v2101
    %v2103 = vrot.slane %v2070, %v2102
    %v2112 = vsub.f32 %v1988, %v2075
    %v2113 = vsub.f32 %v1989, %v2079
    %v2114 = vsub.f32 %v1990, %v2083
    %v2115 = vsub.f32 %v1991, %v2087
    %v2116 = vsub.f32 %v1992, %v2091
    %v2117 = vsub.f32 %v1993, %v2095
    %v2118 = vsub.f32 %v1994, %v2099
    %v2119 = vsub.f32 %v1995, %v2103
    %v2120 = vmul.f32 %v2112, 1.442695
    %v2121 = vpow.pop %v2120
    %v2122 = vmul.f32 %v2113, 1.442695
    %v2123 = vpow.pop %v2122
    %v2124 = vmul.f32 %v2114, 1.442695
    %v2125 = vpow.pop %v2124
    %v2126 = vmul.f32 %v2115, 1.442695
    %v2127 = vpow.pop %v2126
    %v2128 = vmul.f32 %v2116, 1.442695
    %v2129 = vpow.pop %v2128
    %v2130 = vmul.f32 %v2117, 1.442695
    %v2131 = vpow.pop %v2130
    %v2132 = vmul.f32 %v2118, 1.442695
    %v2133 = vpow.pop %v2132
    %v2134 = vmul.f32 %v2119, 1.442695
    %v2135 = vpow.pop %v2134
    %v2136 = vmul.f32 %v2121, %v807
    %v2137 = vmul.f32 %v2123, %v814
    %v2138 = vmul.f32 %v2125, %v821
    %v2139 = vmul.f32 %v2127, %v828
    %v2140 = vmul.f32 %v2129, %v835
    %v2141 = vmul.f32 %v2131, %v842
    %v2142 = vmul.f32 %v2133, %v849
    %v2143 = vmul.f32 %v2135, %v856
    %2152 = vset.pattern.permute.xlu0 0
    %2153 = vperm.xlu0 %2152, %v2136
    %v2154 = vpop.permute.xlu0 %2153
    %2155 = vset.pattern.permute.xlu0 0
    %2156 = vperm.xlu0 %2155, %v2137
    %v2157 = vpop.permute.xlu0 %2156
    %2158 = vset.pattern.permute.xlu0 0
    %2159 = vperm.xlu0 %2158, %v2138
    %v2160 = vpop.permute.xlu0 %2159
    %2161 = vset.pattern.permute.xlu0 0
    %2162 = vperm.xlu0 %2161, %v2139
    %v2163 = vpop.permute.xlu0 %2162
    %2164 = vset.pattern.permute.xlu0 0
    %2165 = vperm.xlu0 %2164, %v2140
    %v2166 = vpop.permute.xlu0 %2165
    %2167 = vset.pattern.permute.xlu0 0
    %2168 = vperm.xlu0 %2167, %v2141
    %v2169 = vpop.permute.xlu0 %2168
    %2170 = vset.pattern.permute.xlu0 0
    %2171 = vperm.xlu0 %2170, %v2142
    %v2172 = vpop.permute.xlu0 %2171
    %2173 = vset.pattern.permute.xlu0 0
    %2174 = vperm.xlu0 %2173, %v2143
    %v2175 = vpop.permute.xlu0 %2174
    %v2176 = vlaneseq
    %v2177 = vshrl.u32 %v2176, 7
    %v2178 = vsub.s32 %v684, %v2177
    %v2179 = vrot.slane %v2154, %v2178
    %v2180 = vlaneseq
    %v2181 = vshrl.u32 %v2180, 7
    %v2182 = vsub.s32 %v684, %v2181
    %v2183 = vrot.slane %v2157, %v2182
    %v2184 = vlaneseq
    %v2185 = vshrl.u32 %v2184, 7
    %v2186 = vsub.s32 %v684, %v2185
    %v2187 = vrot.slane %v2160, %v2186
    %v2188 = vlaneseq
    %v2189 = vshrl.u32 %v2188, 7
    %v2190 = vsub.s32 %v684, %v2189
    %v2191 = vrot.slane %v2163, %v2190
    %v2192 = vlaneseq
    %v2193 = vshrl.u32 %v2192, 7
    %v2194 = vsub.s32 %v684, %v2193
    %v2195 = vrot.slane %v2166, %v2194
    %v2196 = vlaneseq
    %v2197 = vshrl.u32 %v2196, 7
    %v2198 = vsub.s32 %v684, %v2197
    %v2199 = vrot.slane %v2169, %v2198
    %v2200 = vlaneseq
    %v2201 = vshrl.u32 %v2200, 7
    %v2202 = vsub.s32 %v684, %v2201
    %v2203 = vrot.slane %v2172, %v2202
    %v2204 = vlaneseq
    %v2205 = vshrl.u32 %v2204, 7
    %v2206 = vsub.s32 %v684, %v2205
    %v2207 = vrot.slane %v2175, %v2206
    %v2208 = vsel %vm717, %v2183, %v2179
    %v2209 = vsel %vm719, %v2187, %v2208
    %v2210 = vsel %vm721, %v2191, %v2209
    %v2211 = vsel %vm723, %v2195, %v2210
    %v2212 = vsel %vm725, %v2199, %v2211
    %v2213 = vsel %vm727, %v2203, %v2212
    %v2214 = vsel %vm729, %v2207, %v2213
    %v2216 = vsel %vm553, %v2214, 0.0
    %2217 = vadd.xlane.f32.xlu0 %v2216
    %v2218 = vpop.xlane.xlu0 %2217
    %v2219 = vrcp.pop %v2218
    %v2221 = vlaneseq
    %v2222 = vshrl.u32 %v2221, 7
    %v2223 = vsub.s32 0, %v2222
    %v2224 = vrot.slane %v2219, %v2223
    %v2225 = vlaneseq
    %v2226 = vshrl.u32 %v2225, 7
    %v2227 = vsub.s32 1, %v2226
    %v2228 = vrot.slane %v2219, %v2227
    %v2229 = vlaneseq
    %v2230 = vshrl.u32 %v2229, 7
    %v2231 = vsub.s32 2, %v2230
    %v2232 = vrot.slane %v2219, %v2231
    %v2233 = vlaneseq
    %v2234 = vshrl.u32 %v2233, 7
    %v2235 = vsub.s32 3, %v2234
    %v2236 = vrot.slane %v2219, %v2235
    %v2237 = vlaneseq
    %v2238 = vshrl.u32 %v2237, 7
    %v2239 = vsub.s32 4, %v2238
    %v2240 = vrot.slane %v2219, %v2239
    %v2241 = vlaneseq
    %v2242 = vshrl.u32 %v2241, 7
    %v2243 = vsub.s32 5, %v2242
    %v2244 = vrot.slane %v2219, %v2243
    %v2245 = vlaneseq
    %v2246 = vshrl.u32 %v2245, 7
    %v2247 = vsub.s32 6, %v2246
    %v2248 = vrot.slane %v2219, %v2247
    %v2249 = vlaneseq
    %v2250 = vshrl.u32 %v2249, 7
    %v2251 = vsub.s32 7, %v2250
    %v2252 = vrot.slane %v2219, %v2251
    %v2261 = vmul.f32 %v2136, %v2224
    %v2262 = vmul.f32 %v2137, %v2228
    %v2263 = vmul.f32 %v2138, %v2232
    %v2264 = vmul.f32 %v2139, %v2236
    %v2265 = vmul.f32 %v2140, %v2240
    %v2266 = vmul.f32 %v2141, %v2244
    %v2267 = vmul.f32 %v2142, %v2248
    %v2268 = vmul.f32 %v2143, %v2252
    %v2269 = vpack.c.bf16 %v2261, %v2261
    %v2270 = vpack.c.bf16 %v2262, %v2262
    %v2271 = vpack.c.bf16 %v2263, %v2263
    %v2272 = vpack.c.bf16 %v2264, %v2264
    %v2273 = vpack.c.bf16 %v2265, %v2265
    %v2274 = vpack.c.bf16 %v2266, %v2266
    %v2275 = vpack.c.bf16 %v2267, %v2267
    %v2276 = vpack.c.bf16 %v2268, %v2268
    %v2277 = vpack.c.bf16 %v1694, %v1694
    %v2286 = vunpack.c.l.b16 %v2269
    %v2287 = vunpack.c.l.b16 %v2270
    %v2288 = vunpack.c.l.b16 %v2271
    %v2289 = vunpack.c.l.b16 %v2272
    %v2290 = vunpack.c.l.b16 %v2273
    %v2291 = vunpack.c.l.b16 %v2274
    %v2292 = vunpack.c.l.b16 %v2275
    %v2293 = vunpack.c.l.b16 %v2276
    %2294 = vset.pattern.permute.xlu0 0
    %2295 = vperm.xlu0 %2294, %v2286
    %v2296 = vpop.permute.xlu0 %2295
    %2297 = vset.pattern.permute.xlu0 0
    %2298 = vperm.xlu0 %2297, %v2287
    %v2299 = vpop.permute.xlu0 %2298
    %2300 = vset.pattern.permute.xlu0 0
    %2301 = vperm.xlu0 %2300, %v2288
    %v2302 = vpop.permute.xlu0 %2301
    %2303 = vset.pattern.permute.xlu0 0
    %2304 = vperm.xlu0 %2303, %v2289
    %v2305 = vpop.permute.xlu0 %2304
    %2306 = vset.pattern.permute.xlu0 0
    %2307 = vperm.xlu0 %2306, %v2290
    %v2308 = vpop.permute.xlu0 %2307
    %2309 = vset.pattern.permute.xlu0 0
    %2310 = vperm.xlu0 %2309, %v2291
    %v2311 = vpop.permute.xlu0 %2310
    %2312 = vset.pattern.permute.xlu0 0
    %2313 = vperm.xlu0 %2312, %v2292
    %v2314 = vpop.permute.xlu0 %2313
    %2315 = vset.pattern.permute.xlu0 0
    %2316 = vperm.xlu0 %2315, %v2293
    %v2317 = vpop.permute.xlu0 %2316
    %v2318 = vlaneseq
    %v2319 = vshrl.u32 %v2318, 7
    %v2320 = vsub.s32 %v684, %v2319
    %v2321 = vrot.slane %v2296, %v2320
    %v2322 = vlaneseq
    %v2323 = vshrl.u32 %v2322, 7
    %v2324 = vsub.s32 %v684, %v2323
    %v2325 = vrot.slane %v2299, %v2324
    %v2326 = vlaneseq
    %v2327 = vshrl.u32 %v2326, 7
    %v2328 = vsub.s32 %v684, %v2327
    %v2329 = vrot.slane %v2302, %v2328
    %v2330 = vlaneseq
    %v2331 = vshrl.u32 %v2330, 7
    %v2332 = vsub.s32 %v684, %v2331
    %v2333 = vrot.slane %v2305, %v2332
    %v2334 = vlaneseq
    %v2335 = vshrl.u32 %v2334, 7
    %v2336 = vsub.s32 %v684, %v2335
    %v2337 = vrot.slane %v2308, %v2336
    %v2338 = vlaneseq
    %v2339 = vshrl.u32 %v2338, 7
    %v2340 = vsub.s32 %v684, %v2339
    %v2341 = vrot.slane %v2311, %v2340
    %v2342 = vlaneseq
    %v2343 = vshrl.u32 %v2342, 7
    %v2344 = vsub.s32 %v684, %v2343
    %v2345 = vrot.slane %v2314, %v2344
    %v2346 = vlaneseq
    %v2347 = vshrl.u32 %v2346, 7
    %v2348 = vsub.s32 %v684, %v2347
    %v2349 = vrot.slane %v2317, %v2348
    %v2350 = vsel %vm717, %v2325, %v2321
    %v2351 = vsel %vm719, %v2329, %v2350
    %v2352 = vsel %vm721, %v2333, %v2351
    %v2353 = vsel %vm723, %v2337, %v2352
    %v2354 = vsel %vm725, %v2341, %v2353
    %v2355 = vsel %vm727, %v2345, %v2354
    %v2356 = vsel %vm729, %v2349, %v2355
    %v2357 = vpack.c.b16 %v2356, %v2356
    %v2359 = vsel %vm553, %v2357, 0
    %v2362 = vsel %vm1090, %v2277, 0
    %2364 = vmatprep.subr.bf16.mxu0 0
    %2365 = vmatpush1.bf16.msra.mxu0 %v2362
    %2366 = vmatprep.subr.bf16.mxu0 0
    %2367 = vmatpush1.bf16.msra.mxu0 0
    %2368 = vmatprep.subr.bf16.mxu0 0
    %2369 = vmatpush1.bf16.msra.mxu0 0
    %2370 = vmatprep.subr.bf16.mxu0 0
    %2371 = vmatpush1.bf16.msra.mxu0 0
    %2372 = vmatprep.subr.bf16.mxu0 0
    %2373 = vmatpush1.bf16.msra.mxu0 0
    %2374 = vmatprep.subr.bf16.mxu0 0
    %2375 = vmatpush1.bf16.msra.mxu0 0
    %2376 = vmatprep.subr.bf16.mxu0 0
    %2377 = vmatpush1.bf16.msra.mxu0 0
    %2378 = vmatprep.subr.bf16.mxu0 0
    %2379 = vmatpush1.bf16.msra.mxu0 0
    %2380 = vmatprep.subr.bf16.mxu0 0
    %2381 = vmatpush1.bf16.msra.mxu0 0
    %2382 = vmatprep.subr.bf16.mxu0 0
    %2383 = vmatpush1.bf16.msra.mxu0 0
    %2384 = vmatprep.subr.bf16.mxu0 0
    %2385 = vmatpush1.bf16.msra.mxu0 0
    %2386 = vmatprep.subr.bf16.mxu0 0
    %2387 = vmatpush1.bf16.msra.mxu0 0
    %2388 = vmatprep.subr.bf16.mxu0 0
    %2389 = vmatpush1.bf16.msra.mxu0 0
    %2390 = vmatprep.subr.bf16.mxu0 0
    %2391 = vmatpush1.bf16.msra.mxu0 0
    %2392 = vmatprep.subr.bf16.mxu0 0
    %2393 = vmatpush1.bf16.msra.mxu0 0
    %2394 = vmatprep.subr.bf16.mxu0 0
    %2395 = vmatpush1.bf16.msra.mxu0 0
    %2396 = vmatprep.mubr.bf16.mxu0 0
    %2397 = vmatmul.mubr.bf16.gmra.mrb[0].mxu0 %v2359
    %v2398 = vpop.f32.mrb[0].mxu0
    %v2399 = vadd.f32 0.0, %v2398
    %v2400 = vpop.f32.mrb[0].mxu0
    %v2401 = vpop.f32.mrb[0].mxu0
    %v2402 = vpop.f32.mrb[0].mxu0
    %2403 = vdwg.mxu0
    %v2404 = vlaneseq
    %v2405 = vshrl.u32 %v2404, 7
    %v2406 = vsub.s32 1, %v2405
    %v2407 = vrot.slane %v1643, %v2406
    %2409 = vrot.lane.b32.xlu0 %v2407, 8
    %v2410 = vpop.permute.xlu0 %2409
    %v2412 = vmul.f32 %v1944, %v2410
    %v2413 = vmul.f32 %v1945, %v2410
    %v2414 = vmul.f32 %v1946, %v2410
    %v2415 = vmul.f32 %v1947, %v2410
    %v2416 = vmul.f32 %v1948, %v2410
    %v2417 = vmul.f32 %v1949, %v2410
    %v2418 = vmul.f32 %v1950, %v2410
    %v2419 = vmul.f32 %v1951, %v2410
    %2428 = vrot.lane.b32.xlu0 %v2412, 120
    %v2429 = vpop.permute.xlu0 %2428
    %2430 = vrot.lane.b32.xlu0 %v2413, 120
    %v2431 = vpop.permute.xlu0 %2430
    %2432 = vrot.lane.b32.xlu0 %v2414, 120
    %v2433 = vpop.permute.xlu0 %2432
    %2434 = vrot.lane.b32.xlu0 %v2415, 120
    %v2435 = vpop.permute.xlu0 %2434
    %2436 = vrot.lane.b32.xlu0 %v2416, 120
    %v2437 = vpop.permute.xlu0 %2436
    %2438 = vrot.lane.b32.xlu0 %v2417, 120
    %v2439 = vpop.permute.xlu0 %2438
    %2440 = vrot.lane.b32.xlu0 %v2418, 120
    %v2441 = vpop.permute.xlu0 %2440
    %2442 = vrot.lane.b32.xlu0 %v2419, 120
    %v2443 = vpop.permute.xlu0 %2442
    %v2452 = vsel %vm553, %v2429, 0.0
    %2453 = vadd.xlane.f32.xlu0 %v2452
    %v2454 = vpop.xlane.xlu0 %2453
    %v2455 = vsel %vm553, %v2431, 0.0
    %2456 = vadd.xlane.f32.xlu0 %v2455
    %v2457 = vpop.xlane.xlu0 %2456
    %v2458 = vsel %vm553, %v2433, 0.0
    %2459 = vadd.xlane.f32.xlu0 %v2458
    %v2460 = vpop.xlane.xlu0 %2459
    %v2461 = vsel %vm553, %v2435, 0.0
    %2462 = vadd.xlane.f32.xlu0 %v2461
    %v2463 = vpop.xlane.xlu0 %2462
    %v2464 = vsel %vm553, %v2437, 0.0
    %2465 = vadd.xlane.f32.xlu0 %v2464
    %v2466 = vpop.xlane.xlu0 %2465
    %v2467 = vsel %vm553, %v2439, 0.0
    %2468 = vadd.xlane.f32.xlu0 %v2467
    %v2469 = vpop.xlane.xlu0 %2468
    %v2470 = vsel %vm553, %v2441, 0.0
    %2471 = vadd.xlane.f32.xlu0 %v2470
    %v2472 = vpop.xlane.xlu0 %2471
    %v2473 = vsel %vm553, %v2443, 0.0
    %2474 = vadd.xlane.f32.xlu0 %v2473
    %v2475 = vpop.xlane.xlu0 %2474
    %v2476 = vadd.f32 %v2454, %v585
    %v2477 = vadd.f32 %v2457, %v592
    %v2478 = vadd.f32 %v2460, %v599
    %v2479 = vadd.f32 %v2463, %v606
    %v2480 = vadd.f32 %v2466, %v613
    %v2481 = vadd.f32 %v2469, %v620
    %v2482 = vadd.f32 %v2472, %v627
    %v2483 = vadd.f32 %v2475, %v634
    %2492 = vset.pattern.permute.xlu0 0
    %2493 = vperm.xlu0 %2492, %v2476
    %v2494 = vpop.permute.xlu0 %2493
    %2495 = vset.pattern.permute.xlu0 0
    %2496 = vperm.xlu0 %2495, %v2477
    %v2497 = vpop.permute.xlu0 %2496
    %2498 = vset.pattern.permute.xlu0 0
    %2499 = vperm.xlu0 %2498, %v2478
    %v2500 = vpop.permute.xlu0 %2499
    %2501 = vset.pattern.permute.xlu0 0
    %2502 = vperm.xlu0 %2501, %v2479
    %v2503 = vpop.permute.xlu0 %2502
    %2504 = vset.pattern.permute.xlu0 0
    %2505 = vperm.xlu0 %2504, %v2480
    %v2506 = vpop.permute.xlu0 %2505
    %2507 = vset.pattern.permute.xlu0 0
    %2508 = vperm.xlu0 %2507, %v2481
    %v2509 = vpop.permute.xlu0 %2508
    %2510 = vset.pattern.permute.xlu0 0
    %2511 = vperm.xlu0 %2510, %v2482
    %v2512 = vpop.permute.xlu0 %2511
    %2513 = vset.pattern.permute.xlu0 0
    %2514 = vperm.xlu0 %2513, %v2483
    %v2515 = vpop.permute.xlu0 %2514
    %v2516 = vlaneseq
    %v2517 = vshrl.u32 %v2516, 7
    %v2518 = vsub.s32 %v684, %v2517
    %v2519 = vrot.slane %v2494, %v2518
    %v2520 = vlaneseq
    %v2521 = vshrl.u32 %v2520, 7
    %v2522 = vsub.s32 %v684, %v2521
    %v2523 = vrot.slane %v2497, %v2522
    %v2524 = vlaneseq
    %v2525 = vshrl.u32 %v2524, 7
    %v2526 = vsub.s32 %v684, %v2525
    %v2527 = vrot.slane %v2500, %v2526
    %v2528 = vlaneseq
    %v2529 = vshrl.u32 %v2528, 7
    %v2530 = vsub.s32 %v684, %v2529
    %v2531 = vrot.slane %v2503, %v2530
    %v2532 = vlaneseq
    %v2533 = vshrl.u32 %v2532, 7
    %v2534 = vsub.s32 %v684, %v2533
    %v2535 = vrot.slane %v2506, %v2534
    %v2536 = vlaneseq
    %v2537 = vshrl.u32 %v2536, 7
    %v2538 = vsub.s32 %v684, %v2537
    %v2539 = vrot.slane %v2509, %v2538
    %v2540 = vlaneseq
    %v2541 = vshrl.u32 %v2540, 7
    %v2542 = vsub.s32 %v684, %v2541
    %v2543 = vrot.slane %v2512, %v2542
    %v2544 = vlaneseq
    %v2545 = vshrl.u32 %v2544, 7
    %v2546 = vsub.s32 %v684, %v2545
    %v2547 = vrot.slane %v2515, %v2546
    %v2548 = vsel %vm717, %v2523, %v2519
    %v2549 = vsel %vm719, %v2527, %v2548
    %v2550 = vsel %vm721, %v2531, %v2549
    %v2551 = vsel %vm723, %v2535, %v2550
    %v2552 = vsel %vm725, %v2539, %v2551
    %v2553 = vsel %vm727, %v2543, %v2552
    %v2554 = vsel %vm729, %v2547, %v2553
    %v2556 = vsel %vm553, %v2554, -inf
    %2557 = vmax.xlane.f32.xlu0 %v2556
    %v2558 = vpop.xlane.xlu0 %2557
    %v2560 = vlaneseq
    %v2561 = vshrl.u32 %v2560, 7
    %v2562 = vsub.s32 0, %v2561
    %v2563 = vrot.slane %v2558, %v2562
    %v2564 = vlaneseq
    %v2565 = vshrl.u32 %v2564, 7
    %v2566 = vsub.s32 1, %v2565
    %v2567 = vrot.slane %v2558, %v2566
    %v2568 = vlaneseq
    %v2569 = vshrl.u32 %v2568, 7
    %v2570 = vsub.s32 2, %v2569
    %v2571 = vrot.slane %v2558, %v2570
    %v2572 = vlaneseq
    %v2573 = vshrl.u32 %v2572, 7
    %v2574 = vsub.s32 3, %v2573
    %v2575 = vrot.slane %v2558, %v2574
    %v2576 = vlaneseq
    %v2577 = vshrl.u32 %v2576, 7
    %v2578 = vsub.s32 4, %v2577
    %v2579 = vrot.slane %v2558, %v2578
    %v2580 = vlaneseq
    %v2581 = vshrl.u32 %v2580, 7
    %v2582 = vsub.s32 5, %v2581
    %v2583 = vrot.slane %v2558, %v2582
    %v2584 = vlaneseq
    %v2585 = vshrl.u32 %v2584, 7
    %v2586 = vsub.s32 6, %v2585
    %v2587 = vrot.slane %v2558, %v2586
    %v2588 = vlaneseq
    %v2589 = vshrl.u32 %v2588, 7
    %v2590 = vsub.s32 7, %v2589
    %v2591 = vrot.slane %v2558, %v2590
    %v2600 = vsub.f32 %v2476, %v2563
    %v2601 = vsub.f32 %v2477, %v2567
    %v2602 = vsub.f32 %v2478, %v2571
    %v2603 = vsub.f32 %v2479, %v2575
    %v2604 = vsub.f32 %v2480, %v2579
    %v2605 = vsub.f32 %v2481, %v2583
    %v2606 = vsub.f32 %v2482, %v2587
    %v2607 = vsub.f32 %v2483, %v2591
    %v2608 = vmul.f32 %v2600, 1.442695
    %v2609 = vpow.pop %v2608
    %v2610 = vmul.f32 %v2601, 1.442695
    %v2611 = vpow.pop %v2610
    %v2612 = vmul.f32 %v2602, 1.442695
    %v2613 = vpow.pop %v2612
    %v2614 = vmul.f32 %v2603, 1.442695
    %v2615 = vpow.pop %v2614
    %v2616 = vmul.f32 %v2604, 1.442695
    %v2617 = vpow.pop %v2616
    %v2618 = vmul.f32 %v2605, 1.442695
    %v2619 = vpow.pop %v2618
    %v2620 = vmul.f32 %v2606, 1.442695
    %v2621 = vpow.pop %v2620
    %v2622 = vmul.f32 %v2607, 1.442695
    %v2623 = vpow.pop %v2622
    %v2624 = vmul.f32 %v2609, %v807
    %v2625 = vmul.f32 %v2611, %v814
    %v2626 = vmul.f32 %v2613, %v821
    %v2627 = vmul.f32 %v2615, %v828
    %v2628 = vmul.f32 %v2617, %v835
    %v2629 = vmul.f32 %v2619, %v842
    %v2630 = vmul.f32 %v2621, %v849
    %v2631 = vmul.f32 %v2623, %v856
    %2640 = vset.pattern.permute.xlu0 0
    %2641 = vperm.xlu0 %2640, %v2624
    %v2642 = vpop.permute.xlu0 %2641
    %2643 = vset.pattern.permute.xlu0 0
    %2644 = vperm.xlu0 %2643, %v2625
    %v2645 = vpop.permute.xlu0 %2644
    %2646 = vset.pattern.permute.xlu0 0
    %2647 = vperm.xlu0 %2646, %v2626
    %v2648 = vpop.permute.xlu0 %2647
    %2649 = vset.pattern.permute.xlu0 0
    %2650 = vperm.xlu0 %2649, %v2627
    %v2651 = vpop.permute.xlu0 %2650
    %2652 = vset.pattern.permute.xlu0 0
    %2653 = vperm.xlu0 %2652, %v2628
    %v2654 = vpop.permute.xlu0 %2653
    %2655 = vset.pattern.permute.xlu0 0
    %2656 = vperm.xlu0 %2655, %v2629
    %v2657 = vpop.permute.xlu0 %2656
    %2658 = vset.pattern.permute.xlu0 0
    %2659 = vperm.xlu0 %2658, %v2630
    %v2660 = vpop.permute.xlu0 %2659
    %2661 = vset.pattern.permute.xlu0 0
    %2662 = vperm.xlu0 %2661, %v2631
    %v2663 = vpop.permute.xlu0 %2662
    %v2664 = vlaneseq
    %v2665 = vshrl.u32 %v2664, 7
    %v2666 = vsub.s32 %v684, %v2665
    %v2667 = vrot.slane %v2642, %v2666
    %v2668 = vlaneseq
    %v2669 = vshrl.u32 %v2668, 7
    %v2670 = vsub.s32 %v684, %v2669
    %v2671 = vrot.slane %v2645, %v2670
    %v2672 = vlaneseq
    %v2673 = vshrl.u32 %v2672, 7
    %v2674 = vsub.s32 %v684, %v2673
    %v2675 = vrot.slane %v2648, %v2674
    %v2676 = vlaneseq
    %v2677 = vshrl.u32 %v2676, 7
    %v2678 = vsub.s32 %v684, %v2677
    %v2679 = vrot.slane %v2651, %v2678
    %v2680 = vlaneseq
    %v2681 = vshrl.u32 %v2680, 7
    %v2682 = vsub.s32 %v684, %v2681
    %v2683 = vrot.slane %v2654, %v2682
    %v2684 = vlaneseq
    %v2685 = vshrl.u32 %v2684, 7
    %v2686 = vsub.s32 %v684, %v2685
    %v2687 = vrot.slane %v2657, %v2686
    %v2688 = vlaneseq
    %v2689 = vshrl.u32 %v2688, 7
    %v2690 = vsub.s32 %v684, %v2689
    %v2691 = vrot.slane %v2660, %v2690
    %v2692 = vlaneseq
    %v2693 = vshrl.u32 %v2692, 7
    %v2694 = vsub.s32 %v684, %v2693
    %v2695 = vrot.slane %v2663, %v2694
    %v2696 = vsel %vm717, %v2671, %v2667
    %v2697 = vsel %vm719, %v2675, %v2696
    %v2698 = vsel %vm721, %v2679, %v2697
    %v2699 = vsel %vm723, %v2683, %v2698
    %v2700 = vsel %vm725, %v2687, %v2699
    %v2701 = vsel %vm727, %v2691, %v2700
    %v2702 = vsel %vm729, %v2695, %v2701
    %v2704 = vsel %vm553, %v2702, 0.0
    %2705 = vadd.xlane.f32.xlu0 %v2704
    %v2706 = vpop.xlane.xlu0 %2705
    %v2707 = vrcp.pop %v2706
    %v2709 = vlaneseq
    %v2710 = vshrl.u32 %v2709, 7
    %v2711 = vsub.s32 0, %v2710
    %v2712 = vrot.slane %v2707, %v2711
    %v2713 = vlaneseq
    %v2714 = vshrl.u32 %v2713, 7
    %v2715 = vsub.s32 1, %v2714
    %v2716 = vrot.slane %v2707, %v2715
    %v2717 = vlaneseq
    %v2718 = vshrl.u32 %v2717, 7
    %v2719 = vsub.s32 2, %v2718
    %v2720 = vrot.slane %v2707, %v2719
    %v2721 = vlaneseq
    %v2722 = vshrl.u32 %v2721, 7
    %v2723 = vsub.s32 3, %v2722
    %v2724 = vrot.slane %v2707, %v2723
    %v2725 = vlaneseq
    %v2726 = vshrl.u32 %v2725, 7
    %v2727 = vsub.s32 4, %v2726
    %v2728 = vrot.slane %v2707, %v2727
    %v2729 = vlaneseq
    %v2730 = vshrl.u32 %v2729, 7
    %v2731 = vsub.s32 5, %v2730
    %v2732 = vrot.slane %v2707, %v2731
    %v2733 = vlaneseq
    %v2734 = vshrl.u32 %v2733, 7
    %v2735 = vsub.s32 6, %v2734
    %v2736 = vrot.slane %v2707, %v2735
    %v2737 = vlaneseq
    %v2738 = vshrl.u32 %v2737, 7
    %v2739 = vsub.s32 7, %v2738
    %v2740 = vrot.slane %v2707, %v2739
    %v2749 = vmul.f32 %v2624, %v2712
    %v2750 = vmul.f32 %v2625, %v2716
    %v2751 = vmul.f32 %v2626, %v2720
    %v2752 = vmul.f32 %v2627, %v2724
    %v2753 = vmul.f32 %v2628, %v2728
    %v2754 = vmul.f32 %v2629, %v2732
    %v2755 = vmul.f32 %v2630, %v2736
    %v2756 = vmul.f32 %v2631, %v2740
    %v2757 = vpack.c.bf16 %v2749, %v2749
    %v2758 = vpack.c.bf16 %v2750, %v2750
    %v2759 = vpack.c.bf16 %v2751, %v2751
    %v2760 = vpack.c.bf16 %v2752, %v2752
    %v2761 = vpack.c.bf16 %v2753, %v2753
    %v2762 = vpack.c.bf16 %v2754, %v2754
    %v2763 = vpack.c.bf16 %v2755, %v2755
    %v2764 = vpack.c.bf16 %v2756, %v2756
    %v2773 = vunpack.c.l.b16 %v2757
    %v2774 = vunpack.c.l.b16 %v2758
    %v2775 = vunpack.c.l.b16 %v2759
    %v2776 = vunpack.c.l.b16 %v2760
    %v2777 = vunpack.c.l.b16 %v2761
    %v2778 = vunpack.c.l.b16 %v2762
    %v2779 = vunpack.c.l.b16 %v2763
    %v2780 = vunpack.c.l.b16 %v2764
    %2781 = vset.pattern.permute.xlu0 0
    %2782 = vperm.xlu0 %2781, %v2773
    %v2783 = vpop.permute.xlu0 %2782
    %2784 = vset.pattern.permute.xlu0 0
    %2785 = vperm.xlu0 %2784, %v2774
    %v2786 = vpop.permute.xlu0 %2785
    %2787 = vset.pattern.permute.xlu0 0
    %2788 = vperm.xlu0 %2787, %v2775
    %v2789 = vpop.permute.xlu0 %2788
    %2790 = vset.pattern.permute.xlu0 0
    %2791 = vperm.xlu0 %2790, %v2776
    %v2792 = vpop.permute.xlu0 %2791
    %2793 = vset.pattern.permute.xlu0 0
    %2794 = vperm.xlu0 %2793, %v2777
    %v2795 = vpop.permute.xlu0 %2794
    %2796 = vset.pattern.permute.xlu0 0
    %2797 = vperm.xlu0 %2796, %v2778
    %v2798 = vpop.permute.xlu0 %2797
    %2799 = vset.pattern.permute.xlu0 0
    %2800 = vperm.xlu0 %2799, %v2779
    %v2801 = vpop.permute.xlu0 %2800
    %2802 = vset.pattern.permute.xlu0 0
    %2803 = vperm.xlu0 %2802, %v2780
    %v2804 = vpop.permute.xlu0 %2803
    %v2805 = vlaneseq
    %v2806 = vshrl.u32 %v2805, 7
    %v2807 = vsub.s32 %v684, %v2806
    %v2808 = vrot.slane %v2783, %v2807
    %v2809 = vlaneseq
    %v2810 = vshrl.u32 %v2809, 7
    %v2811 = vsub.s32 %v684, %v2810
    %v2812 = vrot.slane %v2786, %v2811
    %v2813 = vlaneseq
    %v2814 = vshrl.u32 %v2813, 7
    %v2815 = vsub.s32 %v684, %v2814
    %v2816 = vrot.slane %v2789, %v2815
    %v2817 = vlaneseq
    %v2818 = vshrl.u32 %v2817, 7
    %v2819 = vsub.s32 %v684, %v2818
    %v2820 = vrot.slane %v2792, %v2819
    %v2821 = vlaneseq
    %v2822 = vshrl.u32 %v2821, 7
    %v2823 = vsub.s32 %v684, %v2822
    %v2824 = vrot.slane %v2795, %v2823
    %v2825 = vlaneseq
    %v2826 = vshrl.u32 %v2825, 7
    %v2827 = vsub.s32 %v684, %v2826
    %v2828 = vrot.slane %v2798, %v2827
    %v2829 = vlaneseq
    %v2830 = vshrl.u32 %v2829, 7
    %v2831 = vsub.s32 %v684, %v2830
    %v2832 = vrot.slane %v2801, %v2831
    %v2833 = vlaneseq
    %v2834 = vshrl.u32 %v2833, 7
    %v2835 = vsub.s32 %v684, %v2834
    %v2836 = vrot.slane %v2804, %v2835
    %v2837 = vsel %vm717, %v2812, %v2808
    %v2838 = vsel %vm719, %v2816, %v2837
    %v2839 = vsel %vm721, %v2820, %v2838
    %v2840 = vsel %vm723, %v2824, %v2839
    %v2841 = vsel %vm725, %v2828, %v2840
    %v2842 = vsel %vm727, %v2832, %v2841
    %v2843 = vsel %vm729, %v2836, %v2842
    %v2844 = vpack.c.b16 %v2843, %v2843
    %2846 = vrot.lane.b32.xlu0 %v2277, 120
    %v2847 = vpop.permute.xlu0 %2846
    %v2849 = vsel %vm553, %v2844, 0
    %v2852 = vsel %vm1090, %v2847, 0
    %2854 = vmatprep.subr.bf16.mxu0 0
    %2855 = vmatpush1.bf16.msra.mxu0 %v2852
    %2856 = vmatprep.subr.bf16.mxu0 0
    %2857 = vmatpush1.bf16.msra.mxu0 0
    %2858 = vmatprep.subr.bf16.mxu0 0
    %2859 = vmatpush1.bf16.msra.mxu0 0
    %2860 = vmatprep.subr.bf16.mxu0 0
    %2861 = vmatpush1.bf16.msra.mxu0 0
    %2862 = vmatprep.subr.bf16.mxu0 0
    %2863 = vmatpush1.bf16.msra.mxu0 0
    %2864 = vmatprep.subr.bf16.mxu0 0
    %2865 = vmatpush1.bf16.msra.mxu0 0
    %2866 = vmatprep.subr.bf16.mxu0 0
    %2867 = vmatpush1.bf16.msra.mxu0 0
    %2868 = vmatprep.subr.bf16.mxu0 0
    %2869 = vmatpush1.bf16.msra.mxu0 0
    %2870 = vmatprep.subr.bf16.mxu0 0
    %2871 = vmatpush1.bf16.msra.mxu0 0
    %2872 = vmatprep.subr.bf16.mxu0 0
    %2873 = vmatpush1.bf16.msra.mxu0 0
    %2874 = vmatprep.subr.bf16.mxu0 0
    %2875 = vmatpush1.bf16.msra.mxu0 0
    %2876 = vmatprep.subr.bf16.mxu0 0
    %2877 = vmatpush1.bf16.msra.mxu0 0
    %2878 = vmatprep.subr.bf16.mxu0 0
    %2879 = vmatpush1.bf16.msra.mxu0 0
    %2880 = vmatprep.subr.bf16.mxu0 0
    %2881 = vmatpush1.bf16.msra.mxu0 0
    %2882 = vmatprep.subr.bf16.mxu0 0
    %2883 = vmatpush1.bf16.msra.mxu0 0
    %2884 = vmatprep.subr.bf16.mxu0 0
    %2885 = vmatpush1.bf16.msra.mxu0 0
    %2886 = vmatprep.mubr.bf16.mxu0 0
    %2887 = vmatmul.mubr.bf16.gmra.mrb[0].mxu0 %v2849
    %v2888 = vpop.f32.mrb[0].mxu0
    %v2889 = vadd.f32 0.0, %v2888
    %v2890 = vpop.f32.mrb[0].mxu0
    %v2891 = vpop.f32.mrb[0].mxu0
    %v2892 = vpop.f32.mrb[0].mxu0
    %2893 = vdwg.mxu0
    %2895 = vrot.lane.b32.xlu0 %v2889, 8
    %v2896 = vpop.permute.xlu0 %2895
    %v2898 = vsel %vm553, %v2399, %v2896
    %v2899 = vld [vmem:[%s16] sm:$0x1]
    %v2901 = vlaneseq
    %v2902 = vshrl.u32 %v2901, 7
    %v2903 = vsub.s32 0, %v2902
    %v2904 = vrot.slane %v2899, %v2903
    %v2906 = vadd.f32 %v2898, %v2904
    %vm2907 = vcmp.gt.f32.partialorder %v2906, 0.0
    %v2908 = vmin.f32 %v2906, 0.0
    %v2909 = vmul.f32 %v2908, 1.442695
    %v2910 = vpow.pop %v2909
    %v2911 = vsub.f32 %v2910, 1.0
    %v2912 = vsel %vm2907, %v2906, %v2911
    %v2913 = vld [vmem:[%s22] sm:$0x1]
    %v2914 = vpack.c.bf16 %v2912, %v2912
    %v2915 = vld [vmem:[%s17] sm:$0xff]
    %v2916 = vld [vmem:[%s17 + $0x8] sm:$0xff]
    %v2917 = vpack.c.bf16 %v2916, %v2915
    %v2918 = vld [vmem:[%s18] sm:$0x1]
    %v2920 = vlaneseq
    %v2921 = vshrl.u32 %v2920, 7
    %v2922 = vsub.s32 0, %v2921
    %v2923 = vrot.slane %v2918, %v2922
    %v2926 = vsel %vm1655, %v2914, 0
    %2928 = vmatprep.subr.bf16.mxu0 0
    %2929 = vmatpush1.bf16.msra.mxu0 %v2917
    %2930 = vmatprep.subr.bf16.mxu0 0
    %2931 = vmatpush1.bf16.msra.mxu0 0
    %2932 = vmatprep.subr.bf16.mxu0 0
    %2933 = vmatpush1.bf16.msra.mxu0 0
    %2934 = vmatprep.subr.bf16.mxu0 0
    %2935 = vmatpush1.bf16.msra.mxu0 0
    %2936 = vmatprep.subr.bf16.mxu0 0
    %2937 = vmatpush1.bf16.msra.mxu0 0
    %2938 = vmatprep.subr.bf16.mxu0 0
    %2939 = vmatpush1.bf16.msra.mxu0 0
    %2940 = vmatprep.subr.bf16.mxu0 0
    %2941 = vmatpush1.bf16.msra.mxu0 0
    %2942 = vmatprep.subr.bf16.mxu0 0
    %2943 = vmatpush1.bf16.msra.mxu0 0
    %2944 = vmatprep.subr.bf16.mxu0 0
    %2945 = vmatpush1.bf16.msra.mxu0 0
    %2946 = vmatprep.subr.bf16.mxu0 0
    %2947 = vmatpush1.bf16.msra.mxu0 0
    %2948 = vmatprep.subr.bf16.mxu0 0
    %2949 = vmatpush1.bf16.msra.mxu0 0
    %2950 = vmatprep.subr.bf16.mxu0 0
    %2951 = vmatpush1.bf16.msra.mxu0 0
    %2952 = vmatprep.subr.bf16.mxu0 0
    %2953 = vmatpush1.bf16.msra.mxu0 0
    %2954 = vmatprep.subr.bf16.mxu0 0
    %2955 = vmatpush1.bf16.msra.mxu0 0
    %2956 = vmatprep.subr.bf16.mxu0 0
    %2957 = vmatpush1.bf16.msra.mxu0 0
    %2958 = vmatprep.subr.bf16.mxu0 0
    %2959 = vmatpush1.bf16.msra.mxu0 0
    %2960 = vmatprep.mubr.bf16.mxu0 0
    %2961 = vmatmul.mubr.bf16.gmra.mrb[0].mxu0 %v2926
    %v2962 = vpop.f32.mrb[0].mxu0
    %v2963 = vadd.f32 %v2923, %v2962
    %v2964 = vpop.f32.mrb[0].mxu0
    %v2965 = vpop.f32.mrb[0].mxu0
    %v2966 = vpop.f32.mrb[0].mxu0
    %2967 = vdwg.mxu0
    %v2968 = vld [vmem:[%s19] sm:$0xff]
    %v2969 = vld [vmem:[%s19 + $0x8] sm:$0xff]
    %v2970 = vpack.c.bf16 %v2969, %v2968
    %v2971 = vld [vmem:[%s20] sm:$0x1]
    %v2973 = vlaneseq
    %v2974 = vshrl.u32 %v2973, 7
    %v2975 = vsub.s32 0, %v2974
    %v2976 = vrot.slane %v2971, %v2975
    %2978 = vmatprep.subr.bf16.mxu0 0
    %2979 = vmatpush1.bf16.msra.mxu0 %v2970
    %2980 = vmatprep.subr.bf16.mxu0 0
    %2981 = vmatpush1.bf16.msra.mxu0 0
    %2982 = vmatprep.subr.bf16.mxu0 0
    %2983 = vmatpush1.bf16.msra.mxu0 0
    %2984 = vmatprep.subr.bf16.mxu0 0
    %2985 = vmatpush1.bf16.msra.mxu0 0
    %2986 = vmatprep.subr.bf16.mxu0 0
    %2987 = vmatpush1.bf16.msra.mxu0 0
    %2988 = vmatprep.subr.bf16.mxu0 0
    %2989 = vmatpush1.bf16.msra.mxu0 0
    %2990 = vmatprep.subr.bf16.mxu0 0
    %2991 = vmatpush1.bf16.msra.mxu0 0
    %2992 = vmatprep.subr.bf16.mxu0 0
    %2993 = vmatpush1.bf16.msra.mxu0 0
    %2994 = vmatprep.subr.bf16.mxu0 0
    %2995 = vmatpush1.bf16.msra.mxu0 0
    %2996 = vmatprep.subr.bf16.mxu0 0
    %2997 = vmatpush1.bf16.msra.mxu0 0
    %2998 = vmatprep.subr.bf16.mxu0 0
    %2999 = vmatpush1.bf16.msra.mxu0 0
    %3000 = vmatprep.subr.bf16.mxu0 0
    %3001 = vmatpush1.bf16.msra.mxu0 0
    %3002 = vmatprep.subr.bf16.mxu0 0
    %3003 = vmatpush1.bf16.msra.mxu0 0
    %3004 = vmatprep.subr.bf16.mxu0 0
    %3005 = vmatpush1.bf16.msra.mxu0 0
    %3006 = vmatprep.subr.bf16.mxu0 0
    %3007 = vmatpush1.bf16.msra.mxu0 0
    %3008 = vmatprep.subr.bf16.mxu0 0
    %3009 = vmatpush1.bf16.msra.mxu0 0
    %3010 = vmatprep.mubr.bf16.mxu0 0
    %3011 = vmatmul.mubr.bf16.gmra.mrb[0].mxu0 %v2926
    %v3012 = vpop.f32.mrb[0].mxu0
    %v3013 = vadd.f32 %v2976, %v3012
    %v3014 = vpop.f32.mrb[0].mxu0
    %v3015 = vpop.f32.mrb[0].mxu0
    %v3016 = vpop.f32.mrb[0].mxu0
    %3017 = vdwg.mxu0
    %v3018 = vld [vmem:[%s21] sm:$0xf]
    %v3019 = vlaneseq
    %v3020 = vshrl.u32 %v3019, 7
    %v3021 = vsub.s32 0, %v3020
    %v3022 = vrot.slane %v3018, %v3021
    %v3023 = vmul.f32 %v206, %v3022
    %v3024 = vmul.f32 %v211, %v3022
    %v3025 = vmul.f32 %v216, %v3022
    %v3026 = vmul.f32 %v221, %v3022
    %v3027 = vmul.f32 %v226, %v3022
    %v3028 = vmul.f32 %v231, %v3022
    %v3029 = vmul.f32 %v236, %v3022
    %v3030 = vmul.f32 %v241, %v3022
    %v3031 = vlaneseq
    %v3032 = vshrl.u32 %v3031, 7
    %v3033 = vsub.s32 1, %v3032
    %v3034 = vrot.slane %v3018, %v3033
    %v3035 = vmul.f32 %v257, %v3034
    %v3036 = vmul.f32 %v261, %v3034
    %v3037 = vmul.f32 %v265, %v3034
    %v3038 = vmul.f32 %v269, %v3034
    %v3039 = vmul.f32 %v273, %v3034
    %v3040 = vmul.f32 %v277, %v3034
    %v3041 = vmul.f32 %v281, %v3034
    %v3042 = vmul.f32 %v285, %v3034
    %v3043 = vadd.f32 %v3023, %v3035
    %v3044 = vadd.f32 %v3024, %v3036
    %v3045 = vadd.f32 %v3025, %v3037
    %v3046 = vadd.f32 %v3026, %v3038
    %v3047 = vadd.f32 %v3027, %v3039
    %v3048 = vadd.f32 %v3028, %v3040
    %v3049 = vadd.f32 %v3029, %v3041
    %v3050 = vadd.f32 %v3030, %v3042
    %v3051 = vlaneseq
    %v3052 = vshrl.u32 %v3051, 7
    %v3053 = vsub.s32 2, %v3052
    %v3054 = vrot.slane %v3018, %v3053
    %v3055 = vmul.f32 %v309, %v3054
    %v3056 = vmul.f32 %v313, %v3054
    %v3057 = vmul.f32 %v317, %v3054
    %v3058 = vmul.f32 %v321, %v3054
    %v3059 = vmul.f32 %v325, %v3054
    %v3060 = vmul.f32 %v329, %v3054
    %v3061 = vmul.f32 %v333, %v3054
    %v3062 = vmul.f32 %v337, %v3054
    %v3063 = vadd.f32 %v3043, %v3055
    %v3064 = vadd.f32 %v3044, %v3056
    %v3065 = vadd.f32 %v3045, %v3057
    %v3066 = vadd.f32 %v3046, %v3058
    %v3067 = vadd.f32 %v3047, %v3059
    %v3068 = vadd.f32 %v3048, %v3060
    %v3069 = vadd.f32 %v3049, %v3061
    %v3070 = vadd.f32 %v3050, %v3062
    %v3071 = vlaneseq
    %v3072 = vshrl.u32 %v3071, 7
    %v3073 = vsub.s32 3, %v3072
    %v3074 = vrot.slane %v3018, %v3073
    %v3075 = vmul.f32 %v361, %v3074
    %v3076 = vmul.f32 %v365, %v3074
    %v3077 = vmul.f32 %v369, %v3074
    %v3078 = vmul.f32 %v373, %v3074
    %v3079 = vmul.f32 %v377, %v3074
    %v3080 = vmul.f32 %v381, %v3074
    %v3081 = vmul.f32 %v385, %v3074
    %v3082 = vmul.f32 %v389, %v3074
    %v3083 = vadd.f32 %v3063, %v3075
    %v3084 = vadd.f32 %v3064, %v3076
    %v3085 = vadd.f32 %v3065, %v3077
    %v3086 = vadd.f32 %v3066, %v3078
    %v3087 = vadd.f32 %v3067, %v3079
    %v3088 = vadd.f32 %v3068, %v3080
    %v3089 = vadd.f32 %v3069, %v3081
    %v3090 = vadd.f32 %v3070, %v3082
    %v3091 = vadd.f32 %v3083, %v2963
    %v3092 = vadd.f32 %v3084, %v2963
    %v3093 = vadd.f32 %v3085, %v2963
    %v3094 = vadd.f32 %v3086, %v2963
    %v3095 = vadd.f32 %v3087, %v2963
    %v3096 = vadd.f32 %v3088, %v2963
    %v3097 = vadd.f32 %v3089, %v2963
    %v3098 = vadd.f32 %v3090, %v2963
    %v3100 = vcombine.high %v3013, %v3013
    %v3102 = vunpack.c.l.s4 1966171168
    %v3103 = vunpack.c.0.s8 %v3102
    %v3104 = vlaneseq
    %v3105 = vshrl.u32 %v3104, 7
    %v3106 = vsub.s32 %v3103, %v3105
    %v3107 = vrot.slane %v3013, %v3106
    %v3109 = vunpack.c.l.s4 1966171168
    %v3110 = vunpack.c.0.s8 %v3109
    %v3111 = vlaneseq
    %v3112 = vshrl.u32 %v3111, 7
    %v3113 = vsub.s32 %v3110, %v3112
    %v3114 = vrot.slane %v3100, %v3113
    %v3115 = vcombine.high %v3107, %v3107
    %v3116 = vcombine.high %v3114, %v3114
    %v3118 = vunpack.c.l.s4 1966171168
    %v3119 = vunpack.c.0.s8 %v3118
    %v3120 = vlaneseq
    %v3121 = vshrl.u32 %v3120, 7
    %v3122 = vsub.s32 %v3119, %v3121
    %v3123 = vrot.slane %v3107, %v3122
    %v3125 = vunpack.c.l.s4 1966171168
    %v3126 = vunpack.c.0.s8 %v3125
    %v3127 = vlaneseq
    %v3128 = vshrl.u32 %v3127, 7
    %v3129 = vsub.s32 %v3126, %v3128
    %v3130 = vrot.slane %v3114, %v3129
    %v3132 = vunpack.c.l.s4 1966171168
    %v3133 = vunpack.c.0.s8 %v3132
    %v3134 = vlaneseq
    %v3135 = vshrl.u32 %v3134, 7
    %v3136 = vsub.s32 %v3133, %v3135
    %v3137 = vrot.slane %v3115, %v3136
    %v3139 = vunpack.c.l.s4 1966171168
    %v3140 = vunpack.c.0.s8 %v3139
    %v3141 = vlaneseq
    %v3142 = vshrl.u32 %v3141, 7
    %v3143 = vsub.s32 %v3140, %v3142
    %v3144 = vrot.slane %v3116, %v3143
    %v3145 = vcombine.high %v3123, %v3123
    %v3146 = vcombine.high %v3130, %v3130
    %v3147 = vcombine.high %v3137, %v3137
    %v3148 = vcombine.high %v3144, %v3144
    %v3149 = vlaneseq
    %v3150 = vshrl.u32 %v3149, 7
    %v3151 = vsub.s32 0, %v3150
    %v3152 = vrot.slane %v3123, %v3151
    %v3153 = vlaneseq
    %v3154 = vshrl.u32 %v3153, 7
    %v3155 = vsub.s32 0, %v3154
    %v3156 = vrot.slane %v3137, %v3155
    %v3157 = vlaneseq
    %v3158 = vshrl.u32 %v3157, 7
    %v3159 = vsub.s32 0, %v3158
    %v3160 = vrot.slane %v3145, %v3159
    %v3161 = vlaneseq
    %v3162 = vshrl.u32 %v3161, 7
    %v3163 = vsub.s32 0, %v3162
    %v3164 = vrot.slane %v3147, %v3163
    %v3165 = vlaneseq
    %v3166 = vshrl.u32 %v3165, 7
    %v3167 = vsub.s32 0, %v3166
    %v3168 = vrot.slane %v3130, %v3167
    %v3169 = vlaneseq
    %v3170 = vshrl.u32 %v3169, 7
    %v3171 = vsub.s32 0, %v3170
    %v3172 = vrot.slane %v3144, %v3171
    %v3173 = vlaneseq
    %v3174 = vshrl.u32 %v3173, 7
    %v3175 = vsub.s32 0, %v3174
    %v3176 = vrot.slane %v3146, %v3175
    %v3177 = vlaneseq
    %v3178 = vshrl.u32 %v3177, 7
    %v3179 = vsub.s32 0, %v3178
    %v3180 = vrot.slane %v3148, %v3179
    %v3189 = vadd.f32 %v3091, %v3152
    %v3190 = vadd.f32 %v3092, %v3156
    %v3191 = vadd.f32 %v3093, %v3160
    %v3192 = vadd.f32 %v3094, %v3164
    %v3193 = vadd.f32 %v3095, %v3168
    %v3194 = vadd.f32 %v3096, %v3172
    %v3195 = vadd.f32 %v3097, %v3176
    %v3196 = vadd.f32 %v3098, %v3180
    %vm3197 = vcmp.ge.f32.partialorder %v3189, 0.0
    %vm3198 = vcmp.ge.f32.partialorder %v3190, 0.0
    %vm3199 = vcmp.ge.f32.partialorder %v3191, 0.0
    %vm3200 = vcmp.ge.f32.partialorder %v3192, 0.0
    %vm3201 = vcmp.ge.f32.partialorder %v3193, 0.0
    %vm3202 = vcmp.ge.f32.partialorder %v3194, 0.0
    %vm3203 = vcmp.ge.f32.partialorder %v3195, 0.0
    %vm3204 = vcmp.ge.f32.partialorder %v3196, 0.0
    %v3205 = vmul.f32 %v3189, 0.2
    %v3206 = vmul.f32 %v3190, 0.2
    %v3207 = vmul.f32 %v3191, 0.2
    %v3208 = vmul.f32 %v3192, 0.2
    %v3209 = vmul.f32 %v3193, 0.2
    %v3210 = vmul.f32 %v3194, 0.2
    %v3211 = vmul.f32 %v3195, 0.2
    %v3212 = vmul.f32 %v3196, 0.2
    %v3213 = vsel %vm3197, %v3189, %v3205
    %v3214 = vsel %vm3198, %v3190, %v3206
    %v3215 = vsel %vm3199, %v3191, %v3207
    %v3216 = vsel %vm3200, %v3192, %v3208
    %v3217 = vsel %vm3201, %v3193, %v3209
    %v3218 = vsel %vm3202, %v3194, %v3210
    %v3219 = vsel %vm3203, %v3195, %v3211
    %v3220 = vsel %vm3204, %v3196, %v3212
    %v3222 = vlaneseq
    %v3223 = vshrl.u32 %v3222, 7
    %v3224 = vsub.s32 0, %v3223
    %v3225 = vrot.slane %v2913, %v3224
    %v3227 = vmul.f32 %v3213, %v3225
    %v3228 = vmul.f32 %v3214, %v3225
    %v3229 = vmul.f32 %v3215, %v3225
    %v3230 = vmul.f32 %v3216, %v3225
    %v3231 = vmul.f32 %v3217, %v3225
    %v3232 = vmul.f32 %v3218, %v3225
    %v3233 = vmul.f32 %v3219, %v3225
    %v3234 = vmul.f32 %v3220, %v3225
    %vm3235 = vcmask 48128
    %v3236 = vsel %vm3235, %v3227, 0.0
    %3237 = vadd.xlane.f32.xlu0 %v3236
    %v3238 = vpop.xlane.xlu0 %3237
    %v3239 = vsel %vm3235, %v3228, 0.0
    %3240 = vadd.xlane.f32.xlu0 %v3239
    %v3241 = vpop.xlane.xlu0 %3240
    %v3242 = vsel %vm3235, %v3229, 0.0
    %3243 = vadd.xlane.f32.xlu0 %v3242
    %v3244 = vpop.xlane.xlu0 %3243
    %v3245 = vsel %vm3235, %v3230, 0.0
    %3246 = vadd.xlane.f32.xlu0 %v3245
    %v3247 = vpop.xlane.xlu0 %3246
    %v3248 = vsel %vm3235, %v3231, 0.0
    %3249 = vadd.xlane.f32.xlu0 %v3248
    %v3250 = vpop.xlane.xlu0 %3249
    %v3251 = vsel %vm3235, %v3232, 0.0
    %3252 = vadd.xlane.f32.xlu0 %v3251
    %v3253 = vpop.xlane.xlu0 %3252
    %v3254 = vsel %vm3235, %v3233, 0.0
    %3255 = vadd.xlane.f32.xlu0 %v3254
    %v3256 = vpop.xlane.xlu0 %3255
    %v3257 = vsel %vm3235, %v3234, 0.0
    %3258 = vadd.xlane.f32.xlu0 %v3257
    %v3259 = vpop.xlane.xlu0 %3258
    %v3260 = vadd.f32 %v3238, %v585
    %v3261 = vadd.f32 %v3241, %v592
    %v3262 = vadd.f32 %v3244, %v599
    %v3263 = vadd.f32 %v3247, %v606
    %v3264 = vadd.f32 %v3250, %v613
    %v3265 = vadd.f32 %v3253, %v620
    %v3266 = vadd.f32 %v3256, %v627
    %v3267 = vadd.f32 %v3259, %v634
    %3276 = vset.pattern.permute.xlu0 0
    %3277 = vperm.xlu0 %3276, %v3260
    %v3278 = vpop.permute.xlu0 %3277
    %3279 = vset.pattern.permute.xlu0 0
    %3280 = vperm.xlu0 %3279, %v3261
    %v3281 = vpop.permute.xlu0 %3280
    %3282 = vset.pattern.permute.xlu0 0
    %3283 = vperm.xlu0 %3282, %v3262
    %v3284 = vpop.permute.xlu0 %3283
    %3285 = vset.pattern.permute.xlu0 0
    %3286 = vperm.xlu0 %3285, %v3263
    %v3287 = vpop.permute.xlu0 %3286
    %3288 = vset.pattern.permute.xlu0 0
    %3289 = vperm.xlu0 %3288, %v3264
    %v3290 = vpop.permute.xlu0 %3289
    %3291 = vset.pattern.permute.xlu0 0
    %3292 = vperm.xlu0 %3291, %v3265
    %v3293 = vpop.permute.xlu0 %3292
    %3294 = vset.pattern.permute.xlu0 0
    %3295 = vperm.xlu0 %3294, %v3266
    %v3296 = vpop.permute.xlu0 %3295
    %3297 = vset.pattern.permute.xlu0 0
    %3298 = vperm.xlu0 %3297, %v3267
    %v3299 = vpop.permute.xlu0 %3298
    %v3300 = vlaneseq
    %v3301 = vshrl.u32 %v3300, 7
    %v3302 = vsub.s32 %v684, %v3301
    %v3303 = vrot.slane %v3278, %v3302
    %v3304 = vlaneseq
    %v3305 = vshrl.u32 %v3304, 7
    %v3306 = vsub.s32 %v684, %v3305
    %v3307 = vrot.slane %v3281, %v3306
    %v3308 = vlaneseq
    %v3309 = vshrl.u32 %v3308, 7
    %v3310 = vsub.s32 %v684, %v3309
    %v3311 = vrot.slane %v3284, %v3310
    %v3312 = vlaneseq
    %v3313 = vshrl.u32 %v3312, 7
    %v3314 = vsub.s32 %v684, %v3313
    %v3315 = vrot.slane %v3287, %v3314
    %v3316 = vlaneseq
    %v3317 = vshrl.u32 %v3316, 7
    %v3318 = vsub.s32 %v684, %v3317
    %v3319 = vrot.slane %v3290, %v3318
    %v3320 = vlaneseq
    %v3321 = vshrl.u32 %v3320, 7
    %v3322 = vsub.s32 %v684, %v3321
    %v3323 = vrot.slane %v3293, %v3322
    %v3324 = vlaneseq
    %v3325 = vshrl.u32 %v3324, 7
    %v3326 = vsub.s32 %v684, %v3325
    %v3327 = vrot.slane %v3296, %v3326
    %v3328 = vlaneseq
    %v3329 = vshrl.u32 %v3328, 7
    %v3330 = vsub.s32 %v684, %v3329
    %v3331 = vrot.slane %v3299, %v3330
    %v3332 = vsel %vm717, %v3307, %v3303
    %v3333 = vsel %vm719, %v3311, %v3332
    %v3334 = vsel %vm721, %v3315, %v3333
    %v3335 = vsel %vm723, %v3319, %v3334
    %v3336 = vsel %vm725, %v3323, %v3335
    %v3337 = vsel %vm727, %v3327, %v3336
    %v3338 = vsel %vm729, %v3331, %v3337
    %v3340 = vsel %vm553, %v3338, -inf
    %3341 = vmax.xlane.f32.xlu0 %v3340
    %v3342 = vpop.xlane.xlu0 %3341
    %v3344 = vlaneseq
    %v3345 = vshrl.u32 %v3344, 7
    %v3346 = vsub.s32 0, %v3345
    %v3347 = vrot.slane %v3342, %v3346
    %v3348 = vlaneseq
    %v3349 = vshrl.u32 %v3348, 7
    %v3350 = vsub.s32 1, %v3349
    %v3351 = vrot.slane %v3342, %v3350
    %v3352 = vlaneseq
    %v3353 = vshrl.u32 %v3352, 7
    %v3354 = vsub.s32 2, %v3353
    %v3355 = vrot.slane %v3342, %v3354
    %v3356 = vlaneseq
    %v3357 = vshrl.u32 %v3356, 7
    %v3358 = vsub.s32 3, %v3357
    %v3359 = vrot.slane %v3342, %v3358
    %v3360 = vlaneseq
    %v3361 = vshrl.u32 %v3360, 7
    %v3362 = vsub.s32 4, %v3361
    %v3363 = vrot.slane %v3342, %v3362
    %v3364 = vlaneseq
    %v3365 = vshrl.u32 %v3364, 7
    %v3366 = vsub.s32 5, %v3365
    %v3367 = vrot.slane %v3342, %v3366
    %v3368 = vlaneseq
    %v3369 = vshrl.u32 %v3368, 7
    %v3370 = vsub.s32 6, %v3369
    %v3371 = vrot.slane %v3342, %v3370
    %v3372 = vlaneseq
    %v3373 = vshrl.u32 %v3372, 7
    %v3374 = vsub.s32 7, %v3373
    %v3375 = vrot.slane %v3342, %v3374
    %v3384 = vsub.f32 %v3260, %v3347
    %v3385 = vsub.f32 %v3261, %v3351
    %v3386 = vsub.f32 %v3262, %v3355
    %v3387 = vsub.f32 %v3263, %v3359
    %v3388 = vsub.f32 %v3264, %v3363
    %v3389 = vsub.f32 %v3265, %v3367
    %v3390 = vsub.f32 %v3266, %v3371
    %v3391 = vsub.f32 %v3267, %v3375
    %v3392 = vmul.f32 %v3384, 1.442695
    %v3393 = vpow.pop %v3392
    %v3394 = vmul.f32 %v3385, 1.442695
    %v3395 = vpow.pop %v3394
    %v3396 = vmul.f32 %v3386, 1.442695
    %v3397 = vpow.pop %v3396
    %v3398 = vmul.f32 %v3387, 1.442695
    %v3399 = vpow.pop %v3398
    %v3400 = vmul.f32 %v3388, 1.442695
    %v3401 = vpow.pop %v3400
    %v3402 = vmul.f32 %v3389, 1.442695
    %v3403 = vpow.pop %v3402
    %v3404 = vmul.f32 %v3390, 1.442695
    %v3405 = vpow.pop %v3404
    %v3406 = vmul.f32 %v3391, 1.442695
    %v3407 = vpow.pop %v3406
    %v3408 = vmul.f32 %v3393, %v807
    %v3409 = vmul.f32 %v3395, %v814
    %v3410 = vmul.f32 %v3397, %v821
    %v3411 = vmul.f32 %v3399, %v828
    %v3412 = vmul.f32 %v3401, %v835
    %v3413 = vmul.f32 %v3403, %v842
    %v3414 = vmul.f32 %v3405, %v849
    %v3415 = vmul.f32 %v3407, %v856
    %3424 = vset.pattern.permute.xlu0 0
    %3425 = vperm.xlu0 %3424, %v3408
    %v3426 = vpop.permute.xlu0 %3425
    %3427 = vset.pattern.permute.xlu0 0
    %3428 = vperm.xlu0 %3427, %v3409
    %v3429 = vpop.permute.xlu0 %3428
    %3430 = vset.pattern.permute.xlu0 0
    %3431 = vperm.xlu0 %3430, %v3410
    %v3432 = vpop.permute.xlu0 %3431
    %3433 = vset.pattern.permute.xlu0 0
    %3434 = vperm.xlu0 %3433, %v3411
    %v3435 = vpop.permute.xlu0 %3434
    %3436 = vset.pattern.permute.xlu0 0
    %3437 = vperm.xlu0 %3436, %v3412
    %v3438 = vpop.permute.xlu0 %3437
    %3439 = vset.pattern.permute.xlu0 0
    %3440 = vperm.xlu0 %3439, %v3413
    %v3441 = vpop.permute.xlu0 %3440
    %3442 = vset.pattern.permute.xlu0 0
    %3443 = vperm.xlu0 %3442, %v3414
    %v3444 = vpop.permute.xlu0 %3443
    %3445 = vset.pattern.permute.xlu0 0
    %3446 = vperm.xlu0 %3445, %v3415
    %v3447 = vpop.permute.xlu0 %3446
    %v3448 = vlaneseq
    %v3449 = vshrl.u32 %v3448, 7
    %v3450 = vsub.s32 %v684, %v3449
    %v3451 = vrot.slane %v3426, %v3450
    %v3452 = vlaneseq
    %v3453 = vshrl.u32 %v3452, 7
    %v3454 = vsub.s32 %v684, %v3453
    %v3455 = vrot.slane %v3429, %v3454
    %v3456 = vlaneseq
    %v3457 = vshrl.u32 %v3456, 7
    %v3458 = vsub.s32 %v684, %v3457
    %v3459 = vrot.slane %v3432, %v3458
    %v3460 = vlaneseq
    %v3461 = vshrl.u32 %v3460, 7
    %v3462 = vsub.s32 %v684, %v3461
    %v3463 = vrot.slane %v3435, %v3462
    %v3464 = vlaneseq
    %v3465 = vshrl.u32 %v3464, 7
    %v3466 = vsub.s32 %v684, %v3465
    %v3467 = vrot.slane %v3438, %v3466
    %v3468 = vlaneseq
    %v3469 = vshrl.u32 %v3468, 7
    %v3470 = vsub.s32 %v684, %v3469
    %v3471 = vrot.slane %v3441, %v3470
    %v3472 = vlaneseq
    %v3473 = vshrl.u32 %v3472, 7
    %v3474 = vsub.s32 %v684, %v3473
    %v3475 = vrot.slane %v3444, %v3474
    %v3476 = vlaneseq
    %v3477 = vshrl.u32 %v3476, 7
    %v3478 = vsub.s32 %v684, %v3477
    %v3479 = vrot.slane %v3447, %v3478
    %v3480 = vsel %vm717, %v3455, %v3451
    %v3481 = vsel %vm719, %v3459, %v3480
    %v3482 = vsel %vm721, %v3463, %v3481
    %v3483 = vsel %vm723, %v3467, %v3482
    %v3484 = vsel %vm725, %v3471, %v3483
    %v3485 = vsel %vm727, %v3475, %v3484
    %v3486 = vsel %vm729, %v3479, %v3485
    %v3488 = vsel %vm553, %v3486, 0.0
    %3489 = vadd.xlane.f32.xlu0 %v3488
    %v3490 = vpop.xlane.xlu0 %3489
    %v3491 = vrcp.pop %v3490
    %v3493 = vlaneseq
    %v3494 = vshrl.u32 %v3493, 7
    %v3495 = vsub.s32 0, %v3494
    %v3496 = vrot.slane %v3491, %v3495
    %v3497 = vlaneseq
    %v3498 = vshrl.u32 %v3497, 7
    %v3499 = vsub.s32 1, %v3498
    %v3500 = vrot.slane %v3491, %v3499
    %v3501 = vlaneseq
    %v3502 = vshrl.u32 %v3501, 7
    %v3503 = vsub.s32 2, %v3502
    %v3504 = vrot.slane %v3491, %v3503
    %v3505 = vlaneseq
    %v3506 = vshrl.u32 %v3505, 7
    %v3507 = vsub.s32 3, %v3506
    %v3508 = vrot.slane %v3491, %v3507
    %v3509 = vlaneseq
    %v3510 = vshrl.u32 %v3509, 7
    %v3511 = vsub.s32 4, %v3510
    %v3512 = vrot.slane %v3491, %v3511
    %v3513 = vlaneseq
    %v3514 = vshrl.u32 %v3513, 7
    %v3515 = vsub.s32 5, %v3514
    %v3516 = vrot.slane %v3491, %v3515
    %v3517 = vlaneseq
    %v3518 = vshrl.u32 %v3517, 7
    %v3519 = vsub.s32 6, %v3518
    %v3520 = vrot.slane %v3491, %v3519
    %v3521 = vlaneseq
    %v3522 = vshrl.u32 %v3521, 7
    %v3523 = vsub.s32 7, %v3522
    %v3524 = vrot.slane %v3491, %v3523
    %v3533 = vmul.f32 %v3408, %v3496
    %v3534 = vmul.f32 %v3409, %v3500
    %v3535 = vmul.f32 %v3410, %v3504
    %v3536 = vmul.f32 %v3411, %v3508
    %v3537 = vmul.f32 %v3412, %v3512
    %v3538 = vmul.f32 %v3413, %v3516
    %v3539 = vmul.f32 %v3414, %v3520
    %v3540 = vmul.f32 %v3415, %v3524
    %v3541 = vpack.c.bf16 %v3533, %v3533
    %v3542 = vpack.c.bf16 %v3534, %v3534
    %v3543 = vpack.c.bf16 %v3535, %v3535
    %v3544 = vpack.c.bf16 %v3536, %v3536
    %v3545 = vpack.c.bf16 %v3537, %v3537
    %v3546 = vpack.c.bf16 %v3538, %v3538
    %v3547 = vpack.c.bf16 %v3539, %v3539
    %v3548 = vpack.c.bf16 %v3540, %v3540
    %v3549 = vpack.c.bf16 %v2963, %v2963
    %v3550 = vld [vmem:[%s23] sm:$0x1]
    %v3552 = vlaneseq
    %v3553 = vshrl.u32 %v3552, 7
    %v3554 = vsub.s32 0, %v3553
    %v3555 = vrot.slane %v3550, %v3554
    %v3565 = vunpack.c.l.b16 %v3541
    %v3566 = vunpack.c.l.b16 %v3542
    %v3567 = vunpack.c.l.b16 %v3543
    %v3568 = vunpack.c.l.b16 %v3544
    %v3569 = vunpack.c.l.b16 %v3545
    %v3570 = vunpack.c.l.b16 %v3546
    %v3571 = vunpack.c.l.b16 %v3547
    %v3572 = vunpack.c.l.b16 %v3548
    %3573 = vset.pattern.permute.xlu0 0
    %3574 = vperm.xlu0 %3573, %v3565
    %v3575 = vpop.permute.xlu0 %3574
    %3576 = vset.pattern.permute.xlu0 0
    %3577 = vperm.xlu0 %3576, %v3566
    %v3578 = vpop.permute.xlu0 %3577
    %3579 = vset.pattern.permute.xlu0 0
    %3580 = vperm.xlu0 %3579, %v3567
    %v3581 = vpop.permute.xlu0 %3580
    %3582 = vset.pattern.permute.xlu0 0
    %3583 = vperm.xlu0 %3582, %v3568
    %v3584 = vpop.permute.xlu0 %3583
    %3585 = vset.pattern.permute.xlu0 0
    %3586 = vperm.xlu0 %3585, %v3569
    %v3587 = vpop.permute.xlu0 %3586
    %3588 = vset.pattern.permute.xlu0 0
    %3589 = vperm.xlu0 %3588, %v3570
    %v3590 = vpop.permute.xlu0 %3589
    %3591 = vset.pattern.permute.xlu0 0
    %3592 = vperm.xlu0 %3591, %v3571
    %v3593 = vpop.permute.xlu0 %3592
    %3594 = vset.pattern.permute.xlu0 0
    %3595 = vperm.xlu0 %3594, %v3572
    %v3596 = vpop.permute.xlu0 %3595
    %v3597 = vlaneseq
    %v3598 = vshrl.u32 %v3597, 7
    %v3599 = vsub.s32 %v684, %v3598
    %v3600 = vrot.slane %v3575, %v3599
    %v3601 = vlaneseq
    %v3602 = vshrl.u32 %v3601, 7
    %v3603 = vsub.s32 %v684, %v3602
    %v3604 = vrot.slane %v3578, %v3603
    %v3605 = vlaneseq
    %v3606 = vshrl.u32 %v3605, 7
    %v3607 = vsub.s32 %v684, %v3606
    %v3608 = vrot.slane %v3581, %v3607
    %v3609 = vlaneseq
    %v3610 = vshrl.u32 %v3609, 7
    %v3611 = vsub.s32 %v684, %v3610
    %v3612 = vrot.slane %v3584, %v3611
    %v3613 = vlaneseq
    %v3614 = vshrl.u32 %v3613, 7
    %v3615 = vsub.s32 %v684, %v3614
    %v3616 = vrot.slane %v3587, %v3615
    %v3617 = vlaneseq
    %v3618 = vshrl.u32 %v3617, 7
    %v3619 = vsub.s32 %v684, %v3618
    %v3620 = vrot.slane %v3590, %v3619
    %v3621 = vlaneseq
    %v3622 = vshrl.u32 %v3621, 7
    %v3623 = vsub.s32 %v684, %v3622
    %v3624 = vrot.slane %v3593, %v3623
    %v3625 = vlaneseq
    %v3626 = vshrl.u32 %v3625, 7
    %v3627 = vsub.s32 %v684, %v3626
    %v3628 = vrot.slane %v3596, %v3627
    %v3629 = vsel %vm717, %v3604, %v3600
    %v3630 = vsel %vm719, %v3608, %v3629
    %v3631 = vsel %vm721, %v3612, %v3630
    %v3632 = vsel %vm723, %v3616, %v3631
    %v3633 = vsel %vm725, %v3620, %v3632
    %v3634 = vsel %vm727, %v3624, %v3633
    %v3635 = vsel %vm729, %v3628, %v3634
    %v3636 = vpack.c.b16 %v3635, %v3635
    %v3638 = vsel %vm553, %v3636, 0
    %v3641 = vsel %vm1090, %v3549, 0
    %3643 = vmatprep.subr.bf16.mxu0 0
    %3644 = vmatpush1.bf16.msra.mxu0 %v3641
    %3645 = vmatprep.subr.bf16.mxu0 0
    %3646 = vmatpush1.bf16.msra.mxu0 0
    %3647 = vmatprep.subr.bf16.mxu0 0
    %3648 = vmatpush1.bf16.msra.mxu0 0
    %3649 = vmatprep.subr.bf16.mxu0 0
    %3650 = vmatpush1.bf16.msra.mxu0 0
    %3651 = vmatprep.subr.bf16.mxu0 0
    %3652 = vmatpush1.bf16.msra.mxu0 0
    %3653 = vmatprep.subr.bf16.mxu0 0
    %3654 = vmatpush1.bf16.msra.mxu0 0
    %3655 = vmatprep.subr.bf16.mxu0 0
    %3656 = vmatpush1.bf16.msra.mxu0 0
    %3657 = vmatprep.subr.bf16.mxu0 0
    %3658 = vmatpush1.bf16.msra.mxu0 0
    %3659 = vmatprep.subr.bf16.mxu0 0
    %3660 = vmatpush1.bf16.msra.mxu0 0
    %3661 = vmatprep.subr.bf16.mxu0 0
    %3662 = vmatpush1.bf16.msra.mxu0 0
    %3663 = vmatprep.subr.bf16.mxu0 0
    %3664 = vmatpush1.bf16.msra.mxu0 0
    %3665 = vmatprep.subr.bf16.mxu0 0
    %3666 = vmatpush1.bf16.msra.mxu0 0
    %3667 = vmatprep.subr.bf16.mxu0 0
    %3668 = vmatpush1.bf16.msra.mxu0 0
    %3669 = vmatprep.subr.bf16.mxu0 0
    %3670 = vmatpush1.bf16.msra.mxu0 0
    %3671 = vmatprep.subr.bf16.mxu0 0
    %3672 = vmatpush1.bf16.msra.mxu0 0
    %3673 = vmatprep.subr.bf16.mxu0 0
    %3674 = vmatpush1.bf16.msra.mxu0 0
    %3675 = vmatprep.mubr.bf16.mxu0 0
    %3676 = vmatmul.mubr.bf16.gmra.mrb[0].mxu0 %v3638
    %v3677 = vpop.f32.mrb[0].mxu0
    %v3678 = vadd.f32 %v3555, %v3677
    %v3679 = vpop.f32.mrb[0].mxu0
    %v3680 = vpop.f32.mrb[0].mxu0
    %v3681 = vpop.f32.mrb[0].mxu0
    %3682 = vdwg.mxu0
    %v3683 = vmax.f32 %v3678, 0.0
    %3684 = vst.msk [vmem:[#allocation2] sm:$0xff] %vm3235, %v3683
    // Predicated region
    $region98: #{tpu_custom_call.1} parent=1 // pred_check
      _
    $region99: #{tpu_custom_call.1} parent=1 // pred_check_branch
      %3686 = sbr.rel (0) target = $region101
    $region100: #{tpu_custom_call.1} parent=1 // pred_region
      %s3688 = ssub.s32 128, 128
      %3689 = vsyncadd [#allocation3], %s3688
      %s3691 = sshll.u32 [#allocation2], 4
      %s3692 = int_to_ptr.vmem [resolvable:$true] %s3691
      %3694 = dma.vmem_to_hbm [thread:$0]  %s3692, 128, %s24, [#allocation3]
    $region101: #{tpu_custom_call.1} parent=1 // pred_fallthru
      _
    // Predicated region
    $region102: #{tpu_custom_call.1} parent=1 // pred_check
      _
    $region103: #{tpu_custom_call.1} parent=1 // pred_check_branch
      %3696 = sbr.rel (0) target = $region105
    $region104: #{tpu_custom_call.1} parent=1 // pred_region
      %3697 = dma.done [#allocation3], 128
    $region105: #{tpu_custom_call.1} parent=1 // pred_fallthru
      _
    %3698 = vsyncpa [#allocation3], 1

</llo_original>
